<compile_context>
chip_gen: v7x
topology: tpu7x:2x2x1
jax: 0.10.0
libtpu: 0.0.40
codegen_flags: <defaults>
</compile_context>

<pallas_src>
import jax
import jax.numpy as jnp
from jax.experimental import pallas as pl
from jax.experimental.pallas import tpu as pltpu


def col_attention_kernel(x_ref, w_ref, b_ref, gamma_ref, o_ref):
    """One (batch, width-block) tile of axial column attention.

    x_ref     : VMEM (C, H, WB)            NCHW slab, width columns on lanes.
    w_ref     : SMEM (C * (2*dqk + C),)    fused [wq; wk; wv] rows, row-major.
    b_ref     : SMEM (2*dqk + C,)          fused [bq; bk; bv].
    gamma_ref : SMEM (1,)
    o_ref     : VMEM (C, H, WB)
    """
    C, H, WB = x_ref.shape
    P = b_ref.shape[0]
    dqk = (P - C) // 2

    x = x_ref[...]                            # (C, H, WB) f32
    xs = [x[c] for c in range(C)]             # C tiles of (H, WB)

    # 1x1-conv projections as scalar-broadcast FMAs on the VPU (lanes = width
    # columns). C/dqk are far below the MXU width, so this avoids an
    # MXU-starved matmul entirely (review item: projection MXU shape).
    def project(row0, nrows):
        rows = []
        for r in range(nrows):
            base = (row0 + r) * C
            acc = w_ref[base] * xs[0]
            for c in range(1, C):
                acc = acc + w_ref[base + c] * xs[c]
            rows.append(acc + b_ref[row0 + r])
        return rows

    q = project(0, dqk)                       # dqk tiles of (H, WB)
    k = project(dqk, dqk)                     # dqk tiles of (H, WB)
    v = project(2 * dqk, C)                   # C   tiles of (H, WB)

    # scores[i, j, col] = sum_d q[d][i, col] * k[d][j, col]   -> (H, H, WB)
    s = q[0][:, None, :] * k[0][None, :, :]
    for d in range(1, dqk):
        s = s + q[d][:, None, :] * k[d][None, :, :]

    # Softmax over the key axis j (== sublane axis of the (H, H, WB) tile);
    # exact reciprocal — the approx EUP path is not on the critical path here.
    s = s - jnp.max(s, axis=1, keepdims=True)
    p = jnp.exp(s)
    p = p / jnp.sum(p, axis=1, keepdims=True)

    gamma = gamma_ref[0]
    # out[c, i, col] = sum_j p[i, j, col] * v[c][j, col]; fused gamma*out + x.
    for c in range(C):
        out_c = jnp.sum(p * v[c][None, :, :], axis=1)          # (H, WB)
        o_ref[c, :, :] = (gamma * out_c + xs[c]).astype(o_ref.dtype)


def _ceil_to(x, m):
    return -(-x // m) * m


def _block_vmem_bytes(wb, h, c_in, dqk):
    """Conservative f32 VMEM footprint of one width-block, including (8,128)
    tile padding and the x/out double buffers (review: corrected estimate)."""
    p = 2 * dqk + c_in
    lanes = _ceil_to(wb, 128)
    subs = _ceil_to(h, 8)
    io = 2 * 2 * 4 * c_in * subs * lanes          # x + out blocks, double-buffered
    proj = 4 * (2 * dqk + c_in) * subs * lanes    # q, k, v row tiles
    attn = 2 * 4 * h * subs * lanes               # scores + probs (H, H, WB)
    slack = 4 * p * subs * lanes                  # headroom for temporaries
    return io + proj + attn + slack


def _pick_width_block(w, h, c_in, dqk, budget_bytes=8 << 20):
    """Largest legal width block: the full width, or a divisor of w that is a
    multiple of 128 (BlockSpec (8,128) rule), within budget_bytes."""
    if _block_vmem_bytes(w, h, c_in, dqk) <= budget_bytes or w % 128 != 0:
        # Full width (always legal).  If w is not a multiple of 128 there is
        # no legal smaller block anyway; the 32 MiB vmem limit gives headroom.
        return w
    best = 128
    wb = 128
    while wb <= w:
        if w % wb == 0 and _block_vmem_bytes(wb, h, c_in, dqk) <= budget_bytes:
            best = wb
        wb += 128
    return best


def col_attention(x, wq, bq, wk, bk, wv, bv, gamma):
    """Forward of ColAttention. x: NCHW float32 (b, C, h, w).
    wq/wk: (dqk, C); wv: (C, C); biases 1-D; gamma scalar."""
    b, c_in, h, w = x.shape
    dqk = wq.shape[0]
    p = 2 * dqk + c_in

    # Fused projection weights / biases, flattened for the SMEM scalar path.
    # Row order: wq rows, wk rows, wv rows; each row has length C.
    w_flat = jnp.concatenate(
        [wq.reshape(-1), wk.reshape(-1), wv.reshape(-1)]).astype(jnp.float32)
    b_flat = jnp.concatenate([bq, bk, bv]).astype(jnp.float32)
    gamma_arr = jnp.asarray(gamma, dtype=jnp.float32).reshape(1)

    wb = _pick_width_block(w, h, c_in, dqk)
    grid = (b, w // wb)          # both axes independent -> "parallel"

    cost = pl.CostEstimate(
        flops=2 * b * w * h * (p * c_in + h * dqk + h * c_in + c_in),
        transcendentals=b * w * h * h,
        bytes_accessed=4 * (2 * b * c_in * h * w + w_flat.size + b_flat.size + 1),
    )

    io_spec = pl.BlockSpec(
        (pl.Squeezed(), c_in, h, wb), lambda bi, wi: (bi, 0, 0, wi))
    smem_spec = pl.BlockSpec(memory_space=pltpu.MemorySpace.SMEM)

    return pl.pallas_call(
        col_attention_kernel,
        out_shape=jax.ShapeDtypeStruct((b, c_in, h, w), jnp.float32),
        grid_spec=pltpu.PrefetchScalarGridSpec(
            num_scalar_prefetch=0,
            grid=grid,
            in_specs=[io_spec, smem_spec, smem_spec, smem_spec],
            out_specs=io_spec,
        ),
        compiler_params=pltpu.CompilerParams(
            dimension_semantics=("parallel", "parallel"),
            vmem_limit_bytes=32 << 20,      # safe on v5e / v6e / v7x
        ),
        cost_estimate=cost,
    )(x, w_flat, b_flat, gamma_arr)


def col_attention_reference(x, wq, bq, wk, bk, wv, bv, gamma):
    """Plain-JAX transcription of the PyTorch forward (for validation)."""
    b, C, h, w = x.shape
    Q = jnp.einsum("bchw,dc->bdhw", x, wq) + bq[None, :, None, None]
    K = jnp.einsum("bchw,dc->bdhw", x, wk) + bk[None, :, None, None]
    V = jnp.einsum("bchw,dc->bdhw", x, wv) + bv[None, :, None, None]
    Qc = jnp.transpose(Q, (0, 3, 1, 2)).reshape(b * w, -1, h).transpose(0, 2, 1)
    Kc = jnp.transpose(K, (0, 3, 1, 2)).reshape(b * w, -1, h)
    Vc = jnp.transpose(V, (0, 3, 1, 2)).reshape(b * w, -1, h)
    attn = jax.nn.softmax(jnp.einsum("nij,njk->nik", Qc, Kc), axis=2)
    out = jnp.einsum("ncj,nij->nci", Vc, attn)
    out = jnp.transpose(out.reshape(b, w, C, h), (0, 2, 3, 1))
    return gamma * out + x


if __name__ == "__main__":
    # Small shapes consistent with the module: NCHW input.
    b, in_dim, h, w = 2, 4, 16, 16
    q_k_dim = 8

    key = jax.random.PRNGKey(0)
    kx, kwq, kbq, kwk, kbk, kwv, kbv = jax.random.split(key, 7)

    x = jax.random.normal(kx, (b, in_dim, h, w), dtype=jnp.float32)

    # Conv2d 1x1 == weight (out, in) + bias.
    wq = 0.1 * jax.random.normal(kwq, (q_k_dim, in_dim), dtype=jnp.float32)
    bq = 0.1 * jax.random.normal(kbq, (q_k_dim,), dtype=jnp.float32)
    wk = 0.1 * jax.random.normal(kwk, (q_k_dim, in_dim), dtype=jnp.float32)
    bk = 0.1 * jax.random.normal(kbk, (q_k_dim,), dtype=jnp.float32)
    wv = 0.1 * jax.random.normal(kwv, (in_dim, in_dim), dtype=jnp.float32)
    bv = 0.1 * jax.random.normal(kbv, (in_dim,), dtype=jnp.float32)
    # Module __init__ sets gamma = 0 (output would trivially equal x);
    # use a nonzero deterministic value so the attention path is exercised.
    gamma = jnp.array(0.5, dtype=jnp.float32)

    out = jax.block_until_ready(col_attention(x, wq, bq, wk, bk, wv, bv, gamma))

    ref = col_attention_reference(x, wq, bq, wk, bk, wv, bv, gamma)
    assert out.shape == x.shape and out.dtype == x.dtype
    # Exact softmax numerics now (no approx reciprocal) -> tight tolerance.
    assert jnp.allclose(out, ref, atol=1e-5, rtol=1e-5), "mismatch vs reference"

    print("KERNEL_OK")
</pallas_src>

<mosaic_0001>
module attributes {stable_mosaic.version = 11 : i64} {
  func.func @col_attention_kernel(%arg0: i32, %arg1: i32, %arg2: memref<1x4x16x16xf32, #tpu.memory_space<vmem>>, %arg3: memref<80xf32, #tpu.memory_space<smem>>, %arg4: memref<20xf32, #tpu.memory_space<smem>>, %arg5: memref<1xf32, #tpu.memory_space<smem>>, %arg6: memref<1x4x16x16xf32, #tpu.memory_space<vmem>>) attributes {dimension_semantics = [#tpu.dimension_semantics<parallel>, #tpu.dimension_semantics<parallel>], iteration_bounds = array<i64: 2, 1>, scalar_prefetch = 0 : i64, scratch_operands = 0 : i64, tpu.core_type = #tpu.core_type<tc>, window_params = [{transform_indices = @transform_0, window_bounds = array<i64: 1, 4, 16, 16>}, {transform_indices = @transform_1, window_bounds = array<i64: 80>}, {transform_indices = @transform_2, window_bounds = array<i64: 20>}, {transform_indices = @transform_3, window_bounds = array<i64: 1>}, {transform_indices = @transform_4, window_bounds = array<i64: 1, 4, 16, 16>}]} {
    %c0 = arith.constant 0 : index
    %c0_0 = arith.constant 0 : index
    %c0_1 = arith.constant 0 : index
    %c0_2 = arith.constant 0 : index
    %0 = vector.load %arg2[%c0, %c0_0, %c0_1, %c0_2] : memref<1x4x16x16xf32, #tpu.memory_space<vmem>>, vector<1x4x16x16xf32>
    %1 = vector.shape_cast %0 : vector<1x4x16x16xf32> to vector<4x16x16xf32>
    %2 = vector.extract_strided_slice %1 {offsets = [0, 0, 0], sizes = [1, 16, 16], strides = [1, 1, 1]} : vector<4x16x16xf32> to vector<1x16x16xf32>
    %3 = vector.shape_cast %2 : vector<1x16x16xf32> to vector<16x16xf32>
    %4 = vector.extract_strided_slice %1 {offsets = [1, 0, 0], sizes = [1, 16, 16], strides = [1, 1, 1]} : vector<4x16x16xf32> to vector<1x16x16xf32>
    %5 = vector.shape_cast %4 : vector<1x16x16xf32> to vector<16x16xf32>
    %6 = vector.extract_strided_slice %1 {offsets = [2, 0, 0], sizes = [1, 16, 16], strides = [1, 1, 1]} : vector<4x16x16xf32> to vector<1x16x16xf32>
    %7 = vector.shape_cast %6 : vector<1x16x16xf32> to vector<16x16xf32>
    %8 = vector.extract_strided_slice %1 {offsets = [3, 0, 0], sizes = [1, 16, 16], strides = [1, 1, 1]} : vector<4x16x16xf32> to vector<1x16x16xf32>
    %9 = vector.shape_cast %8 : vector<1x16x16xf32> to vector<16x16xf32>
    %c0_3 = arith.constant 0 : index
    %10 = memref.load %arg3[%c0_3] : memref<80xf32, #tpu.memory_space<smem>>
    %11 = vector.broadcast %10 : f32 to vector<16x16xf32>
    %12 = arith.mulf %11, %3 : vector<16x16xf32>
    %c1 = arith.constant 1 : index
    %13 = memref.load %arg3[%c1] : memref<80xf32, #tpu.memory_space<smem>>
    %14 = vector.broadcast %13 : f32 to vector<16x16xf32>
    %15 = arith.mulf %14, %5 : vector<16x16xf32>
    %16 = arith.addf %12, %15 : vector<16x16xf32>
    %c2 = arith.constant 2 : index
    %17 = memref.load %arg3[%c2] : memref<80xf32, #tpu.memory_space<smem>>
    %18 = vector.broadcast %17 : f32 to vector<16x16xf32>
    %19 = arith.mulf %18, %7 : vector<16x16xf32>
    %20 = arith.addf %16, %19 : vector<16x16xf32>
    %c3 = arith.constant 3 : index
    %21 = memref.load %arg3[%c3] : memref<80xf32, #tpu.memory_space<smem>>
    %22 = vector.broadcast %21 : f32 to vector<16x16xf32>
    %23 = arith.mulf %22, %9 : vector<16x16xf32>
    %24 = arith.addf %20, %23 : vector<16x16xf32>
    %c0_4 = arith.constant 0 : index
    %25 = memref.load %arg4[%c0_4] : memref<20xf32, #tpu.memory_space<smem>>
    %26 = vector.broadcast %25 : f32 to vector<16x16xf32>
    %27 = arith.addf %24, %26 : vector<16x16xf32>
    %c4 = arith.constant 4 : index
    %28 = memref.load %arg3[%c4] : memref<80xf32, #tpu.memory_space<smem>>
    %29 = vector.broadcast %28 : f32 to vector<16x16xf32>
    %30 = arith.mulf %29, %3 : vector<16x16xf32>
    %c5 = arith.constant 5 : index
    %31 = memref.load %arg3[%c5] : memref<80xf32, #tpu.memory_space<smem>>
    %32 = vector.broadcast %31 : f32 to vector<16x16xf32>
    %33 = arith.mulf %32, %5 : vector<16x16xf32>
    %34 = arith.addf %30, %33 : vector<16x16xf32>
    %c6 = arith.constant 6 : index
    %35 = memref.load %arg3[%c6] : memref<80xf32, #tpu.memory_space<smem>>
    %36 = vector.broadcast %35 : f32 to vector<16x16xf32>
    %37 = arith.mulf %36, %7 : vector<16x16xf32>
    %38 = arith.addf %34, %37 : vector<16x16xf32>
    %c7 = arith.constant 7 : index
    %39 = memref.load %arg3[%c7] : memref<80xf32, #tpu.memory_space<smem>>
    %40 = vector.broadcast %39 : f32 to vector<16x16xf32>
    %41 = arith.mulf %40, %9 : vector<16x16xf32>
    %42 = arith.addf %38, %41 : vector<16x16xf32>
    %c1_5 = arith.constant 1 : index
    %43 = memref.load %arg4[%c1_5] : memref<20xf32, #tpu.memory_space<smem>>
    %44 = vector.broadcast %43 : f32 to vector<16x16xf32>
    %45 = arith.addf %42, %44 : vector<16x16xf32>
    %c8 = arith.constant 8 : index
    %46 = memref.load %arg3[%c8] : memref<80xf32, #tpu.memory_space<smem>>
    %47 = vector.broadcast %46 : f32 to vector<16x16xf32>
    %48 = arith.mulf %47, %3 : vector<16x16xf32>
    %c9 = arith.constant 9 : index
    %49 = memref.load %arg3[%c9] : memref<80xf32, #tpu.memory_space<smem>>
    %50 = vector.broadcast %49 : f32 to vector<16x16xf32>
    %51 = arith.mulf %50, %5 : vector<16x16xf32>
    %52 = arith.addf %48, %51 : vector<16x16xf32>
    %c10 = arith.constant 10 : index
    %53 = memref.load %arg3[%c10] : memref<80xf32, #tpu.memory_space<smem>>
    %54 = vector.broadcast %53 : f32 to vector<16x16xf32>
    %55 = arith.mulf %54, %7 : vector<16x16xf32>
    %56 = arith.addf %52, %55 : vector<16x16xf32>
    %c11 = arith.constant 11 : index
    %57 = memref.load %arg3[%c11] : memref<80xf32, #tpu.memory_space<smem>>
    %58 = vector.broadcast %57 : f32 to vector<16x16xf32>
    %59 = arith.mulf %58, %9 : vector<16x16xf32>
    %60 = arith.addf %56, %59 : vector<16x16xf32>
    %c2_6 = arith.constant 2 : index
    %61 = memref.load %arg4[%c2_6] : memref<20xf32, #tpu.memory_space<smem>>
    %62 = vector.broadcast %61 : f32 to vector<16x16xf32>
    %63 = arith.addf %60, %62 : vector<16x16xf32>
    %c12 = arith.constant 12 : index
    %64 = memref.load %arg3[%c12] : memref<80xf32, #tpu.memory_space<smem>>
    %65 = vector.broadcast %64 : f32 to vector<16x16xf32>
    %66 = arith.mulf %65, %3 : vector<16x16xf32>
    %c13 = arith.constant 13 : index
    %67 = memref.load %arg3[%c13] : memref<80xf32, #tpu.memory_space<smem>>
    %68 = vector.broadcast %67 : f32 to vector<16x16xf32>
    %69 = arith.mulf %68, %5 : vector<16x16xf32>
    %70 = arith.addf %66, %69 : vector<16x16xf32>
    %c14 = arith.constant 14 : index
    %71 = memref.load %arg3[%c14] : memref<80xf32, #tpu.memory_space<smem>>
    %72 = vector.broadcast %71 : f32 to vector<16x16xf32>
    %73 = arith.mulf %72, %7 : vector<16x16xf32>
    %74 = arith.addf %70, %73 : vector<16x16xf32>
    %c15 = arith.constant 15 : index
    %75 = memref.load %arg3[%c15] : memref<80xf32, #tpu.memory_space<smem>>
    %76 = vector.broadcast %75 : f32 to vector<16x16xf32>
    %77 = arith.mulf %76, %9 : vector<16x16xf32>
    %78 = arith.addf %74, %77 : vector<16x16xf32>
    %c3_7 = arith.constant 3 : index
    %79 = memref.load %arg4[%c3_7] : memref<20xf32, #tpu.memory_space<smem>>
    %80 = vector.broadcast %79 : f32 to vector<16x16xf32>
    %81 = arith.addf %78, %80 : vector<16x16xf32>
    %c16 = arith.constant 16 : index
    %82 = memref.load %arg3[%c16] : memref<80xf32, #tpu.memory_space<smem>>
    %83 = vector.broadcast %82 : f32 to vector<16x16xf32>
    %84 = arith.mulf %83, %3 : vector<16x16xf32>
    %c17 = arith.constant 17 : index
    %85 = memref.load %arg3[%c17] : memref<80xf32, #tpu.memory_space<smem>>
    %86 = vector.broadcast %85 : f32 to vector<16x16xf32>
    %87 = arith.mulf %86, %5 : vector<16x16xf32>
    %88 = arith.addf %84, %87 : vector<16x16xf32>
    %c18 = arith.constant 18 : index
    %89 = memref.load %arg3[%c18] : memref<80xf32, #tpu.memory_space<smem>>
    %90 = vector.broadcast %89 : f32 to vector<16x16xf32>
    %91 = arith.mulf %90, %7 : vector<16x16xf32>
    %92 = arith.addf %88, %91 : vector<16x16xf32>
    %c19 = arith.constant 19 : index
    %93 = memref.load %arg3[%c19] : memref<80xf32, #tpu.memory_space<smem>>
    %94 = vector.broadcast %93 : f32 to vector<16x16xf32>
    %95 = arith.mulf %94, %9 : vector<16x16xf32>
    %96 = arith.addf %92, %95 : vector<16x16xf32>
    %c4_8 = arith.constant 4 : index
    %97 = memref.load %arg4[%c4_8] : memref<20xf32, #tpu.memory_space<smem>>
    %98 = vector.broadcast %97 : f32 to vector<16x16xf32>
    %99 = arith.addf %96, %98 : vector<16x16xf32>
    %c20 = arith.constant 20 : index
    %100 = memref.load %arg3[%c20] : memref<80xf32, #tpu.memory_space<smem>>
    %101 = vector.broadcast %100 : f32 to vector<16x16xf32>
    %102 = arith.mulf %101, %3 : vector<16x16xf32>
    %c21 = arith.constant 21 : index
    %103 = memref.load %arg3[%c21] : memref<80xf32, #tpu.memory_space<smem>>
    %104 = vector.broadcast %103 : f32 to vector<16x16xf32>
    %105 = arith.mulf %104, %5 : vector<16x16xf32>
    %106 = arith.addf %102, %105 : vector<16x16xf32>
    %c22 = arith.constant 22 : index
    %107 = memref.load %arg3[%c22] : memref<80xf32, #tpu.memory_space<smem>>
    %108 = vector.broadcast %107 : f32 to vector<16x16xf32>
    %109 = arith.mulf %108, %7 : vector<16x16xf32>
    %110 = arith.addf %106, %109 : vector<16x16xf32>
    %c23 = arith.constant 23 : index
    %111 = memref.load %arg3[%c23] : memref<80xf32, #tpu.memory_space<smem>>
    %112 = vector.broadcast %111 : f32 to vector<16x16xf32>
    %113 = arith.mulf %112, %9 : vector<16x16xf32>
    %114 = arith.addf %110, %113 : vector<16x16xf32>
    %c5_9 = arith.constant 5 : index
    %115 = memref.load %arg4[%c5_9] : memref<20xf32, #tpu.memory_space<smem>>
    %116 = vector.broadcast %115 : f32 to vector<16x16xf32>
    %117 = arith.addf %114, %116 : vector<16x16xf32>
    %c24 = arith.constant 24 : index
    %118 = memref.load %arg3[%c24] : memref<80xf32, #tpu.memory_space<smem>>
    %119 = vector.broadcast %118 : f32 to vector<16x16xf32>
    %120 = arith.mulf %119, %3 : vector<16x16xf32>
    %c25 = arith.constant 25 : index
    %121 = memref.load %arg3[%c25] : memref<80xf32, #tpu.memory_space<smem>>
    %122 = vector.broadcast %121 : f32 to vector<16x16xf32>
    %123 = arith.mulf %122, %5 : vector<16x16xf32>
    %124 = arith.addf %120, %123 : vector<16x16xf32>
    %c26 = arith.constant 26 : index
    %125 = memref.load %arg3[%c26] : memref<80xf32, #tpu.memory_space<smem>>
    %126 = vector.broadcast %125 : f32 to vector<16x16xf32>
    %127 = arith.mulf %126, %7 : vector<16x16xf32>
    %128 = arith.addf %124, %127 : vector<16x16xf32>
    %c27 = arith.constant 27 : index
    %129 = memref.load %arg3[%c27] : memref<80xf32, #tpu.memory_space<smem>>
    %130 = vector.broadcast %129 : f32 to vector<16x16xf32>
    %131 = arith.mulf %130, %9 : vector<16x16xf32>
    %132 = arith.addf %128, %131 : vector<16x16xf32>
    %c6_10 = arith.constant 6 : index
    %133 = memref.load %arg4[%c6_10] : memref<20xf32, #tpu.memory_space<smem>>
    %134 = vector.broadcast %133 : f32 to vector<16x16xf32>
    %135 = arith.addf %132, %134 : vector<16x16xf32>
    %c28 = arith.constant 28 : index
    %136 = memref.load %arg3[%c28] : memref<80xf32, #tpu.memory_space<smem>>
    %137 = vector.broadcast %136 : f32 to vector<16x16xf32>
    %138 = arith.mulf %137, %3 : vector<16x16xf32>
    %c29 = arith.constant 29 : index
    %139 = memref.load %arg3[%c29] : memref<80xf32, #tpu.memory_space<smem>>
    %140 = vector.broadcast %139 : f32 to vector<16x16xf32>
    %141 = arith.mulf %140, %5 : vector<16x16xf32>
    %142 = arith.addf %138, %141 : vector<16x16xf32>
    %c30 = arith.constant 30 : index
    %143 = memref.load %arg3[%c30] : memref<80xf32, #tpu.memory_space<smem>>
    %144 = vector.broadcast %143 : f32 to vector<16x16xf32>
    %145 = arith.mulf %144, %7 : vector<16x16xf32>
    %146 = arith.addf %142, %145 : vector<16x16xf32>
    %c31 = arith.constant 31 : index
    %147 = memref.load %arg3[%c31] : memref<80xf32, #tpu.memory_space<smem>>
    %148 = vector.broadcast %147 : f32 to vector<16x16xf32>
    %149 = arith.mulf %148, %9 : vector<16x16xf32>
    %150 = arith.addf %146, %149 : vector<16x16xf32>
    %c7_11 = arith.constant 7 : index
    %151 = memref.load %arg4[%c7_11] : memref<20xf32, #tpu.memory_space<smem>>
    %152 = vector.broadcast %151 : f32 to vector<16x16xf32>
    %153 = arith.addf %150, %152 : vector<16x16xf32>
    %c32 = arith.constant 32 : index
    %154 = memref.load %arg3[%c32] : memref<80xf32, #tpu.memory_space<smem>>
    %155 = vector.broadcast %154 : f32 to vector<16x16xf32>
    %156 = arith.mulf %155, %3 : vector<16x16xf32>
    %c33 = arith.constant 33 : index
    %157 = memref.load %arg3[%c33] : memref<80xf32, #tpu.memory_space<smem>>
    %158 = vector.broadcast %157 : f32 to vector<16x16xf32>
    %159 = arith.mulf %158, %5 : vector<16x16xf32>
    %160 = arith.addf %156, %159 : vector<16x16xf32>
    %c34 = arith.constant 34 : index
    %161 = memref.load %arg3[%c34] : memref<80xf32, #tpu.memory_space<smem>>
    %162 = vector.broadcast %161 : f32 to vector<16x16xf32>
    %163 = arith.mulf %162, %7 : vector<16x16xf32>
    %164 = arith.addf %160, %163 : vector<16x16xf32>
    %c35 = arith.constant 35 : index
    %165 = memref.load %arg3[%c35] : memref<80xf32, #tpu.memory_space<smem>>
    %166 = vector.broadcast %165 : f32 to vector<16x16xf32>
    %167 = arith.mulf %166, %9 : vector<16x16xf32>
    %168 = arith.addf %164, %167 : vector<16x16xf32>
    %c8_12 = arith.constant 8 : index
    %169 = memref.load %arg4[%c8_12] : memref<20xf32, #tpu.memory_space<smem>>
    %170 = vector.broadcast %169 : f32 to vector<16x16xf32>
    %171 = arith.addf %168, %170 : vector<16x16xf32>
    %c36 = arith.constant 36 : index
    %172 = memref.load %arg3[%c36] : memref<80xf32, #tpu.memory_space<smem>>
    %173 = vector.broadcast %172 : f32 to vector<16x16xf32>
    %174 = arith.mulf %173, %3 : vector<16x16xf32>
    %c37 = arith.constant 37 : index
    %175 = memref.load %arg3[%c37] : memref<80xf32, #tpu.memory_space<smem>>
    %176 = vector.broadcast %175 : f32 to vector<16x16xf32>
    %177 = arith.mulf %176, %5 : vector<16x16xf32>
    %178 = arith.addf %174, %177 : vector<16x16xf32>
    %c38 = arith.constant 38 : index
    %179 = memref.load %arg3[%c38] : memref<80xf32, #tpu.memory_space<smem>>
    %180 = vector.broadcast %179 : f32 to vector<16x16xf32>
    %181 = arith.mulf %180, %7 : vector<16x16xf32>
    %182 = arith.addf %178, %181 : vector<16x16xf32>
    %c39 = arith.constant 39 : index
    %183 = memref.load %arg3[%c39] : memref<80xf32, #tpu.memory_space<smem>>
    %184 = vector.broadcast %183 : f32 to vector<16x16xf32>
    %185 = arith.mulf %184, %9 : vector<16x16xf32>
    %186 = arith.addf %182, %185 : vector<16x16xf32>
    %c9_13 = arith.constant 9 : index
    %187 = memref.load %arg4[%c9_13] : memref<20xf32, #tpu.memory_space<smem>>
    %188 = vector.broadcast %187 : f32 to vector<16x16xf32>
    %189 = arith.addf %186, %188 : vector<16x16xf32>
    %c40 = arith.constant 40 : index
    %190 = memref.load %arg3[%c40] : memref<80xf32, #tpu.memory_space<smem>>
    %191 = vector.broadcast %190 : f32 to vector<16x16xf32>
    %192 = arith.mulf %191, %3 : vector<16x16xf32>
    %c41 = arith.constant 41 : index
    %193 = memref.load %arg3[%c41] : memref<80xf32, #tpu.memory_space<smem>>
    %194 = vector.broadcast %193 : f32 to vector<16x16xf32>
    %195 = arith.mulf %194, %5 : vector<16x16xf32>
    %196 = arith.addf %192, %195 : vector<16x16xf32>
    %c42 = arith.constant 42 : index
    %197 = memref.load %arg3[%c42] : memref<80xf32, #tpu.memory_space<smem>>
    %198 = vector.broadcast %197 : f32 to vector<16x16xf32>
    %199 = arith.mulf %198, %7 : vector<16x16xf32>
    %200 = arith.addf %196, %199 : vector<16x16xf32>
    %c43 = arith.constant 43 : index
    %201 = memref.load %arg3[%c43] : memref<80xf32, #tpu.memory_space<smem>>
    %202 = vector.broadcast %201 : f32 to vector<16x16xf32>
    %203 = arith.mulf %202, %9 : vector<16x16xf32>
    %204 = arith.addf %200, %203 : vector<16x16xf32>
    %c10_14 = arith.constant 10 : index
    %205 = memref.load %arg4[%c10_14] : memref<20xf32, #tpu.memory_space<smem>>
    %206 = vector.broadcast %205 : f32 to vector<16x16xf32>
    %207 = arith.addf %204, %206 : vector<16x16xf32>
    %c44 = arith.constant 44 : index
    %208 = memref.load %arg3[%c44] : memref<80xf32, #tpu.memory_space<smem>>
    %209 = vector.broadcast %208 : f32 to vector<16x16xf32>
    %210 = arith.mulf %209, %3 : vector<16x16xf32>
    %c45 = arith.constant 45 : index
    %211 = memref.load %arg3[%c45] : memref<80xf32, #tpu.memory_space<smem>>
    %212 = vector.broadcast %211 : f32 to vector<16x16xf32>
    %213 = arith.mulf %212, %5 : vector<16x16xf32>
    %214 = arith.addf %210, %213 : vector<16x16xf32>
    %c46 = arith.constant 46 : index
    %215 = memref.load %arg3[%c46] : memref<80xf32, #tpu.memory_space<smem>>
    %216 = vector.broadcast %215 : f32 to vector<16x16xf32>
    %217 = arith.mulf %216, %7 : vector<16x16xf32>
    %218 = arith.addf %214, %217 : vector<16x16xf32>
    %c47 = arith.constant 47 : index
    %219 = memref.load %arg3[%c47] : memref<80xf32, #tpu.memory_space<smem>>
    %220 = vector.broadcast %219 : f32 to vector<16x16xf32>
    %221 = arith.mulf %220, %9 : vector<16x16xf32>
    %222 = arith.addf %218, %221 : vector<16x16xf32>
    %c11_15 = arith.constant 11 : index
    %223 = memref.load %arg4[%c11_15] : memref<20xf32, #tpu.memory_space<smem>>
    %224 = vector.broadcast %223 : f32 to vector<16x16xf32>
    %225 = arith.addf %222, %224 : vector<16x16xf32>
    %c48 = arith.constant 48 : index
    %226 = memref.load %arg3[%c48] : memref<80xf32, #tpu.memory_space<smem>>
    %227 = vector.broadcast %226 : f32 to vector<16x16xf32>
    %228 = arith.mulf %227, %3 : vector<16x16xf32>
    %c49 = arith.constant 49 : index
    %229 = memref.load %arg3[%c49] : memref<80xf32, #tpu.memory_space<smem>>
    %230 = vector.broadcast %229 : f32 to vector<16x16xf32>
    %231 = arith.mulf %230, %5 : vector<16x16xf32>
    %232 = arith.addf %228, %231 : vector<16x16xf32>
    %c50 = arith.constant 50 : index
    %233 = memref.load %arg3[%c50] : memref<80xf32, #tpu.memory_space<smem>>
    %234 = vector.broadcast %233 : f32 to vector<16x16xf32>
    %235 = arith.mulf %234, %7 : vector<16x16xf32>
    %236 = arith.addf %232, %235 : vector<16x16xf32>
    %c51 = arith.constant 51 : index
    %237 = memref.load %arg3[%c51] : memref<80xf32, #tpu.memory_space<smem>>
    %238 = vector.broadcast %237 : f32 to vector<16x16xf32>
    %239 = arith.mulf %238, %9 : vector<16x16xf32>
    %240 = arith.addf %236, %239 : vector<16x16xf32>
    %c12_16 = arith.constant 12 : index
    %241 = memref.load %arg4[%c12_16] : memref<20xf32, #tpu.memory_space<smem>>
    %242 = vector.broadcast %241 : f32 to vector<16x16xf32>
    %243 = arith.addf %240, %242 : vector<16x16xf32>
    %c52 = arith.constant 52 : index
    %244 = memref.load %arg3[%c52] : memref<80xf32, #tpu.memory_space<smem>>
    %245 = vector.broadcast %244 : f32 to vector<16x16xf32>
    %246 = arith.mulf %245, %3 : vector<16x16xf32>
    %c53 = arith.constant 53 : index
    %247 = memref.load %arg3[%c53] : memref<80xf32, #tpu.memory_space<smem>>
    %248 = vector.broadcast %247 : f32 to vector<16x16xf32>
    %249 = arith.mulf %248, %5 : vector<16x16xf32>
    %250 = arith.addf %246, %249 : vector<16x16xf32>
    %c54 = arith.constant 54 : index
    %251 = memref.load %arg3[%c54] : memref<80xf32, #tpu.memory_space<smem>>
    %252 = vector.broadcast %251 : f32 to vector<16x16xf32>
    %253 = arith.mulf %252, %7 : vector<16x16xf32>
    %254 = arith.addf %250, %253 : vector<16x16xf32>
    %c55 = arith.constant 55 : index
    %255 = memref.load %arg3[%c55] : memref<80xf32, #tpu.memory_space<smem>>
    %256 = vector.broadcast %255 : f32 to vector<16x16xf32>
    %257 = arith.mulf %256, %9 : vector<16x16xf32>
    %258 = arith.addf %254, %257 : vector<16x16xf32>
    %c13_17 = arith.constant 13 : index
    %259 = memref.load %arg4[%c13_17] : memref<20xf32, #tpu.memory_space<smem>>
    %260 = vector.broadcast %259 : f32 to vector<16x16xf32>
    %261 = arith.addf %258, %260 : vector<16x16xf32>
    %c56 = arith.constant 56 : index
    %262 = memref.load %arg3[%c56] : memref<80xf32, #tpu.memory_space<smem>>
    %263 = vector.broadcast %262 : f32 to vector<16x16xf32>
    %264 = arith.mulf %263, %3 : vector<16x16xf32>
    %c57 = arith.constant 57 : index
    %265 = memref.load %arg3[%c57] : memref<80xf32, #tpu.memory_space<smem>>
    %266 = vector.broadcast %265 : f32 to vector<16x16xf32>
    %267 = arith.mulf %266, %5 : vector<16x16xf32>
    %268 = arith.addf %264, %267 : vector<16x16xf32>
    %c58 = arith.constant 58 : index
    %269 = memref.load %arg3[%c58] : memref<80xf32, #tpu.memory_space<smem>>
    %270 = vector.broadcast %269 : f32 to vector<16x16xf32>
    %271 = arith.mulf %270, %7 : vector<16x16xf32>
    %272 = arith.addf %268, %271 : vector<16x16xf32>
    %c59 = arith.constant 59 : index
    %273 = memref.load %arg3[%c59] : memref<80xf32, #tpu.memory_space<smem>>
    %274 = vector.broadcast %273 : f32 to vector<16x16xf32>
    %275 = arith.mulf %274, %9 : vector<16x16xf32>
    %276 = arith.addf %272, %275 : vector<16x16xf32>
    %c14_18 = arith.constant 14 : index
    %277 = memref.load %arg4[%c14_18] : memref<20xf32, #tpu.memory_space<smem>>
    %278 = vector.broadcast %277 : f32 to vector<16x16xf32>
    %279 = arith.addf %276, %278 : vector<16x16xf32>
    %c60 = arith.constant 60 : index
    %280 = memref.load %arg3[%c60] : memref<80xf32, #tpu.memory_space<smem>>
    %281 = vector.broadcast %280 : f32 to vector<16x16xf32>
    %282 = arith.mulf %281, %3 : vector<16x16xf32>
    %c61 = arith.constant 61 : index
    %283 = memref.load %arg3[%c61] : memref<80xf32, #tpu.memory_space<smem>>
    %284 = vector.broadcast %283 : f32 to vector<16x16xf32>
    %285 = arith.mulf %284, %5 : vector<16x16xf32>
    %286 = arith.addf %282, %285 : vector<16x16xf32>
    %c62 = arith.constant 62 : index
    %287 = memref.load %arg3[%c62] : memref<80xf32, #tpu.memory_space<smem>>
    %288 = vector.broadcast %287 : f32 to vector<16x16xf32>
    %289 = arith.mulf %288, %7 : vector<16x16xf32>
    %290 = arith.addf %286, %289 : vector<16x16xf32>
    %c63 = arith.constant 63 : index
    %291 = memref.load %arg3[%c63] : memref<80xf32, #tpu.memory_space<smem>>
    %292 = vector.broadcast %291 : f32 to vector<16x16xf32>
    %293 = arith.mulf %292, %9 : vector<16x16xf32>
    %294 = arith.addf %290, %293 : vector<16x16xf32>
    %c15_19 = arith.constant 15 : index
    %295 = memref.load %arg4[%c15_19] : memref<20xf32, #tpu.memory_space<smem>>
    %296 = vector.broadcast %295 : f32 to vector<16x16xf32>
    %297 = arith.addf %294, %296 : vector<16x16xf32>
    %c64 = arith.constant 64 : index
    %298 = memref.load %arg3[%c64] : memref<80xf32, #tpu.memory_space<smem>>
    %299 = vector.broadcast %298 : f32 to vector<16x16xf32>
    %300 = arith.mulf %299, %3 : vector<16x16xf32>
    %c65 = arith.constant 65 : index
    %301 = memref.load %arg3[%c65] : memref<80xf32, #tpu.memory_space<smem>>
    %302 = vector.broadcast %301 : f32 to vector<16x16xf32>
    %303 = arith.mulf %302, %5 : vector<16x16xf32>
    %304 = arith.addf %300, %303 : vector<16x16xf32>
    %c66 = arith.constant 66 : index
    %305 = memref.load %arg3[%c66] : memref<80xf32, #tpu.memory_space<smem>>
    %306 = vector.broadcast %305 : f32 to vector<16x16xf32>
    %307 = arith.mulf %306, %7 : vector<16x16xf32>
    %308 = arith.addf %304, %307 : vector<16x16xf32>
    %c67 = arith.constant 67 : index
    %309 = memref.load %arg3[%c67] : memref<80xf32, #tpu.memory_space<smem>>
    %310 = vector.broadcast %309 : f32 to vector<16x16xf32>
    %311 = arith.mulf %310, %9 : vector<16x16xf32>
    %312 = arith.addf %308, %311 : vector<16x16xf32>
    %c16_20 = arith.constant 16 : index
    %313 = memref.load %arg4[%c16_20] : memref<20xf32, #tpu.memory_space<smem>>
    %314 = vector.broadcast %313 : f32 to vector<16x16xf32>
    %315 = arith.addf %312, %314 : vector<16x16xf32>
    %c68 = arith.constant 68 : index
    %316 = memref.load %arg3[%c68] : memref<80xf32, #tpu.memory_space<smem>>
    %317 = vector.broadcast %316 : f32 to vector<16x16xf32>
    %318 = arith.mulf %317, %3 : vector<16x16xf32>
    %c69 = arith.constant 69 : index
    %319 = memref.load %arg3[%c69] : memref<80xf32, #tpu.memory_space<smem>>
    %320 = vector.broadcast %319 : f32 to vector<16x16xf32>
    %321 = arith.mulf %320, %5 : vector<16x16xf32>
    %322 = arith.addf %318, %321 : vector<16x16xf32>
    %c70 = arith.constant 70 : index
    %323 = memref.load %arg3[%c70] : memref<80xf32, #tpu.memory_space<smem>>
    %324 = vector.broadcast %323 : f32 to vector<16x16xf32>
    %325 = arith.mulf %324, %7 : vector<16x16xf32>
    %326 = arith.addf %322, %325 : vector<16x16xf32>
    %c71 = arith.constant 71 : index
    %327 = memref.load %arg3[%c71] : memref<80xf32, #tpu.memory_space<smem>>
    %328 = vector.broadcast %327 : f32 to vector<16x16xf32>
    %329 = arith.mulf %328, %9 : vector<16x16xf32>
    %330 = arith.addf %326, %329 : vector<16x16xf32>
    %c17_21 = arith.constant 17 : index
    %331 = memref.load %arg4[%c17_21] : memref<20xf32, #tpu.memory_space<smem>>
    %332 = vector.broadcast %331 : f32 to vector<16x16xf32>
    %333 = arith.addf %330, %332 : vector<16x16xf32>
    %c72 = arith.constant 72 : index
    %334 = memref.load %arg3[%c72] : memref<80xf32, #tpu.memory_space<smem>>
    %335 = vector.broadcast %334 : f32 to vector<16x16xf32>
    %336 = arith.mulf %335, %3 : vector<16x16xf32>
    %c73 = arith.constant 73 : index
    %337 = memref.load %arg3[%c73] : memref<80xf32, #tpu.memory_space<smem>>
    %338 = vector.broadcast %337 : f32 to vector<16x16xf32>
    %339 = arith.mulf %338, %5 : vector<16x16xf32>
    %340 = arith.addf %336, %339 : vector<16x16xf32>
    %c74 = arith.constant 74 : index
    %341 = memref.load %arg3[%c74] : memref<80xf32, #tpu.memory_space<smem>>
    %342 = vector.broadcast %341 : f32 to vector<16x16xf32>
    %343 = arith.mulf %342, %7 : vector<16x16xf32>
    %344 = arith.addf %340, %343 : vector<16x16xf32>
    %c75 = arith.constant 75 : index
    %345 = memref.load %arg3[%c75] : memref<80xf32, #tpu.memory_space<smem>>
    %346 = vector.broadcast %345 : f32 to vector<16x16xf32>
    %347 = arith.mulf %346, %9 : vector<16x16xf32>
    %348 = arith.addf %344, %347 : vector<16x16xf32>
    %c18_22 = arith.constant 18 : index
    %349 = memref.load %arg4[%c18_22] : memref<20xf32, #tpu.memory_space<smem>>
    %350 = vector.broadcast %349 : f32 to vector<16x16xf32>
    %351 = arith.addf %348, %350 : vector<16x16xf32>
    %c76 = arith.constant 76 : index
    %352 = memref.load %arg3[%c76] : memref<80xf32, #tpu.memory_space<smem>>
    %353 = vector.broadcast %352 : f32 to vector<16x16xf32>
    %354 = arith.mulf %353, %3 : vector<16x16xf32>
    %c77 = arith.constant 77 : index
    %355 = memref.load %arg3[%c77] : memref<80xf32, #tpu.memory_space<smem>>
    %356 = vector.broadcast %355 : f32 to vector<16x16xf32>
    %357 = arith.mulf %356, %5 : vector<16x16xf32>
    %358 = arith.addf %354, %357 : vector<16x16xf32>
    %c78 = arith.constant 78 : index
    %359 = memref.load %arg3[%c78] : memref<80xf32, #tpu.memory_space<smem>>
    %360 = vector.broadcast %359 : f32 to vector<16x16xf32>
    %361 = arith.mulf %360, %7 : vector<16x16xf32>
    %362 = arith.addf %358, %361 : vector<16x16xf32>
    %c79 = arith.constant 79 : index
    %363 = memref.load %arg3[%c79] : memref<80xf32, #tpu.memory_space<smem>>
    %364 = vector.broadcast %363 : f32 to vector<16x16xf32>
    %365 = arith.mulf %364, %9 : vector<16x16xf32>
    %366 = arith.addf %362, %365 : vector<16x16xf32>
    %c19_23 = arith.constant 19 : index
    %367 = memref.load %arg4[%c19_23] : memref<20xf32, #tpu.memory_space<smem>>
    %368 = vector.broadcast %367 : f32 to vector<16x16xf32>
    %369 = arith.addf %366, %368 : vector<16x16xf32>
    %370 = vector.shape_cast %27 : vector<16x16xf32> to vector<16x1x16xf32>
    %371 = vector.shape_cast %171 : vector<16x16xf32> to vector<1x16x16xf32>
    %372 = vector.broadcast %370 : vector<16x1x16xf32> to vector<16x16x16xf32>
    %373 = vector.broadcast %371 : vector<1x16x16xf32> to vector<16x16x16xf32>
    %374 = arith.mulf %372, %373 : vector<16x16x16xf32>
    %375 = vector.shape_cast %45 : vector<16x16xf32> to vector<16x1x16xf32>
    %376 = vector.shape_cast %189 : vector<16x16xf32> to vector<1x16x16xf32>
    %377 = vector.broadcast %375 : vector<16x1x16xf32> to vector<16x16x16xf32>
    %378 = vector.broadcast %376 : vector<1x16x16xf32> to vector<16x16x16xf32>
    %379 = arith.mulf %377, %378 : vector<16x16x16xf32>
    %380 = arith.addf %374, %379 : vector<16x16x16xf32>
    %381 = vector.shape_cast %63 : vector<16x16xf32> to vector<16x1x16xf32>
    %382 = vector.shape_cast %207 : vector<16x16xf32> to vector<1x16x16xf32>
    %383 = vector.broadcast %381 : vector<16x1x16xf32> to vector<16x16x16xf32>
    %384 = vector.broadcast %382 : vector<1x16x16xf32> to vector<16x16x16xf32>
    %385 = arith.mulf %383, %384 : vector<16x16x16xf32>
    %386 = arith.addf %380, %385 : vector<16x16x16xf32>
    %387 = vector.shape_cast %81 : vector<16x16xf32> to vector<16x1x16xf32>
    %388 = vector.shape_cast %225 : vector<16x16xf32> to vector<1x16x16xf32>
    %389 = vector.broadcast %387 : vector<16x1x16xf32> to vector<16x16x16xf32>
    %390 = vector.broadcast %388 : vector<1x16x16xf32> to vector<16x16x16xf32>
    %391 = arith.mulf %389, %390 : vector<16x16x16xf32>
    %392 = arith.addf %386, %391 : vector<16x16x16xf32>
    %393 = vector.shape_cast %99 : vector<16x16xf32> to vector<16x1x16xf32>
    %394 = vector.shape_cast %243 : vector<16x16xf32> to vector<1x16x16xf32>
    %395 = vector.broadcast %393 : vector<16x1x16xf32> to vector<16x16x16xf32>
    %396 = vector.broadcast %394 : vector<1x16x16xf32> to vector<16x16x16xf32>
    %397 = arith.mulf %395, %396 : vector<16x16x16xf32>
    %398 = arith.addf %392, %397 : vector<16x16x16xf32>
    %399 = vector.shape_cast %117 : vector<16x16xf32> to vector<16x1x16xf32>
    %400 = vector.shape_cast %261 : vector<16x16xf32> to vector<1x16x16xf32>
    %401 = vector.broadcast %399 : vector<16x1x16xf32> to vector<16x16x16xf32>
    %402 = vector.broadcast %400 : vector<1x16x16xf32> to vector<16x16x16xf32>
    %403 = arith.mulf %401, %402 : vector<16x16x16xf32>
    %404 = arith.addf %398, %403 : vector<16x16x16xf32>
    %405 = vector.shape_cast %135 : vector<16x16xf32> to vector<16x1x16xf32>
    %406 = vector.shape_cast %279 : vector<16x16xf32> to vector<1x16x16xf32>
    %407 = vector.broadcast %405 : vector<16x1x16xf32> to vector<16x16x16xf32>
    %408 = vector.broadcast %406 : vector<1x16x16xf32> to vector<16x16x16xf32>
    %409 = arith.mulf %407, %408 : vector<16x16x16xf32>
    %410 = arith.addf %404, %409 : vector<16x16x16xf32>
    %411 = vector.shape_cast %153 : vector<16x16xf32> to vector<16x1x16xf32>
    %412 = vector.shape_cast %297 : vector<16x16xf32> to vector<1x16x16xf32>
    %413 = vector.broadcast %411 : vector<16x1x16xf32> to vector<16x16x16xf32>
    %414 = vector.broadcast %412 : vector<1x16x16xf32> to vector<16x16x16xf32>
    %415 = arith.mulf %413, %414 : vector<16x16x16xf32>
    %416 = arith.addf %410, %415 : vector<16x16x16xf32>
    %cst = arith.constant dense<0xFF800000> : vector<16x16xf32>
    %417 = vector.multi_reduction <maximumf>, %416, %cst [1] : vector<16x16x16xf32> to vector<16x16xf32>
    %418 = vector.shape_cast %417 : vector<16x16xf32> to vector<16x1x16xf32>
    %419 = vector.broadcast %418 : vector<16x1x16xf32> to vector<16x16x16xf32>
    %420 = arith.subf %416, %419 : vector<16x16x16xf32>
    %421 = math.exp %420 : vector<16x16x16xf32>
    %cst_24 = arith.constant dense<0.000000e+00> : vector<16x16xf32>
    %422 = vector.multi_reduction <add>, %421, %cst_24 [1] : vector<16x16x16xf32> to vector<16x16xf32>
    %423 = vector.shape_cast %422 : vector<16x16xf32> to vector<16x1x16xf32>
    %424 = vector.broadcast %423 : vector<16x1x16xf32> to vector<16x16x16xf32>
    %425 = arith.divf %421, %424 : vector<16x16x16xf32>
    %c0_25 = arith.constant 0 : index
    %426 = memref.load %arg5[%c0_25] : memref<1xf32, #tpu.memory_space<smem>>
    %427 = vector.shape_cast %315 : vector<16x16xf32> to vector<1x16x16xf32>
    %428 = vector.broadcast %427 : vector<1x16x16xf32> to vector<16x16x16xf32>
    %429 = arith.mulf %425, %428 : vector<16x16x16xf32>
    %cst_26 = arith.constant dense<0.000000e+00> : vector<16x16xf32>
    %430 = vector.multi_reduction <add>, %429, %cst_26 [1] : vector<16x16x16xf32> to vector<16x16xf32>
    %431 = vector.broadcast %426 : f32 to vector<16x16xf32>
    %432 = arith.mulf %431, %430 : vector<16x16xf32>
    %433 = arith.addf %432, %3 : vector<16x16xf32>
    %c0_27 = arith.constant 0 : index
    %c0_28 = arith.constant 0 : index
    %c0_29 = arith.constant 0 : index
    %c0_30 = arith.constant 0 : index
    %434 = vector.load %arg6[%c0_27, %c0_28, %c0_29, %c0_30] : memref<1x4x16x16xf32, #tpu.memory_space<vmem>>, vector<1x1x16x16xf32>
    %435 = vector.shape_cast %434 : vector<1x1x16x16xf32> to vector<16x16xf32>
    %436 = vector.shape_cast %433 : vector<16x16xf32> to vector<1x1x16x16xf32>
    tpu.vector_store %arg6[%c0_27, %c0_28, %c0_29, %c0_30], %436 {strides = array<i32>} : memref<1x4x16x16xf32, #tpu.memory_space<vmem>>, vector<1x1x16x16xf32>,
    %437 = vector.shape_cast %333 : vector<16x16xf32> to vector<1x16x16xf32>
    %438 = vector.broadcast %437 : vector<1x16x16xf32> to vector<16x16x16xf32>
    %439 = arith.mulf %425, %438 : vector<16x16x16xf32>
    %cst_31 = arith.constant dense<0.000000e+00> : vector<16x16xf32>
    %440 = vector.multi_reduction <add>, %439, %cst_31 [1] : vector<16x16x16xf32> to vector<16x16xf32>
    %441 = vector.broadcast %426 : f32 to vector<16x16xf32>
    %442 = arith.mulf %441, %440 : vector<16x16xf32>
    %443 = arith.addf %442, %5 : vector<16x16xf32>
    %c0_32 = arith.constant 0 : index
    %c1_33 = arith.constant 1 : index
    %c0_34 = arith.constant 0 : index
    %c0_35 = arith.constant 0 : index
    %444 = vector.load %arg6[%c0_32, %c1_33, %c0_34, %c0_35] : memref<1x4x16x16xf32, #tpu.memory_space<vmem>>, vector<1x1x16x16xf32>
    %445 = vector.shape_cast %444 : vector<1x1x16x16xf32> to vector<16x16xf32>
    %446 = vector.shape_cast %443 : vector<16x16xf32> to vector<1x1x16x16xf32>
    tpu.vector_store %arg6[%c0_32, %c1_33, %c0_34, %c0_35], %446 {strides = array<i32>} : memref<1x4x16x16xf32, #tpu.memory_space<vmem>>, vector<1x1x16x16xf32>,
    %447 = vector.shape_cast %351 : vector<16x16xf32> to vector<1x16x16xf32>
    %448 = vector.broadcast %447 : vector<1x16x16xf32> to vector<16x16x16xf32>
    %449 = arith.mulf %425, %448 : vector<16x16x16xf32>
    %cst_36 = arith.constant dense<0.000000e+00> : vector<16x16xf32>
    %450 = vector.multi_reduction <add>, %449, %cst_36 [1] : vector<16x16x16xf32> to vector<16x16xf32>
    %451 = vector.broadcast %426 : f32 to vector<16x16xf32>
    %452 = arith.mulf %451, %450 : vector<16x16xf32>
    %453 = arith.addf %452, %7 : vector<16x16xf32>
    %c0_37 = arith.constant 0 : index
    %c2_38 = arith.constant 2 : index
    %c0_39 = arith.constant 0 : index
    %c0_40 = arith.constant 0 : index
    %454 = vector.load %arg6[%c0_37, %c2_38, %c0_39, %c0_40] : memref<1x4x16x16xf32, #tpu.memory_space<vmem>>, vector<1x1x16x16xf32>
    %455 = vector.shape_cast %454 : vector<1x1x16x16xf32> to vector<16x16xf32>
    %456 = vector.shape_cast %453 : vector<16x16xf32> to vector<1x1x16x16xf32>
    tpu.vector_store %arg6[%c0_37, %c2_38, %c0_39, %c0_40], %456 {strides = array<i32>} : memref<1x4x16x16xf32, #tpu.memory_space<vmem>>, vector<1x1x16x16xf32>,
    %457 = vector.shape_cast %369 : vector<16x16xf32> to vector<1x16x16xf32>
    %458 = vector.broadcast %457 : vector<1x16x16xf32> to vector<16x16x16xf32>
    %459 = arith.mulf %425, %458 : vector<16x16x16xf32>
    %cst_41 = arith.constant dense<0.000000e+00> : vector<16x16xf32>
    %460 = vector.multi_reduction <add>, %459, %cst_41 [1] : vector<16x16x16xf32> to vector<16x16xf32>
    %461 = vector.broadcast %426 : f32 to vector<16x16xf32>
    %462 = arith.mulf %461, %460 : vector<16x16xf32>
    %463 = arith.addf %462, %9 : vector<16x16xf32>
    %c0_42 = arith.constant 0 : index
    %c3_43 = arith.constant 3 : index
    %c0_44 = arith.constant 0 : index
    %c0_45 = arith.constant 0 : index
    %464 = vector.load %arg6[%c0_42, %c3_43, %c0_44, %c0_45] : memref<1x4x16x16xf32, #tpu.memory_space<vmem>>, vector<1x1x16x16xf32>
    %465 = vector.shape_cast %464 : vector<1x1x16x16xf32> to vector<16x16xf32>
    %466 = vector.shape_cast %463 : vector<16x16xf32> to vector<1x1x16x16xf32>
    tpu.vector_store %arg6[%c0_42, %c3_43, %c0_44, %c0_45], %466 {strides = array<i32>} : memref<1x4x16x16xf32, #tpu.memory_space<vmem>>, vector<1x1x16x16xf32>,
    return
  }
  func.func @transform_0(%arg0: i32, %arg1: i32) -> (i32, i32, i32, i32) {
    %c0_i32 = arith.constant 0 : i32
    %c0_i32_0 = arith.constant 0 : i32
    %c0_i32_1 = arith.constant 0 : i32
    return %arg0, %c0_i32, %c0_i32_0, %arg1 : i32, i32, i32, i32
  }
  func.func @transform_1(%arg0: i32, %arg1: i32) -> i32 {
    %c0_i32 = arith.constant 0 : i32
    %c0_i32_0 = arith.constant 0 : i32
    return %c0_i32 : i32
  }
  func.func @transform_2(%arg0: i32, %arg1: i32) -> i32 {
    %c0_i32 = arith.constant 0 : i32
    %c0_i32_0 = arith.constant 0 : i32
    return %c0_i32 : i32
  }
  func.func @transform_3(%arg0: i32, %arg1: i32) -> i32 {
    %c0_i32 = arith.constant 0 : i32
    %c0_i32_0 = arith.constant 0 : i32
    return %c0_i32 : i32
  }
  func.func @transform_4(%arg0: i32, %arg1: i32) -> (i32, i32, i32, i32) {
    %c0_i32 = arith.constant 0 : i32
    %c0_i32_0 = arith.constant 0 : i32
    %c0_i32_1 = arith.constant 0 : i32
    return %arg0, %c0_i32, %c0_i32_0, %arg1 : i32, i32, i32, i32
  }
}

</mosaic_0001>

<llo_original>
// kernel: tpu_custom_call.1
$region0: #{tpu_custom_call.1}
  #allocation0 [shape = 'u32[]', space=smem, size = 0x4, offset = 0x4, fixed_abs, tag = 'smem constant byte address 0x4 - core index']
  #allocation1 [shape = 'u32[144,128]{1,0:T(1,128)}', space=vmem, size = 0x12000, scoped, tag = 'internal scratch']
  #allocation2 [shape = 'f32[1]{0:T(128)S(6)}', space=smem, size = 0x200, scoped, tag = 'scoped memory for tpu_custom_call.1']
  %s0 = inlined_call_operand.hbm [shape: f32[2,4,16,16], index: 0, kind: input, shape index: {}]
  %s1 = inlined_call_operand.vmem [shape: f32[80], index: 1, kind: input, shape index: {}]
  %s2 = inlined_call_operand.vmem [shape: f32[20], index: 2, kind: input, shape index: {}]
  %s3 = inlined_call_operand.<no memory space> [shape: f32[1], index: 3, kind: input, shape index: {}]
  %s4 = inlined_call_operand.hbm [shape: f32[2,4,16,16], index: 4, kind: output, shape index: {}]
  %s5 = sld [smem:[#allocation0]]
  $region61: #{tpu_custom_call.1} parent=0
    _
  %s7 = ssub.s32 1, %s5
  %s8 = scalar_select 0, %s7, %s5
  %9 = sst [smem:[#allocation2]] %s3
  $region1: #{tpu_custom_call.1} parent=0
    #allocation3 [shape = 'u8[65536]{0}', space=vmem, size = 0x10000, scoped, tag = 'input window, operand 0']
    #allocation4 [shape = 's32[2]{0}', space=sflag, size = 0x8, scoped, tag = 'scoped memory for tpu_custom_call.1']
    #allocation5 [shape = 's32[2]{0}', space=sflag, size = 0x8, scoped, tag = 'scoped memory for tpu_custom_call.1']
    #allocation6 [shape = 's32[2]{0}', space=sflag, size = 0x8, scoped, tag = 'scoped memory for tpu_custom_call.1']
    #allocation7 [shape = 'u8[512]{0}', space=smem, size = 0x200, scoped, tag = 'input window, operand 1, single buffered']
    #allocation8 [shape = 'u8[512]{0}', space=smem, size = 0x200, scoped, tag = 'input window, operand 2, single buffered']
    #allocation9 [shape = 's32[1]{0}', space=sflag, size = 0x4, scoped, tag = 'scoped memory for tpu_custom_call.1']
    #allocation10 [shape = 'u8[65536]{0}', space=vmem, size = 0x10000, scoped, tag = 'output window, operand 0']
    %10 = vsyncpa [#allocation4], 0
    %s11 = scalar_lea.sflag [#allocation4], 1
    %12 = vsyncpa %s11, 0
    %13 = vsyncpa [#allocation6], 0
    %14 = vsyncpa [#allocation9], 0
    %15 = vsyncpa [#allocation5], 0
    %s16 = scalar_lea.sflag [#allocation5], 1
    %17 = vsyncpa %s16, 0
    loop: start=0, step=1, limit=4
    $region2: #{tpu_custom_call.1} parent=1 // loop_pre_header
      _
    $region3: #{tpu_custom_call.1} parent=1 // loop_header
      %s19 = sphi 0, %s23
      %p20 = scmp.ge.s32.totalorder %s19, 4
      %s26 = sphi 0, %s38
      %s27 = sphi 0, %s34
      %s28 = sphi 0, %s26
      %s29 = sphi 0, %s27
      %s30 = sphi 0, %s28
      %s31 = sphi 0, %s29
      %s43 = sphi 0, %s45
      %s46 = sphi 0, %s43
      %s47 = sphi 0, %s46
      %s63 = sphi 0, %s47
      %s67 = sphi 0, %s67
      %s69 = sphi 0, %s67
      %s70 = sphi 0, %s69
      %s84 = sphi 0, %s70
      %s88 = sphi 0, %s88
      %s90 = sphi 0, %s88
      %s91 = sphi 0, %s90
      %s105 = sphi 0, %s91
      %s109 = sphi 0, %s109
      %s111 = sphi 0, %s109
      %s112 = sphi 0, %s111
      %s126 = sphi 0, %s112
      %s134 = sphi 0, %s136
      %s137 = sphi 0, %s134
      %s138 = sphi 0, %s137
      %s154 = sphi 0, %s138
    $region4: #{tpu_custom_call.1} parent=1 // loop_header_branch
      %22 = sbr.rel (%p20) target = $region8
    $region5: #{tpu_custom_call.1} parent=1 // loop_body
      %s24 = ssub.s32 %s19, 1
      %s25 = ssub.s32 %s19, 2
      %s32 = sadd.s32 1, %s27
      %p33 = scmp.ge.s32.totalorder %s32, 1
      %s34 = scalar_select %p33, 0, %s32
      %s35 = sadd.s32 1, %s26
      %s36 = scalar_select %p33, %s35, %s26
      %p37 = scmp.ge.s32.totalorder %s36, 2
      %s38 = scalar_select %p37, 0, %s36
      %s39 = ssub.s32 %s26, %s38
      %s40 = ssub.s32 %s27, %s34
      %s41 = sor.u32 %s39, %s40
      %p42 = scmp.eq.s32.totalorder %s41, 0
      %s44 = sadd.s32 %s43, 1
      %s45 = scalar_select %p42, %s43, %s44
      %p48 = pneg %p42
      %p49 = scmp.eq.s32.totalorder %s19, 1
      %p50 = por %p48, %p49
      %p51 = scmp.ne.s32.totalorder %s43, %s46
      %p52 = scmp.eq.s32.totalorder %s19, 0
      %p53 = por %p51, %p52
      %p54 = scmp.ne.s32.totalorder %s43, %s46
      %p55 = scmp.eq.s32.totalorder %s24, 1
      %p56 = por %p54, %p55
      %p57 = scmp.ne.s32.totalorder %s46, %s47
      %p58 = scmp.eq.s32.totalorder %s24, 0
      %p59 = por %p57, %p58
      %p60 = scmp.ne.s32.totalorder %s46, %s47
      %p61 = scmp.eq.s32.totalorder %s25, 1
      %p62 = por %p60, %p61
      %p64 = scmp.ne.s32.totalorder %s47, %s63
      %p65 = scmp.eq.s32.totalorder %s25, 0
      %p66 = por %p64, %p65
      %s68 = sadd.s32 %s67, 1
      %p71 = scmp.eq.s32.totalorder %s19, 1
      %p72 = scmp.ne.s32.totalorder %s67, %s69
      %p73 = scmp.eq.s32.totalorder %s19, 0
      %p74 = por %p72, %p73
      %p75 = scmp.ne.s32.totalorder %s67, %s69
      %p76 = scmp.eq.s32.totalorder %s24, 1
      %p77 = por %p75, %p76
      %p78 = scmp.ne.s32.totalorder %s69, %s70
      %p79 = scmp.eq.s32.totalorder %s24, 0
      %p80 = por %p78, %p79
      %p81 = scmp.ne.s32.totalorder %s69, %s70
      %p82 = scmp.eq.s32.totalorder %s25, 1
      %p83 = por %p81, %p82
      %p85 = scmp.ne.s32.totalorder %s70, %s84
      %p86 = scmp.eq.s32.totalorder %s25, 0
      %p87 = por %p85, %p86
      %s89 = sadd.s32 %s88, 1
      %p92 = scmp.eq.s32.totalorder %s19, 1
      %p93 = scmp.ne.s32.totalorder %s88, %s90
      %p94 = scmp.eq.s32.totalorder %s19, 0
      %p95 = por %p93, %p94
      %p96 = scmp.ne.s32.totalorder %s88, %s90
      %p97 = scmp.eq.s32.totalorder %s24, 1
      %p98 = por %p96, %p97
      %p99 = scmp.ne.s32.totalorder %s90, %s91
      %p100 = scmp.eq.s32.totalorder %s24, 0
      %p101 = por %p99, %p100
      %p102 = scmp.ne.s32.totalorder %s90, %s91
      %p103 = scmp.eq.s32.totalorder %s25, 1
      %p104 = por %p102, %p103
      %p106 = scmp.ne.s32.totalorder %s91, %s105
      %p107 = scmp.eq.s32.totalorder %s25, 0
      %p108 = por %p106, %p107
      %s110 = sadd.s32 %s109, 1
      %p113 = scmp.eq.s32.totalorder %s19, 1
      %p114 = scmp.ne.s32.totalorder %s109, %s111
      %p115 = scmp.eq.s32.totalorder %s19, 0
      %p116 = por %p114, %p115
      %p117 = scmp.ne.s32.totalorder %s109, %s111
      %p118 = scmp.eq.s32.totalorder %s24, 1
      %p119 = por %p117, %p118
      %p120 = scmp.ne.s32.totalorder %s111, %s112
      %p121 = scmp.eq.s32.totalorder %s24, 0
      %p122 = por %p120, %p121
      %p123 = scmp.ne.s32.totalorder %s111, %s112
      %p124 = scmp.eq.s32.totalorder %s25, 1
      %p125 = por %p123, %p124
      %p127 = scmp.ne.s32.totalorder %s112, %s126
      %p128 = scmp.eq.s32.totalorder %s25, 0
      %p129 = por %p127, %p128
      %s130 = ssub.s32 %s26, %s38
      %s131 = ssub.s32 %s27, %s34
      %s132 = sor.u32 %s130, %s131
      %p133 = scmp.eq.s32.totalorder %s132, 0
      %s135 = sadd.s32 %s134, 1
      %s136 = scalar_select %p133, %s134, %s135
      %p139 = pneg %p133
      %p140 = scmp.eq.s32.totalorder %s19, 1
      %p141 = por %p139, %p140
      %p142 = scmp.ne.s32.totalorder %s134, %s137
      %p143 = scmp.eq.s32.totalorder %s19, 0
      %p144 = por %p142, %p143
      %p145 = scmp.ne.s32.totalorder %s134, %s137
      %p146 = scmp.eq.s32.totalorder %s24, 1
      %p147 = por %p145, %p146
      %p148 = scmp.ne.s32.totalorder %s137, %s138
      %p149 = scmp.eq.s32.totalorder %s24, 0
      %p150 = por %p148, %p149
      %p151 = scmp.ne.s32.totalorder %s137, %s138
      %p152 = scmp.eq.s32.totalorder %s25, 1
      %p153 = por %p151, %p152
      %p155 = scmp.ne.s32.totalorder %s138, %s154
      %p156 = scmp.eq.s32.totalorder %s25, 0
      %p157 = por %p155, %p156
      %p158 = scmp.le.s32.totalorder 1, %s19
      %p159 = scmp.lt.s32.totalorder %s19, 3
      %p160 = pnand %p158, %p159
      %p161 = pneg %p160
      // Predicated region
      $region9: #{tpu_custom_call.1} parent=5 // pred_check
        _
      $region10: #{tpu_custom_call.1} parent=5 // pred_check_branch
        %163 = sbr.rel (%p160) target = $region12
      $region11: #{tpu_custom_call.1} parent=5 // pred_region
        %s164 = ssub.s32 %s19, 1
        // Predicated region
        $region13: #{tpu_custom_call.1} parent=11 // pred_check
          %p165 = pneg %p80
        $region14: #{tpu_custom_call.1} parent=11 // pred_check_branch
          %167 = sbr.rel (%p165) target = $region16
        $region15: #{tpu_custom_call.1} parent=11 // pred_region
          %s169 = ssub.s32 16, 16
          %170 = vsyncadd [#allocation6], %s169
          %s172 = sshll.u32 %s1, 4
          %s173 = int_to_ptr.vmem [resolvable:$true] %s172
          %175 = dma.vmem_to_smem %s173, 16, [#allocation7], [#allocation6]
        $region16: #{tpu_custom_call.1} parent=11 // pred_fallthru
          _
        // Predicated region
        $region17: #{tpu_custom_call.1} parent=11 // pred_check
          %p176 = pneg %p101
        $region18: #{tpu_custom_call.1} parent=11 // pred_check_branch
          %178 = sbr.rel (%p176) target = $region20
        $region19: #{tpu_custom_call.1} parent=11 // pred_region
          %s180 = ssub.s32 16, 16
          %181 = vsyncadd [#allocation9], %s180
          %s183 = sshll.u32 %s2, 4
          %s184 = int_to_ptr.vmem [resolvable:$true] %s183
          %186 = dma.vmem_to_smem %s184, 16, [#allocation8], [#allocation9]
        $region20: #{tpu_custom_call.1} parent=11 // pred_fallthru
          _
        // Predicated region
        $region21: #{tpu_custom_call.1} parent=11 // pred_check
          %p187 = pneg %p122
        $region22: #{tpu_custom_call.1} parent=11 // pred_check_branch
          %189 = sbr.rel (%p187) target = $region24
        $region23: #{tpu_custom_call.1} parent=11 // pred_region
          _
        $region24: #{tpu_custom_call.1} parent=11 // pred_fallthru
          _
      $region12: #{tpu_custom_call.1} parent=5 // pred_fallthru
        _
      %p190 = scmp.lt.s32.totalorder %s19, 2
      // Predicated region
      $region25: #{tpu_custom_call.1} parent=5 // pred_check
        %p191 = pneg %p190
      $region26: #{tpu_custom_call.1} parent=5 // pred_check_branch
        %193 = sbr.rel (%p191) target = $region28
      $region27: #{tpu_custom_call.1} parent=5 // pred_region
        // Predicated region
        $region29: #{tpu_custom_call.1} parent=27 // pred_check
          %p194 = pneg %p53
        $region30: #{tpu_custom_call.1} parent=27 // pred_check_branch
          %196 = sbr.rel (%p194) target = $region32
        $region31: #{tpu_custom_call.1} parent=27 // pred_region
          %s197 = sand.u32 %s43, 1
          %s198 = scalar_lea.sflag [#allocation4], %s197
          %s199 = sand.u32 %s43, 1
          %s200 = smul.addr %s199, 64
          %s201 = scalar_lea.vmem [#allocation3], %s200
          %s203 = ssub.s32 1024, 1024
          %204 = vsyncadd %s198, %s203
          %s205 = smul.addr %s26, 8
          %s206 = sadd.s32 %s27, %s205
          %s207 = smul.addr %s206, 128
          %s208 = scalar_lea.hbm %s0, %s207
          %s209 = sshll.u32 %s201, 4
          %s210 = int_to_ptr.vmem [resolvable:$true] %s209
          %215 = dma.hbm_to_vmem [thread:$0]  %s208, 1024, %s210, %s198, 128, 128, 8
        $region32: #{tpu_custom_call.1} parent=27 // pred_fallthru
          _
      $region28: #{tpu_custom_call.1} parent=5 // pred_fallthru
        _
      %p216 = scmp.le.s32.totalorder 1, %s19
      %p217 = scmp.lt.s32.totalorder %s19, 3
      %p218 = pnand %p216, %p217
      %p219 = pneg %p218
      // Predicated region
      $region33: #{tpu_custom_call.1} parent=5 // pred_check
        _
      $region34: #{tpu_custom_call.1} parent=5 // pred_check_branch
        %221 = sbr.rel (%p218) target = $region36
      $region35: #{tpu_custom_call.1} parent=5 // pred_region
        %s222 = ssub.s32 %s19, 1
        %s223 = sand.u32 %s46, 1
        %s224 = scalar_lea.sflag [#allocation4], %s223
        %s225 = sand.u32 %s46, 1
        %s226 = smul.addr %s225, 64
        %s227 = scalar_lea.vmem [#allocation3], %s226
        // Predicated region
        $region37: #{tpu_custom_call.1} parent=35 // pred_check
          %p228 = pneg %p59
        $region38: #{tpu_custom_call.1} parent=35 // pred_check_branch
          %230 = sbr.rel (%p228) target = $region40
        $region39: #{tpu_custom_call.1} parent=35 // pred_region
          %231 = dma.done %s224, 1024
        $region40: #{tpu_custom_call.1} parent=35 // pred_fallthru
          _
        // Predicated region
        $region41: #{tpu_custom_call.1} parent=35 // pred_check
          %p232 = pneg %p80
        $region42: #{tpu_custom_call.1} parent=35 // pred_check_branch
          %234 = sbr.rel (%p232) target = $region44
        $region43: #{tpu_custom_call.1} parent=35 // pred_region
          %235 = dma.done [#allocation6], 16
        $region44: #{tpu_custom_call.1} parent=35 // pred_fallthru
          _
        // Predicated region
        $region45: #{tpu_custom_call.1} parent=35 // pred_check
          %p236 = pneg %p101
        $region46: #{tpu_custom_call.1} parent=35 // pred_check_branch
          %238 = sbr.rel (%p236) target = $region48
        $region47: #{tpu_custom_call.1} parent=35 // pred_region
          %239 = dma.done [#allocation9], 16
        $region48: #{tpu_custom_call.1} parent=35 // pred_fallthru
          _
        %240 = sfence
        %s241 = sand.u32 %s46, 1
        %s242 = scalar_lea.sflag [#allocation4], %s241
        %s243 = sand.u32 %s46, 1
        %s244 = smul.addr %s243, 64
        %s245 = scalar_lea.vmem [#allocation3], %s244
        %p246 = pneg %p59
        %p247 = pneg %p56
        %p248 = pneg %p80
        %p249 = pneg %p77
        %p250 = pneg %p101
        %p251 = pneg %p98
        %p252 = pneg %p122
        %p253 = pneg %p119
        %p254 = pneg %p150
        %p255 = pneg %p147
        %s256 = sand.u32 %s137, 1
        %s257 = scalar_lea.sflag [#allocation5], %s256
        %s258 = sand.u32 %s137, 1
        %s259 = smul.addr %s258, 64
        %s260 = scalar_lea.vmem [#allocation10], %s259
        %v261 = vld [vmem:[%s227] sm:$0xff]
        %v262 = vld [vmem:[%s227 + $0x8] sm:$0xff]
        %v263 = vld [vmem:[%s227 + $0x10] sm:$0xff]
        %v264 = vld [vmem:[%s227 + $0x18] sm:$0xff]
        %v265 = vld [vmem:[%s227 + $0x20] sm:$0xff]
        %v266 = vld [vmem:[%s227 + $0x28] sm:$0xff]
        %v267 = vld [vmem:[%s227 + $0x30] sm:$0xff]
        %v268 = vld [vmem:[%s227 + $0x38] sm:$0xff]
        %s269 = sld [smem:[#allocation7]]
        %v270 = vstv %s269
        %v271 = vmul.f32 %v270, %v261
        %v272 = vmul.f32 %v270, %v262
        %s273 = sld [smem:[#allocation7 + $0x1]]
        %v274 = vstv %s273
        %v275 = vmul.f32 %v274, %v263
        %v276 = vmul.f32 %v274, %v264
        %v277 = vadd.f32 %v271, %v275
        %v278 = vadd.f32 %v272, %v276
        %s279 = sld [smem:[#allocation7 + $0x2]]
        %v280 = vstv %s279
        %v281 = vmul.f32 %v280, %v265
        %v282 = vmul.f32 %v280, %v266
        %v283 = vadd.f32 %v277, %v281
        %v284 = vadd.f32 %v278, %v282
        %s285 = sld [smem:[#allocation7 + $0x3]]
        %v286 = vstv %s285
        %v287 = vmul.f32 %v286, %v267
        %v288 = vmul.f32 %v286, %v268
        %v289 = vadd.f32 %v283, %v287
        %v290 = vadd.f32 %v284, %v288
        %s291 = sld [smem:[#allocation8]]
        %v292 = vstv %s291
        %v293 = vadd.f32 %v289, %v292
        %v294 = vadd.f32 %v290, %v292
        %s295 = sld [smem:[#allocation7 + $0x4]]
        %v296 = vstv %s295
        %v297 = vmul.f32 %v296, %v261
        %v298 = vmul.f32 %v296, %v262
        %s299 = sld [smem:[#allocation7 + $0x5]]
        %v300 = vstv %s299
        %v301 = vmul.f32 %v300, %v263
        %v302 = vmul.f32 %v300, %v264
        %v303 = vadd.f32 %v297, %v301
        %v304 = vadd.f32 %v298, %v302
        %s305 = sld [smem:[#allocation7 + $0x6]]
        %v306 = vstv %s305
        %v307 = vmul.f32 %v306, %v265
        %v308 = vmul.f32 %v306, %v266
        %v309 = vadd.f32 %v303, %v307
        %v310 = vadd.f32 %v304, %v308
        %s311 = sld [smem:[#allocation7 + $0x7]]
        %v312 = vstv %s311
        %v313 = vmul.f32 %v312, %v267
        %v314 = vmul.f32 %v312, %v268
        %v315 = vadd.f32 %v309, %v313
        %v316 = vadd.f32 %v310, %v314
        %s317 = sld [smem:[#allocation8 + $0x1]]
        %v318 = vstv %s317
        %v319 = vadd.f32 %v315, %v318
        %v320 = vadd.f32 %v316, %v318
        %s321 = sld [smem:[#allocation7 + $0x8]]
        %v322 = vstv %s321
        %v323 = vmul.f32 %v322, %v261
        %v324 = vmul.f32 %v322, %v262
        %s325 = sld [smem:[#allocation7 + $0x9]]
        %v326 = vstv %s325
        %v327 = vmul.f32 %v326, %v263
        %v328 = vmul.f32 %v326, %v264
        %v329 = vadd.f32 %v323, %v327
        %v330 = vadd.f32 %v324, %v328
        %s331 = sld [smem:[#allocation7 + $0xa]]
        %v332 = vstv %s331
        %v333 = vmul.f32 %v332, %v265
        %v334 = vmul.f32 %v332, %v266
        %v335 = vadd.f32 %v329, %v333
        %v336 = vadd.f32 %v330, %v334
        %s337 = sld [smem:[#allocation7 + $0xb]]
        %v338 = vstv %s337
        %v339 = vmul.f32 %v338, %v267
        %v340 = vmul.f32 %v338, %v268
        %v341 = vadd.f32 %v335, %v339
        %v342 = vadd.f32 %v336, %v340
        %s343 = sld [smem:[#allocation8 + $0x2]]
        %v344 = vstv %s343
        %v345 = vadd.f32 %v341, %v344
        %v346 = vadd.f32 %v342, %v344
        %s347 = sld [smem:[#allocation7 + $0xc]]
        %v348 = vstv %s347
        %v349 = vmul.f32 %v348, %v261
        %v350 = vmul.f32 %v348, %v262
        %s351 = sld [smem:[#allocation7 + $0xd]]
        %v352 = vstv %s351
        %v353 = vmul.f32 %v352, %v263
        %v354 = vmul.f32 %v352, %v264
        %v355 = vadd.f32 %v349, %v353
        %v356 = vadd.f32 %v350, %v354
        %s357 = sld [smem:[#allocation7 + $0xe]]
        %v358 = vstv %s357
        %v359 = vmul.f32 %v358, %v265
        %v360 = vmul.f32 %v358, %v266
        %v361 = vadd.f32 %v355, %v359
        %v362 = vadd.f32 %v356, %v360
        %s363 = sld [smem:[#allocation7 + $0xf]]
        %v364 = vstv %s363
        %v365 = vmul.f32 %v364, %v267
        %v366 = vmul.f32 %v364, %v268
        %v367 = vadd.f32 %v361, %v365
        %v368 = vadd.f32 %v362, %v366
        %s369 = sld [smem:[#allocation8 + $0x3]]
        %v370 = vstv %s369
        %v371 = vadd.f32 %v367, %v370
        %v372 = vadd.f32 %v368, %v370
        %s373 = sld [smem:[#allocation7 + $0x10]]
        %v374 = vstv %s373
        %v375 = vmul.f32 %v374, %v261
        %v376 = vmul.f32 %v374, %v262
        %s377 = sld [smem:[#allocation7 + $0x11]]
        %v378 = vstv %s377
        %v379 = vmul.f32 %v378, %v263
        %v380 = vmul.f32 %v378, %v264
        %v381 = vadd.f32 %v375, %v379
        %v382 = vadd.f32 %v376, %v380
        %s383 = sld [smem:[#allocation7 + $0x12]]
        %v384 = vstv %s383
        %v385 = vmul.f32 %v384, %v265
        %v386 = vmul.f32 %v384, %v266
        %v387 = vadd.f32 %v381, %v385
        %v388 = vadd.f32 %v382, %v386
        %s389 = sld [smem:[#allocation7 + $0x13]]
        %v390 = vstv %s389
        %v391 = vmul.f32 %v390, %v267
        %v392 = vmul.f32 %v390, %v268
        %v393 = vadd.f32 %v387, %v391
        %v394 = vadd.f32 %v388, %v392
        %s395 = sld [smem:[#allocation8 + $0x4]]
        %v396 = vstv %s395
        %v397 = vadd.f32 %v393, %v396
        %v398 = vadd.f32 %v394, %v396
        %s399 = sld [smem:[#allocation7 + $0x14]]
        %v400 = vstv %s399
        %v401 = vmul.f32 %v400, %v261
        %v402 = vmul.f32 %v400, %v262
        %s403 = sld [smem:[#allocation7 + $0x15]]
        %v404 = vstv %s403
        %v405 = vmul.f32 %v404, %v263
        %v406 = vmul.f32 %v404, %v264
        %v407 = vadd.f32 %v401, %v405
        %v408 = vadd.f32 %v402, %v406
        %s409 = sld [smem:[#allocation7 + $0x16]]
        %v410 = vstv %s409
        %v411 = vmul.f32 %v410, %v265
        %v412 = vmul.f32 %v410, %v266
        %v413 = vadd.f32 %v407, %v411
        %v414 = vadd.f32 %v408, %v412
        %s415 = sld [smem:[#allocation7 + $0x17]]
        %v416 = vstv %s415
        %v417 = vmul.f32 %v416, %v267
        %v418 = vmul.f32 %v416, %v268
        %v419 = vadd.f32 %v413, %v417
        %v420 = vadd.f32 %v414, %v418
        %s421 = sld [smem:[#allocation8 + $0x5]]
        %v422 = vstv %s421
        %v423 = vadd.f32 %v419, %v422
        %v424 = vadd.f32 %v420, %v422
        %s425 = sld [smem:[#allocation7 + $0x18]]
        %v426 = vstv %s425
        %v427 = vmul.f32 %v426, %v261
        %v428 = vmul.f32 %v426, %v262
        %s429 = sld [smem:[#allocation7 + $0x19]]
        %v430 = vstv %s429
        %v431 = vmul.f32 %v430, %v263
        %v432 = vmul.f32 %v430, %v264
        %v433 = vadd.f32 %v427, %v431
        %v434 = vadd.f32 %v428, %v432
        %s435 = sld [smem:[#allocation7 + $0x1a]]
        %v436 = vstv %s435
        %v437 = vmul.f32 %v436, %v265
        %v438 = vmul.f32 %v436, %v266
        %v439 = vadd.f32 %v433, %v437
        %v440 = vadd.f32 %v434, %v438
        %s441 = sld [smem:[#allocation7 + $0x1b]]
        %v442 = vstv %s441
        %v443 = vmul.f32 %v442, %v267
        %v444 = vmul.f32 %v442, %v268
        %v445 = vadd.f32 %v439, %v443
        %v446 = vadd.f32 %v440, %v444
        %s447 = sld [smem:[#allocation8 + $0x6]]
        %v448 = vstv %s447
        %v449 = vadd.f32 %v445, %v448
        %v450 = vadd.f32 %v446, %v448
        %s451 = sld [smem:[#allocation7 + $0x1c]]
        %v452 = vstv %s451
        %v453 = vmul.f32 %v452, %v261
        %v454 = vmul.f32 %v452, %v262
        %s455 = sld [smem:[#allocation7 + $0x1d]]
        %v456 = vstv %s455
        %v457 = vmul.f32 %v456, %v263
        %v458 = vmul.f32 %v456, %v264
        %v459 = vadd.f32 %v453, %v457
        %v460 = vadd.f32 %v454, %v458
        %s461 = sld [smem:[#allocation7 + $0x1e]]
        %v462 = vstv %s461
        %v463 = vmul.f32 %v462, %v265
        %v464 = vmul.f32 %v462, %v266
        %v465 = vadd.f32 %v459, %v463
        %v466 = vadd.f32 %v460, %v464
        %s467 = sld [smem:[#allocation7 + $0x1f]]
        %v468 = vstv %s467
        %v469 = vmul.f32 %v468, %v267
        %v470 = vmul.f32 %v468, %v268
        %v471 = vadd.f32 %v465, %v469
        %v472 = vadd.f32 %v466, %v470
        %s473 = sld [smem:[#allocation8 + $0x7]]
        %v474 = vstv %s473
        %v475 = vadd.f32 %v471, %v474
        %v476 = vadd.f32 %v472, %v474
        %s477 = sld [smem:[#allocation7 + $0x20]]
        %v478 = vstv %s477
        %v479 = vmul.f32 %v478, %v261
        %v480 = vmul.f32 %v478, %v262
        %s481 = sld [smem:[#allocation7 + $0x21]]
        %v482 = vstv %s481
        %v483 = vmul.f32 %v482, %v263
        %v484 = vmul.f32 %v482, %v264
        %v485 = vadd.f32 %v479, %v483
        %v486 = vadd.f32 %v480, %v484
        %s487 = sld [smem:[#allocation7 + $0x22]]
        %v488 = vstv %s487
        %v489 = vmul.f32 %v488, %v265
        %v490 = vmul.f32 %v488, %v266
        %v491 = vadd.f32 %v485, %v489
        %v492 = vadd.f32 %v486, %v490
        %s493 = sld [smem:[#allocation7 + $0x23]]
        %v494 = vstv %s493
        %v495 = vmul.f32 %v494, %v267
        %v496 = vmul.f32 %v494, %v268
        %v497 = vadd.f32 %v491, %v495
        %v498 = vadd.f32 %v492, %v496
        %s499 = sld [smem:[#allocation8 + $0x8]]
        %v500 = vstv %s499
        %v501 = vadd.f32 %v497, %v500
        %v502 = vadd.f32 %v498, %v500
        %s503 = sld [smem:[#allocation7 + $0x24]]
        %v504 = vstv %s503
        %v505 = vmul.f32 %v504, %v261
        %v506 = vmul.f32 %v504, %v262
        %s507 = sld [smem:[#allocation7 + $0x25]]
        %v508 = vstv %s507
        %v509 = vmul.f32 %v508, %v263
        %v510 = vmul.f32 %v508, %v264
        %v511 = vadd.f32 %v505, %v509
        %v512 = vadd.f32 %v506, %v510
        %s513 = sld [smem:[#allocation7 + $0x26]]
        %v514 = vstv %s513
        %v515 = vmul.f32 %v514, %v265
        %v516 = vmul.f32 %v514, %v266
        %v517 = vadd.f32 %v511, %v515
        %v518 = vadd.f32 %v512, %v516
        %s519 = sld [smem:[#allocation7 + $0x27]]
        %v520 = vstv %s519
        %v521 = vmul.f32 %v520, %v267
        %v522 = vmul.f32 %v520, %v268
        %v523 = vadd.f32 %v517, %v521
        %v524 = vadd.f32 %v518, %v522
        %s525 = sld [smem:[#allocation8 + $0x9]]
        %v526 = vstv %s525
        %v527 = vadd.f32 %v523, %v526
        %v528 = vadd.f32 %v524, %v526
        %s529 = sld [smem:[#allocation7 + $0x28]]
        %v530 = vstv %s529
        %v531 = vmul.f32 %v530, %v261
        %v532 = vmul.f32 %v530, %v262
        %s533 = sld [smem:[#allocation7 + $0x29]]
        %v534 = vstv %s533
        %v535 = vmul.f32 %v534, %v263
        %v536 = vmul.f32 %v534, %v264
        %v537 = vadd.f32 %v531, %v535
        %v538 = vadd.f32 %v532, %v536
        %s539 = sld [smem:[#allocation7 + $0x2a]]
        %v540 = vstv %s539
        %v541 = vmul.f32 %v540, %v265
        %v542 = vmul.f32 %v540, %v266
        %v543 = vadd.f32 %v537, %v541
        %v544 = vadd.f32 %v538, %v542
        %s545 = sld [smem:[#allocation7 + $0x2b]]
        %v546 = vstv %s545
        %v547 = vmul.f32 %v546, %v267
        %v548 = vmul.f32 %v546, %v268
        %v549 = vadd.f32 %v543, %v547
        %v550 = vadd.f32 %v544, %v548
        %s551 = sld [smem:[#allocation8 + $0xa]]
        %v552 = vstv %s551
        %v553 = vadd.f32 %v549, %v552
        %v554 = vadd.f32 %v550, %v552
        %s555 = sld [smem:[#allocation7 + $0x2c]]
        %v556 = vstv %s555
        %v557 = vmul.f32 %v556, %v261
        %v558 = vmul.f32 %v556, %v262
        %s559 = sld [smem:[#allocation7 + $0x2d]]
        %v560 = vstv %s559
        %v561 = vmul.f32 %v560, %v263
        %v562 = vmul.f32 %v560, %v264
        %v563 = vadd.f32 %v557, %v561
        %v564 = vadd.f32 %v558, %v562
        %s565 = sld [smem:[#allocation7 + $0x2e]]
        %v566 = vstv %s565
        %v567 = vmul.f32 %v566, %v265
        %v568 = vmul.f32 %v566, %v266
        %v569 = vadd.f32 %v563, %v567
        %v570 = vadd.f32 %v564, %v568
        %s571 = sld [smem:[#allocation7 + $0x2f]]
        %v572 = vstv %s571
        %v573 = vmul.f32 %v572, %v267
        %v574 = vmul.f32 %v572, %v268
        %v575 = vadd.f32 %v569, %v573
        %v576 = vadd.f32 %v570, %v574
        %s577 = sld [smem:[#allocation8 + $0xb]]
        %v578 = vstv %s577
        %v579 = vadd.f32 %v575, %v578
        %v580 = vadd.f32 %v576, %v578
        %s581 = sld [smem:[#allocation7 + $0x30]]
        %v582 = vstv %s581
        %v583 = vmul.f32 %v582, %v261
        %v584 = vmul.f32 %v582, %v262
        %s585 = sld [smem:[#allocation7 + $0x31]]
        %v586 = vstv %s585
        %v587 = vmul.f32 %v586, %v263
        %v588 = vmul.f32 %v586, %v264
        %v589 = vadd.f32 %v583, %v587
        %v590 = vadd.f32 %v584, %v588
        %s591 = sld [smem:[#allocation7 + $0x32]]
        %v592 = vstv %s591
        %v593 = vmul.f32 %v592, %v265
        %v594 = vmul.f32 %v592, %v266
        %v595 = vadd.f32 %v589, %v593
        %v596 = vadd.f32 %v590, %v594
        %s597 = sld [smem:[#allocation7 + $0x33]]
        %v598 = vstv %s597
        %v599 = vmul.f32 %v598, %v267
        %v600 = vmul.f32 %v598, %v268
        %v601 = vadd.f32 %v595, %v599
        %v602 = vadd.f32 %v596, %v600
        %s603 = sld [smem:[#allocation8 + $0xc]]
        %v604 = vstv %s603
        %v605 = vadd.f32 %v601, %v604
        %v606 = vadd.f32 %v602, %v604
        %s607 = sld [smem:[#allocation7 + $0x34]]
        %v608 = vstv %s607
        %v609 = vmul.f32 %v608, %v261
        %v610 = vmul.f32 %v608, %v262
        %s611 = sld [smem:[#allocation7 + $0x35]]
        %v612 = vstv %s611
        %v613 = vmul.f32 %v612, %v263
        %v614 = vmul.f32 %v612, %v264
        %v615 = vadd.f32 %v609, %v613
        %v616 = vadd.f32 %v610, %v614
        %s617 = sld [smem:[#allocation7 + $0x36]]
        %v618 = vstv %s617
        %v619 = vmul.f32 %v618, %v265
        %v620 = vmul.f32 %v618, %v266
        %v621 = vadd.f32 %v615, %v619
        %v622 = vadd.f32 %v616, %v620
        %s623 = sld [smem:[#allocation7 + $0x37]]
        %v624 = vstv %s623
        %v625 = vmul.f32 %v624, %v267
        %v626 = vmul.f32 %v624, %v268
        %v627 = vadd.f32 %v621, %v625
        %v628 = vadd.f32 %v622, %v626
        %s629 = sld [smem:[#allocation8 + $0xd]]
        %v630 = vstv %s629
        %v631 = vadd.f32 %v627, %v630
        %v632 = vadd.f32 %v628, %v630
        %s633 = sld [smem:[#allocation7 + $0x38]]
        %v634 = vstv %s633
        %v635 = vmul.f32 %v634, %v261
        %v636 = vmul.f32 %v634, %v262
        %s637 = sld [smem:[#allocation7 + $0x39]]
        %v638 = vstv %s637
        %v639 = vmul.f32 %v638, %v263
        %v640 = vmul.f32 %v638, %v264
        %v641 = vadd.f32 %v635, %v639
        %v642 = vadd.f32 %v636, %v640
        %s643 = sld [smem:[#allocation7 + $0x3a]]
        %v644 = vstv %s643
        %v645 = vmul.f32 %v644, %v265
        %v646 = vmul.f32 %v644, %v266
        %v647 = vadd.f32 %v641, %v645
        %v648 = vadd.f32 %v642, %v646
        %s649 = sld [smem:[#allocation7 + $0x3b]]
        %v650 = vstv %s649
        %v651 = vmul.f32 %v650, %v267
        %v652 = vmul.f32 %v650, %v268
        %v653 = vadd.f32 %v647, %v651
        %v654 = vadd.f32 %v648, %v652
        %s655 = sld [smem:[#allocation8 + $0xe]]
        %v656 = vstv %s655
        %v657 = vadd.f32 %v653, %v656
        %v658 = vadd.f32 %v654, %v656
        %s659 = sld [smem:[#allocation7 + $0x3c]]
        %v660 = vstv %s659
        %v661 = vmul.f32 %v660, %v261
        %v662 = vmul.f32 %v660, %v262
        %s663 = sld [smem:[#allocation7 + $0x3d]]
        %v664 = vstv %s663
        %v665 = vmul.f32 %v664, %v263
        %v666 = vmul.f32 %v664, %v264
        %v667 = vadd.f32 %v661, %v665
        %v668 = vadd.f32 %v662, %v666
        %s669 = sld [smem:[#allocation7 + $0x3e]]
        %v670 = vstv %s669
        %v671 = vmul.f32 %v670, %v265
        %v672 = vmul.f32 %v670, %v266
        %v673 = vadd.f32 %v667, %v671
        %v674 = vadd.f32 %v668, %v672
        %s675 = sld [smem:[#allocation7 + $0x3f]]
        %v676 = vstv %s675
        %v677 = vmul.f32 %v676, %v267
        %v678 = vmul.f32 %v676, %v268
        %v679 = vadd.f32 %v673, %v677
        %v680 = vadd.f32 %v674, %v678
        %s681 = sld [smem:[#allocation8 + $0xf]]
        %v682 = vstv %s681
        %v683 = vadd.f32 %v679, %v682
        %v684 = vadd.f32 %v680, %v682
        %s685 = sld [smem:[#allocation7 + $0x40]]
        %v686 = vstv %s685
        %v687 = vmul.f32 %v686, %v261
        %v688 = vmul.f32 %v686, %v262
        %s689 = sld [smem:[#allocation7 + $0x41]]
        %v690 = vstv %s689
        %v691 = vmul.f32 %v690, %v263
        %v692 = vmul.f32 %v690, %v264
        %v693 = vadd.f32 %v687, %v691
        %v694 = vadd.f32 %v688, %v692
        %s695 = sld [smem:[#allocation7 + $0x42]]
        %v696 = vstv %s695
        %v697 = vmul.f32 %v696, %v265
        %v698 = vmul.f32 %v696, %v266
        %v699 = vadd.f32 %v693, %v697
        %v700 = vadd.f32 %v694, %v698
        %s701 = sld [smem:[#allocation7 + $0x43]]
        %v702 = vstv %s701
        %v703 = vmul.f32 %v702, %v267
        %v704 = vmul.f32 %v702, %v268
        %v705 = vadd.f32 %v699, %v703
        %v706 = vadd.f32 %v700, %v704
        %s707 = sld [smem:[#allocation8 + $0x10]]
        %v708 = vstv %s707
        %v709 = vadd.f32 %v705, %v708
        %v710 = vadd.f32 %v706, %v708
        %s711 = sld [smem:[#allocation7 + $0x44]]
        %v712 = vstv %s711
        %v713 = vmul.f32 %v712, %v261
        %v714 = vmul.f32 %v712, %v262
        %s715 = sld [smem:[#allocation7 + $0x45]]
        %v716 = vstv %s715
        %v717 = vmul.f32 %v716, %v263
        %v718 = vmul.f32 %v716, %v264
        %v719 = vadd.f32 %v713, %v717
        %v720 = vadd.f32 %v714, %v718
        %s721 = sld [smem:[#allocation7 + $0x46]]
        %v722 = vstv %s721
        %v723 = vmul.f32 %v722, %v265
        %v724 = vmul.f32 %v722, %v266
        %v725 = vadd.f32 %v719, %v723
        %v726 = vadd.f32 %v720, %v724
        %s727 = sld [smem:[#allocation7 + $0x47]]
        %v728 = vstv %s727
        %v729 = vmul.f32 %v728, %v267
        %v730 = vmul.f32 %v728, %v268
        %v731 = vadd.f32 %v725, %v729
        %v732 = vadd.f32 %v726, %v730
        %s733 = sld [smem:[#allocation8 + $0x11]]
        %v734 = vstv %s733
        %v735 = vadd.f32 %v731, %v734
        %v736 = vadd.f32 %v732, %v734
        %s737 = sld [smem:[#allocation7 + $0x48]]
        %v738 = vstv %s737
        %v739 = vmul.f32 %v738, %v261
        %v740 = vmul.f32 %v738, %v262
        %s741 = sld [smem:[#allocation7 + $0x49]]
        %v742 = vstv %s741
        %v743 = vmul.f32 %v742, %v263
        %v744 = vmul.f32 %v742, %v264
        %v745 = vadd.f32 %v739, %v743
        %v746 = vadd.f32 %v740, %v744
        %s747 = sld [smem:[#allocation7 + $0x4a]]
        %v748 = vstv %s747
        %v749 = vmul.f32 %v748, %v265
        %v750 = vmul.f32 %v748, %v266
        %v751 = vadd.f32 %v745, %v749
        %v752 = vadd.f32 %v746, %v750
        %s753 = sld [smem:[#allocation7 + $0x4b]]
        %v754 = vstv %s753
        %v755 = vmul.f32 %v754, %v267
        %v756 = vmul.f32 %v754, %v268
        %v757 = vadd.f32 %v751, %v755
        %v758 = vadd.f32 %v752, %v756
        %s759 = sld [smem:[#allocation8 + $0x12]]
        %v760 = vstv %s759
        %v761 = vadd.f32 %v757, %v760
        %v762 = vadd.f32 %v758, %v760
        %s763 = sld [smem:[#allocation7 + $0x4c]]
        %v764 = vstv %s763
        %v765 = vmul.f32 %v764, %v261
        %v766 = vmul.f32 %v764, %v262
        %s767 = sld [smem:[#allocation7 + $0x4d]]
        %v768 = vstv %s767
        %v769 = vmul.f32 %v768, %v263
        %v770 = vmul.f32 %v768, %v264
        %v771 = vadd.f32 %v765, %v769
        %v772 = vadd.f32 %v766, %v770
        %s773 = sld [smem:[#allocation7 + $0x4e]]
        %v774 = vstv %s773
        %v775 = vmul.f32 %v774, %v265
        %v776 = vmul.f32 %v774, %v266
        %v777 = vadd.f32 %v771, %v775
        %v778 = vadd.f32 %v772, %v776
        %s779 = sld [smem:[#allocation7 + $0x4f]]
        %v780 = vstv %s779
        %v781 = vmul.f32 %v780, %v267
        %v782 = vmul.f32 %v780, %v268
        %v783 = vadd.f32 %v777, %v781
        %v784 = vadd.f32 %v778, %v782
        %s785 = sld [smem:[#allocation8 + $0x13]]
        %v786 = vstv %s785
        %v787 = vadd.f32 %v783, %v786
        %v788 = vadd.f32 %v784, %v786
        %v791 = vcombine.high %v293, %v293
        %v793 = vunpack.c.l.s4 1966171168
        %v794 = vunpack.c.0.s8 %v793
        %v795 = vlaneseq
        %v796 = vshrl.u32 %v795, 7
        %v797 = vsub.s32 %v794, %v796
        %v798 = vrot.slane %v293, %v797
        %v800 = vunpack.c.l.s4 1966171168
        %v801 = vunpack.c.0.s8 %v800
        %v802 = vlaneseq
        %v803 = vshrl.u32 %v802, 7
        %v804 = vsub.s32 %v801, %v803
        %v805 = vrot.slane %v791, %v804
        %v806 = vcombine.high %v798, %v798
        %v807 = vcombine.high %v805, %v805
        %v809 = vunpack.c.l.s4 1966171168
        %v810 = vunpack.c.0.s8 %v809
        %v811 = vlaneseq
        %v812 = vshrl.u32 %v811, 7
        %v813 = vsub.s32 %v810, %v812
        %v814 = vrot.slane %v798, %v813
        %v816 = vunpack.c.l.s4 1966171168
        %v817 = vunpack.c.0.s8 %v816
        %v818 = vlaneseq
        %v819 = vshrl.u32 %v818, 7
        %v820 = vsub.s32 %v817, %v819
        %v821 = vrot.slane %v805, %v820
        %v823 = vunpack.c.l.s4 1966171168
        %v824 = vunpack.c.0.s8 %v823
        %v825 = vlaneseq
        %v826 = vshrl.u32 %v825, 7
        %v827 = vsub.s32 %v824, %v826
        %v828 = vrot.slane %v806, %v827
        %v830 = vunpack.c.l.s4 1966171168
        %v831 = vunpack.c.0.s8 %v830
        %v832 = vlaneseq
        %v833 = vshrl.u32 %v832, 7
        %v834 = vsub.s32 %v831, %v833
        %v835 = vrot.slane %v807, %v834
        %v836 = vcombine.high %v814, %v814
        %v837 = vcombine.high %v821, %v821
        %v838 = vcombine.high %v828, %v828
        %v839 = vcombine.high %v835, %v835
        %v840 = vcombine.high %v294, %v294
        %v842 = vunpack.c.l.s4 1966171168
        %v843 = vunpack.c.0.s8 %v842
        %v844 = vlaneseq
        %v845 = vshrl.u32 %v844, 7
        %v846 = vsub.s32 %v843, %v845
        %v847 = vrot.slane %v294, %v846
        %v849 = vunpack.c.l.s4 1966171168
        %v850 = vunpack.c.0.s8 %v849
        %v851 = vlaneseq
        %v852 = vshrl.u32 %v851, 7
        %v853 = vsub.s32 %v850, %v852
        %v854 = vrot.slane %v840, %v853
        %v855 = vcombine.high %v847, %v847
        %v856 = vcombine.high %v854, %v854
        %v858 = vunpack.c.l.s4 1966171168
        %v859 = vunpack.c.0.s8 %v858
        %v860 = vlaneseq
        %v861 = vshrl.u32 %v860, 7
        %v862 = vsub.s32 %v859, %v861
        %v863 = vrot.slane %v847, %v862
        %v865 = vunpack.c.l.s4 1966171168
        %v866 = vunpack.c.0.s8 %v865
        %v867 = vlaneseq
        %v868 = vshrl.u32 %v867, 7
        %v869 = vsub.s32 %v866, %v868
        %v870 = vrot.slane %v854, %v869
        %v872 = vunpack.c.l.s4 1966171168
        %v873 = vunpack.c.0.s8 %v872
        %v874 = vlaneseq
        %v875 = vshrl.u32 %v874, 7
        %v876 = vsub.s32 %v873, %v875
        %v877 = vrot.slane %v855, %v876
        %v879 = vunpack.c.l.s4 1966171168
        %v880 = vunpack.c.0.s8 %v879
        %v881 = vlaneseq
        %v882 = vshrl.u32 %v881, 7
        %v883 = vsub.s32 %v880, %v882
        %v884 = vrot.slane %v856, %v883
        %v885 = vcombine.high %v863, %v863
        %v886 = vcombine.high %v870, %v870
        %v887 = vcombine.high %v877, %v877
        %v888 = vcombine.high %v884, %v884
        %v889 = vlaneseq
        %v890 = vshrl.u32 %v889, 7
        %v891 = vsub.s32 0, %v890
        %v892 = vrot.slane %v814, %v891
        %v893 = vlaneseq
        %v894 = vshrl.u32 %v893, 7
        %v895 = vsub.s32 0, %v894
        %v896 = vrot.slane %v828, %v895
        %v897 = vlaneseq
        %v898 = vshrl.u32 %v897, 7
        %v899 = vsub.s32 0, %v898
        %v900 = vrot.slane %v836, %v899
        %v901 = vlaneseq
        %v902 = vshrl.u32 %v901, 7
        %v903 = vsub.s32 0, %v902
        %v904 = vrot.slane %v838, %v903
        %v905 = vlaneseq
        %v906 = vshrl.u32 %v905, 7
        %v907 = vsub.s32 0, %v906
        %v908 = vrot.slane %v821, %v907
        %v909 = vlaneseq
        %v910 = vshrl.u32 %v909, 7
        %v911 = vsub.s32 0, %v910
        %v912 = vrot.slane %v835, %v911
        %v913 = vlaneseq
        %v914 = vshrl.u32 %v913, 7
        %v915 = vsub.s32 0, %v914
        %v916 = vrot.slane %v837, %v915
        %v917 = vlaneseq
        %v918 = vshrl.u32 %v917, 7
        %v919 = vsub.s32 0, %v918
        %v920 = vrot.slane %v839, %v919
        %v921 = vlaneseq
        %v922 = vshrl.u32 %v921, 7
        %v923 = vsub.s32 0, %v922
        %v924 = vrot.slane %v863, %v923
        %v925 = vlaneseq
        %v926 = vshrl.u32 %v925, 7
        %v927 = vsub.s32 0, %v926
        %v928 = vrot.slane %v877, %v927
        %v929 = vlaneseq
        %v930 = vshrl.u32 %v929, 7
        %v931 = vsub.s32 0, %v930
        %v932 = vrot.slane %v885, %v931
        %v933 = vlaneseq
        %v934 = vshrl.u32 %v933, 7
        %v935 = vsub.s32 0, %v934
        %v936 = vrot.slane %v887, %v935
        %v937 = vlaneseq
        %v938 = vshrl.u32 %v937, 7
        %v939 = vsub.s32 0, %v938
        %v940 = vrot.slane %v870, %v939
        %v941 = vlaneseq
        %v942 = vshrl.u32 %v941, 7
        %v943 = vsub.s32 0, %v942
        %v944 = vrot.slane %v884, %v943
        %v945 = vlaneseq
        %v946 = vshrl.u32 %v945, 7
        %v947 = vsub.s32 0, %v946
        %v948 = vrot.slane %v886, %v947
        %v949 = vlaneseq
        %v950 = vshrl.u32 %v949, 7
        %v951 = vsub.s32 0, %v950
        %v952 = vrot.slane %v888, %v951
        %v969 = vmul.f32 %v892, %v501
        %v970 = vmul.f32 %v892, %v502
        %v971 = vmul.f32 %v896, %v501
        %v972 = vmul.f32 %v896, %v502
        %v973 = vmul.f32 %v900, %v501
        %v974 = vmul.f32 %v900, %v502
        %v975 = vmul.f32 %v904, %v501
        %v976 = vmul.f32 %v904, %v502
        %v977 = vmul.f32 %v908, %v501
        %v978 = vmul.f32 %v908, %v502
        %v979 = vmul.f32 %v912, %v501
        %v980 = vmul.f32 %v912, %v502
        %v981 = vmul.f32 %v916, %v501
        %v982 = vmul.f32 %v916, %v502
        %v983 = vmul.f32 %v920, %v501
        %v984 = vmul.f32 %v920, %v502
        %v985 = vmul.f32 %v924, %v501
        %v986 = vmul.f32 %v924, %v502
        %v987 = vmul.f32 %v928, %v501
        %v988 = vmul.f32 %v928, %v502
        %v989 = vmul.f32 %v932, %v501
        %v990 = vmul.f32 %v932, %v502
        %v991 = vmul.f32 %v936, %v501
        %v992 = vmul.f32 %v936, %v502
        %v993 = vmul.f32 %v940, %v501
        %v994 = vmul.f32 %v940, %v502
        %v995 = vmul.f32 %v944, %v501
        %v996 = vmul.f32 %v944, %v502
        %v997 = vmul.f32 %v948, %v501
        %v998 = vmul.f32 %v948, %v502
        %v999 = vmul.f32 %v952, %v501
        %v1000 = vmul.f32 %v952, %v502
        %v1003 = vcombine.high %v319, %v319
        %v1005 = vunpack.c.l.s4 1966171168
        %v1006 = vunpack.c.0.s8 %v1005
        %v1007 = vlaneseq
        %v1008 = vshrl.u32 %v1007, 7
        %v1009 = vsub.s32 %v1006, %v1008
        %v1010 = vrot.slane %v319, %v1009
        %v1012 = vunpack.c.l.s4 1966171168
        %v1013 = vunpack.c.0.s8 %v1012
        %v1014 = vlaneseq
        %v1015 = vshrl.u32 %v1014, 7
        %v1016 = vsub.s32 %v1013, %v1015
        %v1017 = vrot.slane %v1003, %v1016
        %v1018 = vcombine.high %v1010, %v1010
        %v1019 = vcombine.high %v1017, %v1017
        %v1021 = vunpack.c.l.s4 1966171168
        %v1022 = vunpack.c.0.s8 %v1021
        %v1023 = vlaneseq
        %v1024 = vshrl.u32 %v1023, 7
        %v1025 = vsub.s32 %v1022, %v1024
        %v1026 = vrot.slane %v1010, %v1025
        %v1028 = vunpack.c.l.s4 1966171168
        %v1029 = vunpack.c.0.s8 %v1028
        %v1030 = vlaneseq
        %v1031 = vshrl.u32 %v1030, 7
        %v1032 = vsub.s32 %v1029, %v1031
        %v1033 = vrot.slane %v1017, %v1032
        %v1035 = vunpack.c.l.s4 1966171168
        %v1036 = vunpack.c.0.s8 %v1035
        %v1037 = vlaneseq
        %v1038 = vshrl.u32 %v1037, 7
        %v1039 = vsub.s32 %v1036, %v1038
        %v1040 = vrot.slane %v1018, %v1039
        %v1042 = vunpack.c.l.s4 1966171168
        %v1043 = vunpack.c.0.s8 %v1042
        %v1044 = vlaneseq
        %v1045 = vshrl.u32 %v1044, 7
        %v1046 = vsub.s32 %v1043, %v1045
        %v1047 = vrot.slane %v1019, %v1046
        %v1048 = vcombine.high %v1026, %v1026
        %v1049 = vcombine.high %v1033, %v1033
        %v1050 = vcombine.high %v1040, %v1040
        %v1051 = vcombine.high %v1047, %v1047
        %v1052 = vcombine.high %v320, %v320
        %v1054 = vunpack.c.l.s4 1966171168
        %v1055 = vunpack.c.0.s8 %v1054
        %v1056 = vlaneseq
        %v1057 = vshrl.u32 %v1056, 7
        %v1058 = vsub.s32 %v1055, %v1057
        %v1059 = vrot.slane %v320, %v1058
        %v1061 = vunpack.c.l.s4 1966171168
        %v1062 = vunpack.c.0.s8 %v1061
        %v1063 = vlaneseq
        %v1064 = vshrl.u32 %v1063, 7
        %v1065 = vsub.s32 %v1062, %v1064
        %v1066 = vrot.slane %v1052, %v1065
        %v1067 = vcombine.high %v1059, %v1059
        %v1068 = vcombine.high %v1066, %v1066
        %v1070 = vunpack.c.l.s4 1966171168
        %v1071 = vunpack.c.0.s8 %v1070
        %v1072 = vlaneseq
        %v1073 = vshrl.u32 %v1072, 7
        %v1074 = vsub.s32 %v1071, %v1073
        %v1075 = vrot.slane %v1059, %v1074
        %v1077 = vunpack.c.l.s4 1966171168
        %v1078 = vunpack.c.0.s8 %v1077
        %v1079 = vlaneseq
        %v1080 = vshrl.u32 %v1079, 7
        %v1081 = vsub.s32 %v1078, %v1080
        %v1082 = vrot.slane %v1066, %v1081
        %v1084 = vunpack.c.l.s4 1966171168
        %v1085 = vunpack.c.0.s8 %v1084
        %v1086 = vlaneseq
        %v1087 = vshrl.u32 %v1086, 7
        %v1088 = vsub.s32 %v1085, %v1087
        %v1089 = vrot.slane %v1067, %v1088
        %v1091 = vunpack.c.l.s4 1966171168
        %v1092 = vunpack.c.0.s8 %v1091
        %v1093 = vlaneseq
        %v1094 = vshrl.u32 %v1093, 7
        %v1095 = vsub.s32 %v1092, %v1094
        %v1096 = vrot.slane %v1068, %v1095
        %v1097 = vcombine.high %v1075, %v1075
        %v1098 = vcombine.high %v1082, %v1082
        %v1099 = vcombine.high %v1089, %v1089
        %v1100 = vcombine.high %v1096, %v1096
        %v1101 = vlaneseq
        %v1102 = vshrl.u32 %v1101, 7
        %v1103 = vsub.s32 0, %v1102
        %v1104 = vrot.slane %v1026, %v1103
        %v1105 = vlaneseq
        %v1106 = vshrl.u32 %v1105, 7
        %v1107 = vsub.s32 0, %v1106
        %v1108 = vrot.slane %v1040, %v1107
        %v1109 = vlaneseq
        %v1110 = vshrl.u32 %v1109, 7
        %v1111 = vsub.s32 0, %v1110
        %v1112 = vrot.slane %v1048, %v1111
        %v1113 = vlaneseq
        %v1114 = vshrl.u32 %v1113, 7
        %v1115 = vsub.s32 0, %v1114
        %v1116 = vrot.slane %v1050, %v1115
        %v1117 = vlaneseq
        %v1118 = vshrl.u32 %v1117, 7
        %v1119 = vsub.s32 0, %v1118
        %v1120 = vrot.slane %v1033, %v1119
        %v1121 = vlaneseq
        %v1122 = vshrl.u32 %v1121, 7
        %v1123 = vsub.s32 0, %v1122
        %v1124 = vrot.slane %v1047, %v1123
        %v1125 = vlaneseq
        %v1126 = vshrl.u32 %v1125, 7
        %v1127 = vsub.s32 0, %v1126
        %v1128 = vrot.slane %v1049, %v1127
        %v1129 = vlaneseq
        %v1130 = vshrl.u32 %v1129, 7
        %v1131 = vsub.s32 0, %v1130
        %v1132 = vrot.slane %v1051, %v1131
        %v1133 = vlaneseq
        %v1134 = vshrl.u32 %v1133, 7
        %v1135 = vsub.s32 0, %v1134
        %v1136 = vrot.slane %v1075, %v1135
        %v1137 = vlaneseq
        %v1138 = vshrl.u32 %v1137, 7
        %v1139 = vsub.s32 0, %v1138
        %v1140 = vrot.slane %v1089, %v1139
        %v1141 = vlaneseq
        %v1142 = vshrl.u32 %v1141, 7
        %v1143 = vsub.s32 0, %v1142
        %v1144 = vrot.slane %v1097, %v1143
        %v1145 = vlaneseq
        %v1146 = vshrl.u32 %v1145, 7
        %v1147 = vsub.s32 0, %v1146
        %v1148 = vrot.slane %v1099, %v1147
        %v1149 = vlaneseq
        %v1150 = vshrl.u32 %v1149, 7
        %v1151 = vsub.s32 0, %v1150
        %v1152 = vrot.slane %v1082, %v1151
        %v1153 = vlaneseq
        %v1154 = vshrl.u32 %v1153, 7
        %v1155 = vsub.s32 0, %v1154
        %v1156 = vrot.slane %v1096, %v1155
        %v1157 = vlaneseq
        %v1158 = vshrl.u32 %v1157, 7
        %v1159 = vsub.s32 0, %v1158
        %v1160 = vrot.slane %v1098, %v1159
        %v1161 = vlaneseq
        %v1162 = vshrl.u32 %v1161, 7
        %v1163 = vsub.s32 0, %v1162
        %v1164 = vrot.slane %v1100, %v1163
        %v1181 = vmul.f32 %v1104, %v527
        %v1182 = vmul.f32 %v1104, %v528
        %v1183 = vmul.f32 %v1108, %v527
        %v1184 = vmul.f32 %v1108, %v528
        %v1185 = vmul.f32 %v1112, %v527
        %v1186 = vmul.f32 %v1112, %v528
        %v1187 = vmul.f32 %v1116, %v527
        %v1188 = vmul.f32 %v1116, %v528
        %v1189 = vmul.f32 %v1120, %v527
        %v1190 = vmul.f32 %v1120, %v528
        %v1191 = vmul.f32 %v1124, %v527
        %v1192 = vmul.f32 %v1124, %v528
        %v1193 = vmul.f32 %v1128, %v527
        %v1194 = vmul.f32 %v1128, %v528
        %v1195 = vmul.f32 %v1132, %v527
        %v1196 = vmul.f32 %v1132, %v528
        %v1197 = vmul.f32 %v1136, %v527
        %v1198 = vmul.f32 %v1136, %v528
        %v1199 = vmul.f32 %v1140, %v527
        %v1200 = vmul.f32 %v1140, %v528
        %v1201 = vmul.f32 %v1144, %v527
        %v1202 = vmul.f32 %v1144, %v528
        %v1203 = vmul.f32 %v1148, %v527
        %v1204 = vmul.f32 %v1148, %v528
        %v1205 = vmul.f32 %v1152, %v527
        %v1206 = vmul.f32 %v1152, %v528
        %v1207 = vmul.f32 %v1156, %v527
        %v1208 = vmul.f32 %v1156, %v528
        %v1209 = vmul.f32 %v1160, %v527
        %v1210 = vmul.f32 %v1160, %v528
        %v1211 = vmul.f32 %v1164, %v527
        %v1212 = vmul.f32 %v1164, %v528
        %v1213 = vadd.f32 %v969, %v1181
        %v1214 = vadd.f32 %v970, %v1182
        %v1215 = vadd.f32 %v971, %v1183
        %v1216 = vadd.f32 %v972, %v1184
        %v1217 = vadd.f32 %v973, %v1185
        %v1218 = vadd.f32 %v974, %v1186
        %v1219 = vadd.f32 %v975, %v1187
        %v1220 = vadd.f32 %v976, %v1188
        %v1221 = vadd.f32 %v977, %v1189
        %v1222 = vadd.f32 %v978, %v1190
        %v1223 = vadd.f32 %v979, %v1191
        %v1224 = vadd.f32 %v980, %v1192
        %v1225 = vadd.f32 %v981, %v1193
        %v1226 = vadd.f32 %v982, %v1194
        %v1227 = vadd.f32 %v983, %v1195
        %v1228 = vadd.f32 %v984, %v1196
        %v1229 = vadd.f32 %v985, %v1197
        %v1230 = vadd.f32 %v986, %v1198
        %v1231 = vadd.f32 %v987, %v1199
        %v1232 = vadd.f32 %v988, %v1200
        %v1233 = vadd.f32 %v989, %v1201
        %v1234 = vadd.f32 %v990, %v1202
        %v1235 = vadd.f32 %v991, %v1203
        %v1236 = vadd.f32 %v992, %v1204
        %v1237 = vadd.f32 %v993, %v1205
        %v1238 = vadd.f32 %v994, %v1206
        %v1239 = vadd.f32 %v995, %v1207
        %v1240 = vadd.f32 %v996, %v1208
        %v1241 = vadd.f32 %v997, %v1209
        %v1242 = vadd.f32 %v998, %v1210
        %v1243 = vadd.f32 %v999, %v1211
        %v1244 = vadd.f32 %v1000, %v1212
        %v1247 = vcombine.high %v345, %v345
        %v1249 = vunpack.c.l.s4 1966171168
        %v1250 = vunpack.c.0.s8 %v1249
        %v1251 = vlaneseq
        %v1252 = vshrl.u32 %v1251, 7
        %v1253 = vsub.s32 %v1250, %v1252
        %v1254 = vrot.slane %v345, %v1253
        %v1256 = vunpack.c.l.s4 1966171168
        %v1257 = vunpack.c.0.s8 %v1256
        %v1258 = vlaneseq
        %v1259 = vshrl.u32 %v1258, 7
        %v1260 = vsub.s32 %v1257, %v1259
        %v1261 = vrot.slane %v1247, %v1260
        %v1262 = vcombine.high %v1254, %v1254
        %v1263 = vcombine.high %v1261, %v1261
        %v1265 = vunpack.c.l.s4 1966171168
        %v1266 = vunpack.c.0.s8 %v1265
        %v1267 = vlaneseq
        %v1268 = vshrl.u32 %v1267, 7
        %v1269 = vsub.s32 %v1266, %v1268
        %v1270 = vrot.slane %v1254, %v1269
        %v1272 = vunpack.c.l.s4 1966171168
        %v1273 = vunpack.c.0.s8 %v1272
        %v1274 = vlaneseq
        %v1275 = vshrl.u32 %v1274, 7
        %v1276 = vsub.s32 %v1273, %v1275
        %v1277 = vrot.slane %v1261, %v1276
        %v1279 = vunpack.c.l.s4 1966171168
        %v1280 = vunpack.c.0.s8 %v1279
        %v1281 = vlaneseq
        %v1282 = vshrl.u32 %v1281, 7
        %v1283 = vsub.s32 %v1280, %v1282
        %v1284 = vrot.slane %v1262, %v1283
        %v1286 = vunpack.c.l.s4 1966171168
        %v1287 = vunpack.c.0.s8 %v1286
        %v1288 = vlaneseq
        %v1289 = vshrl.u32 %v1288, 7
        %v1290 = vsub.s32 %v1287, %v1289
        %v1291 = vrot.slane %v1263, %v1290
        %v1292 = vcombine.high %v1270, %v1270
        %v1293 = vcombine.high %v1277, %v1277
        %v1294 = vcombine.high %v1284, %v1284
        %v1295 = vcombine.high %v1291, %v1291
        %v1296 = vcombine.high %v346, %v346
        %v1298 = vunpack.c.l.s4 1966171168
        %v1299 = vunpack.c.0.s8 %v1298
        %v1300 = vlaneseq
        %v1301 = vshrl.u32 %v1300, 7
        %v1302 = vsub.s32 %v1299, %v1301
        %v1303 = vrot.slane %v346, %v1302
        %v1305 = vunpack.c.l.s4 1966171168
        %v1306 = vunpack.c.0.s8 %v1305
        %v1307 = vlaneseq
        %v1308 = vshrl.u32 %v1307, 7
        %v1309 = vsub.s32 %v1306, %v1308
        %v1310 = vrot.slane %v1296, %v1309
        %v1311 = vcombine.high %v1303, %v1303
        %v1312 = vcombine.high %v1310, %v1310
        %v1314 = vunpack.c.l.s4 1966171168
        %v1315 = vunpack.c.0.s8 %v1314
        %v1316 = vlaneseq
        %v1317 = vshrl.u32 %v1316, 7
        %v1318 = vsub.s32 %v1315, %v1317
        %v1319 = vrot.slane %v1303, %v1318
        %v1321 = vunpack.c.l.s4 1966171168
        %v1322 = vunpack.c.0.s8 %v1321
        %v1323 = vlaneseq
        %v1324 = vshrl.u32 %v1323, 7
        %v1325 = vsub.s32 %v1322, %v1324
        %v1326 = vrot.slane %v1310, %v1325
        %v1328 = vunpack.c.l.s4 1966171168
        %v1329 = vunpack.c.0.s8 %v1328
        %v1330 = vlaneseq
        %v1331 = vshrl.u32 %v1330, 7
        %v1332 = vsub.s32 %v1329, %v1331
        %v1333 = vrot.slane %v1311, %v1332
        %v1335 = vunpack.c.l.s4 1966171168
        %v1336 = vunpack.c.0.s8 %v1335
        %v1337 = vlaneseq
        %v1338 = vshrl.u32 %v1337, 7
        %v1339 = vsub.s32 %v1336, %v1338
        %v1340 = vrot.slane %v1312, %v1339
        %v1341 = vcombine.high %v1319, %v1319
        %v1342 = vcombine.high %v1326, %v1326
        %v1343 = vcombine.high %v1333, %v1333
        %v1344 = vcombine.high %v1340, %v1340
        %v1345 = vlaneseq
        %v1346 = vshrl.u32 %v1345, 7
        %v1347 = vsub.s32 0, %v1346
        %v1348 = vrot.slane %v1270, %v1347
        %v1349 = vlaneseq
        %v1350 = vshrl.u32 %v1349, 7
        %v1351 = vsub.s32 0, %v1350
        %v1352 = vrot.slane %v1284, %v1351
        %v1353 = vlaneseq
        %v1354 = vshrl.u32 %v1353, 7
        %v1355 = vsub.s32 0, %v1354
        %v1356 = vrot.slane %v1292, %v1355
        %v1357 = vlaneseq
        %v1358 = vshrl.u32 %v1357, 7
        %v1359 = vsub.s32 0, %v1358
        %v1360 = vrot.slane %v1294, %v1359
        %v1361 = vlaneseq
        %v1362 = vshrl.u32 %v1361, 7
        %v1363 = vsub.s32 0, %v1362
        %v1364 = vrot.slane %v1277, %v1363
        %v1365 = vlaneseq
        %v1366 = vshrl.u32 %v1365, 7
        %v1367 = vsub.s32 0, %v1366
        %v1368 = vrot.slane %v1291, %v1367
        %v1369 = vlaneseq
        %v1370 = vshrl.u32 %v1369, 7
        %v1371 = vsub.s32 0, %v1370
        %v1372 = vrot.slane %v1293, %v1371
        %v1373 = vlaneseq
        %v1374 = vshrl.u32 %v1373, 7
        %v1375 = vsub.s32 0, %v1374
        %v1376 = vrot.slane %v1295, %v1375
        %v1377 = vlaneseq
        %v1378 = vshrl.u32 %v1377, 7
        %v1379 = vsub.s32 0, %v1378
        %v1380 = vrot.slane %v1319, %v1379
        %v1381 = vlaneseq
        %v1382 = vshrl.u32 %v1381, 7
        %v1383 = vsub.s32 0, %v1382
        %v1384 = vrot.slane %v1333, %v1383
        %v1385 = vlaneseq
        %v1386 = vshrl.u32 %v1385, 7
        %v1387 = vsub.s32 0, %v1386
        %v1388 = vrot.slane %v1341, %v1387
        %v1389 = vlaneseq
        %v1390 = vshrl.u32 %v1389, 7
        %v1391 = vsub.s32 0, %v1390
        %v1392 = vrot.slane %v1343, %v1391
        %v1393 = vlaneseq
        %v1394 = vshrl.u32 %v1393, 7
        %v1395 = vsub.s32 0, %v1394
        %v1396 = vrot.slane %v1326, %v1395
        %v1397 = vlaneseq
        %v1398 = vshrl.u32 %v1397, 7
        %v1399 = vsub.s32 0, %v1398
        %v1400 = vrot.slane %v1340, %v1399
        %v1401 = vlaneseq
        %v1402 = vshrl.u32 %v1401, 7
        %v1403 = vsub.s32 0, %v1402
        %v1404 = vrot.slane %v1342, %v1403
        %v1405 = vlaneseq
        %v1406 = vshrl.u32 %v1405, 7
        %v1407 = vsub.s32 0, %v1406
        %v1408 = vrot.slane %v1344, %v1407
        %v1425 = vmul.f32 %v1348, %v553
        %v1426 = vmul.f32 %v1348, %v554
        %v1427 = vmul.f32 %v1352, %v553
        %v1428 = vmul.f32 %v1352, %v554
        %v1429 = vmul.f32 %v1356, %v553
        %v1430 = vmul.f32 %v1356, %v554
        %v1431 = vmul.f32 %v1360, %v553
        %v1432 = vmul.f32 %v1360, %v554
        %v1433 = vmul.f32 %v1364, %v553
        %v1434 = vmul.f32 %v1364, %v554
        %v1435 = vmul.f32 %v1368, %v553
        %v1436 = vmul.f32 %v1368, %v554
        %v1437 = vmul.f32 %v1372, %v553
        %v1438 = vmul.f32 %v1372, %v554
        %v1439 = vmul.f32 %v1376, %v553
        %v1440 = vmul.f32 %v1376, %v554
        %v1441 = vmul.f32 %v1380, %v553
        %v1442 = vmul.f32 %v1380, %v554
        %v1443 = vmul.f32 %v1384, %v553
        %v1444 = vmul.f32 %v1384, %v554
        %v1445 = vmul.f32 %v1388, %v553
        %v1446 = vmul.f32 %v1388, %v554
        %v1447 = vmul.f32 %v1392, %v553
        %v1448 = vmul.f32 %v1392, %v554
        %v1449 = vmul.f32 %v1396, %v553
        %v1450 = vmul.f32 %v1396, %v554
        %v1451 = vmul.f32 %v1400, %v553
        %v1452 = vmul.f32 %v1400, %v554
        %v1453 = vmul.f32 %v1404, %v553
        %v1454 = vmul.f32 %v1404, %v554
        %v1455 = vmul.f32 %v1408, %v553
        %v1456 = vmul.f32 %v1408, %v554
        %v1457 = vadd.f32 %v1213, %v1425
        %v1458 = vadd.f32 %v1214, %v1426
        %v1459 = vadd.f32 %v1215, %v1427
        %v1460 = vadd.f32 %v1216, %v1428
        %v1461 = vadd.f32 %v1217, %v1429
        %v1462 = vadd.f32 %v1218, %v1430
        %v1463 = vadd.f32 %v1219, %v1431
        %v1464 = vadd.f32 %v1220, %v1432
        %v1465 = vadd.f32 %v1221, %v1433
        %v1466 = vadd.f32 %v1222, %v1434
        %v1467 = vadd.f32 %v1223, %v1435
        %v1468 = vadd.f32 %v1224, %v1436
        %v1469 = vadd.f32 %v1225, %v1437
        %v1470 = vadd.f32 %v1226, %v1438
        %v1471 = vadd.f32 %v1227, %v1439
        %v1472 = vadd.f32 %v1228, %v1440
        %v1473 = vadd.f32 %v1229, %v1441
        %v1474 = vadd.f32 %v1230, %v1442
        %v1475 = vadd.f32 %v1231, %v1443
        %v1476 = vadd.f32 %v1232, %v1444
        %v1477 = vadd.f32 %v1233, %v1445
        %v1478 = vadd.f32 %v1234, %v1446
        %v1479 = vadd.f32 %v1235, %v1447
        %v1480 = vadd.f32 %v1236, %v1448
        %v1481 = vadd.f32 %v1237, %v1449
        %v1482 = vadd.f32 %v1238, %v1450
        %v1483 = vadd.f32 %v1239, %v1451
        %v1484 = vadd.f32 %v1240, %v1452
        %v1485 = vadd.f32 %v1241, %v1453
        %v1486 = vadd.f32 %v1242, %v1454
        %v1487 = vadd.f32 %v1243, %v1455
        %v1488 = vadd.f32 %v1244, %v1456
        %v1491 = vcombine.high %v371, %v371
        %v1493 = vunpack.c.l.s4 1966171168
        %v1494 = vunpack.c.0.s8 %v1493
        %v1495 = vlaneseq
        %v1496 = vshrl.u32 %v1495, 7
        %v1497 = vsub.s32 %v1494, %v1496
        %v1498 = vrot.slane %v371, %v1497
        %v1500 = vunpack.c.l.s4 1966171168
        %v1501 = vunpack.c.0.s8 %v1500
        %v1502 = vlaneseq
        %v1503 = vshrl.u32 %v1502, 7
        %v1504 = vsub.s32 %v1501, %v1503
        %v1505 = vrot.slane %v1491, %v1504
        %v1506 = vcombine.high %v1498, %v1498
        %v1507 = vcombine.high %v1505, %v1505
        %v1509 = vunpack.c.l.s4 1966171168
        %v1510 = vunpack.c.0.s8 %v1509
        %v1511 = vlaneseq
        %v1512 = vshrl.u32 %v1511, 7
        %v1513 = vsub.s32 %v1510, %v1512
        %v1514 = vrot.slane %v1498, %v1513
        %v1516 = vunpack.c.l.s4 1966171168
        %v1517 = vunpack.c.0.s8 %v1516
        %v1518 = vlaneseq
        %v1519 = vshrl.u32 %v1518, 7
        %v1520 = vsub.s32 %v1517, %v1519
        %v1521 = vrot.slane %v1505, %v1520
        %v1523 = vunpack.c.l.s4 1966171168
        %v1524 = vunpack.c.0.s8 %v1523
        %v1525 = vlaneseq
        %v1526 = vshrl.u32 %v1525, 7
        %v1527 = vsub.s32 %v1524, %v1526
        %v1528 = vrot.slane %v1506, %v1527
        %v1530 = vunpack.c.l.s4 1966171168
        %v1531 = vunpack.c.0.s8 %v1530
        %v1532 = vlaneseq
        %v1533 = vshrl.u32 %v1532, 7
        %v1534 = vsub.s32 %v1531, %v1533
        %v1535 = vrot.slane %v1507, %v1534
        %v1536 = vcombine.high %v1514, %v1514
        %v1537 = vcombine.high %v1521, %v1521
        %v1538 = vcombine.high %v1528, %v1528
        %v1539 = vcombine.high %v1535, %v1535
        %v1540 = vcombine.high %v372, %v372
        %v1542 = vunpack.c.l.s4 1966171168
        %v1543 = vunpack.c.0.s8 %v1542
        %v1544 = vlaneseq
        %v1545 = vshrl.u32 %v1544, 7
        %v1546 = vsub.s32 %v1543, %v1545
        %v1547 = vrot.slane %v372, %v1546
        %v1549 = vunpack.c.l.s4 1966171168
        %v1550 = vunpack.c.0.s8 %v1549
        %v1551 = vlaneseq
        %v1552 = vshrl.u32 %v1551, 7
        %v1553 = vsub.s32 %v1550, %v1552
        %v1554 = vrot.slane %v1540, %v1553
        %v1555 = vcombine.high %v1547, %v1547
        %v1556 = vcombine.high %v1554, %v1554
        %v1558 = vunpack.c.l.s4 1966171168
        %v1559 = vunpack.c.0.s8 %v1558
        %v1560 = vlaneseq
        %v1561 = vshrl.u32 %v1560, 7
        %v1562 = vsub.s32 %v1559, %v1561
        %v1563 = vrot.slane %v1547, %v1562
        %v1565 = vunpack.c.l.s4 1966171168
        %v1566 = vunpack.c.0.s8 %v1565
        %v1567 = vlaneseq
        %v1568 = vshrl.u32 %v1567, 7
        %v1569 = vsub.s32 %v1566, %v1568
        %v1570 = vrot.slane %v1554, %v1569
        %v1572 = vunpack.c.l.s4 1966171168
        %v1573 = vunpack.c.0.s8 %v1572
        %v1574 = vlaneseq
        %v1575 = vshrl.u32 %v1574, 7
        %v1576 = vsub.s32 %v1573, %v1575
        %v1577 = vrot.slane %v1555, %v1576
        %v1579 = vunpack.c.l.s4 1966171168
        %v1580 = vunpack.c.0.s8 %v1579
        %v1581 = vlaneseq
        %v1582 = vshrl.u32 %v1581, 7
        %v1583 = vsub.s32 %v1580, %v1582
        %v1584 = vrot.slane %v1556, %v1583
        %v1585 = vcombine.high %v1563, %v1563
        %v1586 = vcombine.high %v1570, %v1570
        %v1587 = vcombine.high %v1577, %v1577
        %v1588 = vcombine.high %v1584, %v1584
        %v1589 = vlaneseq
        %v1590 = vshrl.u32 %v1589, 7
        %v1591 = vsub.s32 0, %v1590
        %v1592 = vrot.slane %v1514, %v1591
        %v1593 = vlaneseq
        %v1594 = vshrl.u32 %v1593, 7
        %v1595 = vsub.s32 0, %v1594
        %v1596 = vrot.slane %v1528, %v1595
        %v1597 = vlaneseq
        %v1598 = vshrl.u32 %v1597, 7
        %v1599 = vsub.s32 0, %v1598
        %v1600 = vrot.slane %v1536, %v1599
        %v1601 = vlaneseq
        %v1602 = vshrl.u32 %v1601, 7
        %v1603 = vsub.s32 0, %v1602
        %v1604 = vrot.slane %v1538, %v1603
        %v1605 = vlaneseq
        %v1606 = vshrl.u32 %v1605, 7
        %v1607 = vsub.s32 0, %v1606
        %v1608 = vrot.slane %v1521, %v1607
        %v1609 = vlaneseq
        %v1610 = vshrl.u32 %v1609, 7
        %v1611 = vsub.s32 0, %v1610
        %v1612 = vrot.slane %v1535, %v1611
        %v1613 = vlaneseq
        %v1614 = vshrl.u32 %v1613, 7
        %v1615 = vsub.s32 0, %v1614
        %v1616 = vrot.slane %v1537, %v1615
        %v1617 = vlaneseq
        %v1618 = vshrl.u32 %v1617, 7
        %v1619 = vsub.s32 0, %v1618
        %v1620 = vrot.slane %v1539, %v1619
        %v1621 = vlaneseq
        %v1622 = vshrl.u32 %v1621, 7
        %v1623 = vsub.s32 0, %v1622
        %v1624 = vrot.slane %v1563, %v1623
        %v1625 = vlaneseq
        %v1626 = vshrl.u32 %v1625, 7
        %v1627 = vsub.s32 0, %v1626
        %v1628 = vrot.slane %v1577, %v1627
        %v1629 = vlaneseq
        %v1630 = vshrl.u32 %v1629, 7
        %v1631 = vsub.s32 0, %v1630
        %v1632 = vrot.slane %v1585, %v1631
        %v1633 = vlaneseq
        %v1634 = vshrl.u32 %v1633, 7
        %v1635 = vsub.s32 0, %v1634
        %v1636 = vrot.slane %v1587, %v1635
        %v1637 = vlaneseq
        %v1638 = vshrl.u32 %v1637, 7
        %v1639 = vsub.s32 0, %v1638
        %v1640 = vrot.slane %v1570, %v1639
        %v1641 = vlaneseq
        %v1642 = vshrl.u32 %v1641, 7
        %v1643 = vsub.s32 0, %v1642
        %v1644 = vrot.slane %v1584, %v1643
        %v1645 = vlaneseq
        %v1646 = vshrl.u32 %v1645, 7
        %v1647 = vsub.s32 0, %v1646
        %v1648 = vrot.slane %v1586, %v1647
        %v1649 = vlaneseq
        %v1650 = vshrl.u32 %v1649, 7
        %v1651 = vsub.s32 0, %v1650
        %v1652 = vrot.slane %v1588, %v1651
        %v1669 = vmul.f32 %v1592, %v579
        %v1670 = vmul.f32 %v1592, %v580
        %v1671 = vmul.f32 %v1596, %v579
        %v1672 = vmul.f32 %v1596, %v580
        %v1673 = vmul.f32 %v1600, %v579
        %v1674 = vmul.f32 %v1600, %v580
        %v1675 = vmul.f32 %v1604, %v579
        %v1676 = vmul.f32 %v1604, %v580
        %v1677 = vmul.f32 %v1608, %v579
        %v1678 = vmul.f32 %v1608, %v580
        %v1679 = vmul.f32 %v1612, %v579
        %v1680 = vmul.f32 %v1612, %v580
        %v1681 = vmul.f32 %v1616, %v579
        %v1682 = vmul.f32 %v1616, %v580
        %v1683 = vmul.f32 %v1620, %v579
        %v1684 = vmul.f32 %v1620, %v580
        %v1685 = vmul.f32 %v1624, %v579
        %v1686 = vmul.f32 %v1624, %v580
        %v1687 = vmul.f32 %v1628, %v579
        %v1688 = vmul.f32 %v1628, %v580
        %v1689 = vmul.f32 %v1632, %v579
        %v1690 = vmul.f32 %v1632, %v580
        %v1691 = vmul.f32 %v1636, %v579
        %v1692 = vmul.f32 %v1636, %v580
        %v1693 = vmul.f32 %v1640, %v579
        %v1694 = vmul.f32 %v1640, %v580
        %v1695 = vmul.f32 %v1644, %v579
        %v1696 = vmul.f32 %v1644, %v580
        %v1697 = vmul.f32 %v1648, %v579
        %v1698 = vmul.f32 %v1648, %v580
        %v1699 = vmul.f32 %v1652, %v579
        %v1700 = vmul.f32 %v1652, %v580
        %v1701 = vadd.f32 %v1457, %v1669
        %v1702 = vadd.f32 %v1458, %v1670
        %v1703 = vadd.f32 %v1459, %v1671
        %v1704 = vadd.f32 %v1460, %v1672
        %v1705 = vadd.f32 %v1461, %v1673
        %v1706 = vadd.f32 %v1462, %v1674
        %v1707 = vadd.f32 %v1463, %v1675
        %v1708 = vadd.f32 %v1464, %v1676
        %v1709 = vadd.f32 %v1465, %v1677
        %v1710 = vadd.f32 %v1466, %v1678
        %v1711 = vadd.f32 %v1467, %v1679
        %v1712 = vadd.f32 %v1468, %v1680
        %v1713 = vadd.f32 %v1469, %v1681
        %v1714 = vadd.f32 %v1470, %v1682
        %v1715 = vadd.f32 %v1471, %v1683
        %v1716 = vadd.f32 %v1472, %v1684
        %v1717 = vadd.f32 %v1473, %v1685
        %v1718 = vadd.f32 %v1474, %v1686
        %v1719 = vadd.f32 %v1475, %v1687
        %v1720 = vadd.f32 %v1476, %v1688
        %v1721 = vadd.f32 %v1477, %v1689
        %v1722 = vadd.f32 %v1478, %v1690
        %v1723 = vadd.f32 %v1479, %v1691
        %v1724 = vadd.f32 %v1480, %v1692
        %v1725 = vadd.f32 %v1481, %v1693
        %v1726 = vadd.f32 %v1482, %v1694
        %v1727 = vadd.f32 %v1483, %v1695
        %v1728 = vadd.f32 %v1484, %v1696
        %v1729 = vadd.f32 %v1485, %v1697
        %v1730 = vadd.f32 %v1486, %v1698
        %v1731 = vadd.f32 %v1487, %v1699
        %v1732 = vadd.f32 %v1488, %v1700
        %v1735 = vcombine.high %v397, %v397
        %v1737 = vunpack.c.l.s4 1966171168
        %v1738 = vunpack.c.0.s8 %v1737
        %v1739 = vlaneseq
        %v1740 = vshrl.u32 %v1739, 7
        %v1741 = vsub.s32 %v1738, %v1740
        %v1742 = vrot.slane %v397, %v1741
        %v1744 = vunpack.c.l.s4 1966171168
        %v1745 = vunpack.c.0.s8 %v1744
        %v1746 = vlaneseq
        %v1747 = vshrl.u32 %v1746, 7
        %v1748 = vsub.s32 %v1745, %v1747
        %v1749 = vrot.slane %v1735, %v1748
        %v1750 = vcombine.high %v1742, %v1742
        %v1751 = vcombine.high %v1749, %v1749
        %v1753 = vunpack.c.l.s4 1966171168
        %v1754 = vunpack.c.0.s8 %v1753
        %v1755 = vlaneseq
        %v1756 = vshrl.u32 %v1755, 7
        %v1757 = vsub.s32 %v1754, %v1756
        %v1758 = vrot.slane %v1742, %v1757
        %v1760 = vunpack.c.l.s4 1966171168
        %v1761 = vunpack.c.0.s8 %v1760
        %v1762 = vlaneseq
        %v1763 = vshrl.u32 %v1762, 7
        %v1764 = vsub.s32 %v1761, %v1763
        %v1765 = vrot.slane %v1749, %v1764
        %v1767 = vunpack.c.l.s4 1966171168
        %v1768 = vunpack.c.0.s8 %v1767
        %v1769 = vlaneseq
        %v1770 = vshrl.u32 %v1769, 7
        %v1771 = vsub.s32 %v1768, %v1770
        %v1772 = vrot.slane %v1750, %v1771
        %v1774 = vunpack.c.l.s4 1966171168
        %v1775 = vunpack.c.0.s8 %v1774
        %v1776 = vlaneseq
        %v1777 = vshrl.u32 %v1776, 7
        %v1778 = vsub.s32 %v1775, %v1777
        %v1779 = vrot.slane %v1751, %v1778
        %v1780 = vcombine.high %v1758, %v1758
        %v1781 = vcombine.high %v1765, %v1765
        %v1782 = vcombine.high %v1772, %v1772
        %v1783 = vcombine.high %v1779, %v1779
        %v1784 = vcombine.high %v398, %v398
        %v1786 = vunpack.c.l.s4 1966171168
        %v1787 = vunpack.c.0.s8 %v1786
        %v1788 = vlaneseq
        %v1789 = vshrl.u32 %v1788, 7
        %v1790 = vsub.s32 %v1787, %v1789
        %v1791 = vrot.slane %v398, %v1790
        %v1793 = vunpack.c.l.s4 1966171168
        %v1794 = vunpack.c.0.s8 %v1793
        %v1795 = vlaneseq
        %v1796 = vshrl.u32 %v1795, 7
        %v1797 = vsub.s32 %v1794, %v1796
        %v1798 = vrot.slane %v1784, %v1797
        %v1799 = vcombine.high %v1791, %v1791
        %v1800 = vcombine.high %v1798, %v1798
        %v1802 = vunpack.c.l.s4 1966171168
        %v1803 = vunpack.c.0.s8 %v1802
        %v1804 = vlaneseq
        %v1805 = vshrl.u32 %v1804, 7
        %v1806 = vsub.s32 %v1803, %v1805
        %v1807 = vrot.slane %v1791, %v1806
        %v1809 = vunpack.c.l.s4 1966171168
        %v1810 = vunpack.c.0.s8 %v1809
        %v1811 = vlaneseq
        %v1812 = vshrl.u32 %v1811, 7
        %v1813 = vsub.s32 %v1810, %v1812
        %v1814 = vrot.slane %v1798, %v1813
        %v1816 = vunpack.c.l.s4 1966171168
        %v1817 = vunpack.c.0.s8 %v1816
        %v1818 = vlaneseq
        %v1819 = vshrl.u32 %v1818, 7
        %v1820 = vsub.s32 %v1817, %v1819
        %v1821 = vrot.slane %v1799, %v1820
        %v1823 = vunpack.c.l.s4 1966171168
        %v1824 = vunpack.c.0.s8 %v1823
        %v1825 = vlaneseq
        %v1826 = vshrl.u32 %v1825, 7
        %v1827 = vsub.s32 %v1824, %v1826
        %v1828 = vrot.slane %v1800, %v1827
        %v1829 = vcombine.high %v1807, %v1807
        %v1830 = vcombine.high %v1814, %v1814
        %v1831 = vcombine.high %v1821, %v1821
        %v1832 = vcombine.high %v1828, %v1828
        %v1833 = vlaneseq
        %v1834 = vshrl.u32 %v1833, 7
        %v1835 = vsub.s32 0, %v1834
        %v1836 = vrot.slane %v1758, %v1835
        %v1837 = vlaneseq
        %v1838 = vshrl.u32 %v1837, 7
        %v1839 = vsub.s32 0, %v1838
        %v1840 = vrot.slane %v1772, %v1839
        %v1841 = vlaneseq
        %v1842 = vshrl.u32 %v1841, 7
        %v1843 = vsub.s32 0, %v1842
        %v1844 = vrot.slane %v1780, %v1843
        %v1845 = vlaneseq
        %v1846 = vshrl.u32 %v1845, 7
        %v1847 = vsub.s32 0, %v1846
        %v1848 = vrot.slane %v1782, %v1847
        %v1849 = vlaneseq
        %v1850 = vshrl.u32 %v1849, 7
        %v1851 = vsub.s32 0, %v1850
        %v1852 = vrot.slane %v1765, %v1851
        %v1853 = vlaneseq
        %v1854 = vshrl.u32 %v1853, 7
        %v1855 = vsub.s32 0, %v1854
        %v1856 = vrot.slane %v1779, %v1855
        %v1857 = vlaneseq
        %v1858 = vshrl.u32 %v1857, 7
        %v1859 = vsub.s32 0, %v1858
        %v1860 = vrot.slane %v1781, %v1859
        %v1861 = vlaneseq
        %v1862 = vshrl.u32 %v1861, 7
        %v1863 = vsub.s32 0, %v1862
        %v1864 = vrot.slane %v1783, %v1863
        %v1865 = vlaneseq
        %v1866 = vshrl.u32 %v1865, 7
        %v1867 = vsub.s32 0, %v1866
        %v1868 = vrot.slane %v1807, %v1867
        %v1869 = vlaneseq
        %v1870 = vshrl.u32 %v1869, 7
        %v1871 = vsub.s32 0, %v1870
        %v1872 = vrot.slane %v1821, %v1871
        %v1873 = vlaneseq
        %v1874 = vshrl.u32 %v1873, 7
        %v1875 = vsub.s32 0, %v1874
        %v1876 = vrot.slane %v1829, %v1875
        %v1877 = vlaneseq
        %v1878 = vshrl.u32 %v1877, 7
        %v1879 = vsub.s32 0, %v1878
        %v1880 = vrot.slane %v1831, %v1879
        %v1881 = vlaneseq
        %v1882 = vshrl.u32 %v1881, 7
        %v1883 = vsub.s32 0, %v1882
        %v1884 = vrot.slane %v1814, %v1883
        %v1885 = vlaneseq
        %v1886 = vshrl.u32 %v1885, 7
        %v1887 = vsub.s32 0, %v1886
        %v1888 = vrot.slane %v1828, %v1887
        %v1889 = vlaneseq
        %v1890 = vshrl.u32 %v1889, 7
        %v1891 = vsub.s32 0, %v1890
        %v1892 = vrot.slane %v1830, %v1891
        %v1893 = vlaneseq
        %v1894 = vshrl.u32 %v1893, 7
        %v1895 = vsub.s32 0, %v1894
        %v1896 = vrot.slane %v1832, %v1895
        %v1913 = vmul.f32 %v1836, %v605
        %v1914 = vmul.f32 %v1836, %v606
        %v1915 = vmul.f32 %v1840, %v605
        %v1916 = vmul.f32 %v1840, %v606
        %v1917 = vmul.f32 %v1844, %v605
        %v1918 = vmul.f32 %v1844, %v606
        %v1919 = vmul.f32 %v1848, %v605
        %v1920 = vmul.f32 %v1848, %v606
        %v1921 = vmul.f32 %v1852, %v605
        %v1922 = vmul.f32 %v1852, %v606
        %v1923 = vmul.f32 %v1856, %v605
        %v1924 = vmul.f32 %v1856, %v606
        %v1925 = vmul.f32 %v1860, %v605
        %v1926 = vmul.f32 %v1860, %v606
        %v1927 = vmul.f32 %v1864, %v605
        %v1928 = vmul.f32 %v1864, %v606
        %v1929 = vmul.f32 %v1868, %v605
        %v1930 = vmul.f32 %v1868, %v606
        %v1931 = vmul.f32 %v1872, %v605
        %v1932 = vmul.f32 %v1872, %v606
        %v1933 = vmul.f32 %v1876, %v605
        %v1934 = vmul.f32 %v1876, %v606
        %v1935 = vmul.f32 %v1880, %v605
        %v1936 = vmul.f32 %v1880, %v606
        %v1937 = vmul.f32 %v1884, %v605
        %v1938 = vmul.f32 %v1884, %v606
        %v1939 = vmul.f32 %v1888, %v605
        %v1940 = vmul.f32 %v1888, %v606
        %v1941 = vmul.f32 %v1892, %v605
        %v1942 = vmul.f32 %v1892, %v606
        %v1943 = vmul.f32 %v1896, %v605
        %v1944 = vmul.f32 %v1896, %v606
        %v1945 = vadd.f32 %v1701, %v1913
        %v1946 = vadd.f32 %v1702, %v1914
        %v1947 = vadd.f32 %v1703, %v1915
        %v1948 = vadd.f32 %v1704, %v1916
        %v1949 = vadd.f32 %v1705, %v1917
        %v1950 = vadd.f32 %v1706, %v1918
        %v1951 = vadd.f32 %v1707, %v1919
        %v1952 = vadd.f32 %v1708, %v1920
        %v1953 = vadd.f32 %v1709, %v1921
        %v1954 = vadd.f32 %v1710, %v1922
        %v1955 = vadd.f32 %v1711, %v1923
        %v1956 = vadd.f32 %v1712, %v1924
        %v1957 = vadd.f32 %v1713, %v1925
        %v1958 = vadd.f32 %v1714, %v1926
        %v1959 = vadd.f32 %v1715, %v1927
        %v1960 = vadd.f32 %v1716, %v1928
        %v1961 = vadd.f32 %v1717, %v1929
        %v1962 = vadd.f32 %v1718, %v1930
        %v1963 = vadd.f32 %v1719, %v1931
        %v1964 = vadd.f32 %v1720, %v1932
        %v1965 = vadd.f32 %v1721, %v1933
        %v1966 = vadd.f32 %v1722, %v1934
        %v1967 = vadd.f32 %v1723, %v1935
        %v1968 = vadd.f32 %v1724, %v1936
        %v1969 = vadd.f32 %v1725, %v1937
        %v1970 = vadd.f32 %v1726, %v1938
        %v1971 = vadd.f32 %v1727, %v1939
        %v1972 = vadd.f32 %v1728, %v1940
        %v1973 = vadd.f32 %v1729, %v1941
        %v1974 = vadd.f32 %v1730, %v1942
        %v1975 = vadd.f32 %v1731, %v1943
        %v1976 = vadd.f32 %v1732, %v1944
        %v1979 = vcombine.high %v423, %v423
        %v1981 = vunpack.c.l.s4 1966171168
        %v1982 = vunpack.c.0.s8 %v1981
        %v1983 = vlaneseq
        %v1984 = vshrl.u32 %v1983, 7
        %v1985 = vsub.s32 %v1982, %v1984
        %v1986 = vrot.slane %v423, %v1985
        %v1988 = vunpack.c.l.s4 1966171168
        %v1989 = vunpack.c.0.s8 %v1988
        %v1990 = vlaneseq
        %v1991 = vshrl.u32 %v1990, 7
        %v1992 = vsub.s32 %v1989, %v1991
        %v1993 = vrot.slane %v1979, %v1992
        %v1994 = vcombine.high %v1986, %v1986
        %v1995 = vcombine.high %v1993, %v1993
        %v1997 = vunpack.c.l.s4 1966171168
        %v1998 = vunpack.c.0.s8 %v1997
        %v1999 = vlaneseq
        %v2000 = vshrl.u32 %v1999, 7
        %v2001 = vsub.s32 %v1998, %v2000
        %v2002 = vrot.slane %v1986, %v2001
        %v2004 = vunpack.c.l.s4 1966171168
        %v2005 = vunpack.c.0.s8 %v2004
        %v2006 = vlaneseq
        %v2007 = vshrl.u32 %v2006, 7
        %v2008 = vsub.s32 %v2005, %v2007
        %v2009 = vrot.slane %v1993, %v2008
        %v2011 = vunpack.c.l.s4 1966171168
        %v2012 = vunpack.c.0.s8 %v2011
        %v2013 = vlaneseq
        %v2014 = vshrl.u32 %v2013, 7
        %v2015 = vsub.s32 %v2012, %v2014
        %v2016 = vrot.slane %v1994, %v2015
        %v2018 = vunpack.c.l.s4 1966171168
        %v2019 = vunpack.c.0.s8 %v2018
        %v2020 = vlaneseq
        %v2021 = vshrl.u32 %v2020, 7
        %v2022 = vsub.s32 %v2019, %v2021
        %v2023 = vrot.slane %v1995, %v2022
        %v2024 = vcombine.high %v2002, %v2002
        %v2025 = vcombine.high %v2009, %v2009
        %v2026 = vcombine.high %v2016, %v2016
        %v2027 = vcombine.high %v2023, %v2023
        %v2028 = vcombine.high %v424, %v424
        %v2030 = vunpack.c.l.s4 1966171168
        %v2031 = vunpack.c.0.s8 %v2030
        %v2032 = vlaneseq
        %v2033 = vshrl.u32 %v2032, 7
        %v2034 = vsub.s32 %v2031, %v2033
        %v2035 = vrot.slane %v424, %v2034
        %v2037 = vunpack.c.l.s4 1966171168
        %v2038 = vunpack.c.0.s8 %v2037
        %v2039 = vlaneseq
        %v2040 = vshrl.u32 %v2039, 7
        %v2041 = vsub.s32 %v2038, %v2040
        %v2042 = vrot.slane %v2028, %v2041
        %v2043 = vcombine.high %v2035, %v2035
        %v2044 = vcombine.high %v2042, %v2042
        %v2046 = vunpack.c.l.s4 1966171168
        %v2047 = vunpack.c.0.s8 %v2046
        %v2048 = vlaneseq
        %v2049 = vshrl.u32 %v2048, 7
        %v2050 = vsub.s32 %v2047, %v2049
        %v2051 = vrot.slane %v2035, %v2050
        %v2053 = vunpack.c.l.s4 1966171168
        %v2054 = vunpack.c.0.s8 %v2053
        %v2055 = vlaneseq
        %v2056 = vshrl.u32 %v2055, 7
        %v2057 = vsub.s32 %v2054, %v2056
        %v2058 = vrot.slane %v2042, %v2057
        %v2060 = vunpack.c.l.s4 1966171168
        %v2061 = vunpack.c.0.s8 %v2060
        %v2062 = vlaneseq
        %v2063 = vshrl.u32 %v2062, 7
        %v2064 = vsub.s32 %v2061, %v2063
        %v2065 = vrot.slane %v2043, %v2064
        %v2067 = vunpack.c.l.s4 1966171168
        %v2068 = vunpack.c.0.s8 %v2067
        %v2069 = vlaneseq
        %v2070 = vshrl.u32 %v2069, 7
        %v2071 = vsub.s32 %v2068, %v2070
        %v2072 = vrot.slane %v2044, %v2071
        %v2073 = vcombine.high %v2051, %v2051
        %v2074 = vcombine.high %v2058, %v2058
        %v2075 = vcombine.high %v2065, %v2065
        %v2076 = vcombine.high %v2072, %v2072
        %v2077 = vlaneseq
        %v2078 = vshrl.u32 %v2077, 7
        %v2079 = vsub.s32 0, %v2078
        %v2080 = vrot.slane %v2002, %v2079
        %v2081 = vlaneseq
        %v2082 = vshrl.u32 %v2081, 7
        %v2083 = vsub.s32 0, %v2082
        %v2084 = vrot.slane %v2016, %v2083
        %v2085 = vlaneseq
        %v2086 = vshrl.u32 %v2085, 7
        %v2087 = vsub.s32 0, %v2086
        %v2088 = vrot.slane %v2024, %v2087
        %v2089 = vlaneseq
        %v2090 = vshrl.u32 %v2089, 7
        %v2091 = vsub.s32 0, %v2090
        %v2092 = vrot.slane %v2026, %v2091
        %v2093 = vlaneseq
        %v2094 = vshrl.u32 %v2093, 7
        %v2095 = vsub.s32 0, %v2094
        %v2096 = vrot.slane %v2009, %v2095
        %v2097 = vlaneseq
        %v2098 = vshrl.u32 %v2097, 7
        %v2099 = vsub.s32 0, %v2098
        %v2100 = vrot.slane %v2023, %v2099
        %v2101 = vlaneseq
        %v2102 = vshrl.u32 %v2101, 7
        %v2103 = vsub.s32 0, %v2102
        %v2104 = vrot.slane %v2025, %v2103
        %v2105 = vlaneseq
        %v2106 = vshrl.u32 %v2105, 7
        %v2107 = vsub.s32 0, %v2106
        %v2108 = vrot.slane %v2027, %v2107
        %v2109 = vlaneseq
        %v2110 = vshrl.u32 %v2109, 7
        %v2111 = vsub.s32 0, %v2110
        %v2112 = vrot.slane %v2051, %v2111
        %v2113 = vlaneseq
        %v2114 = vshrl.u32 %v2113, 7
        %v2115 = vsub.s32 0, %v2114
        %v2116 = vrot.slane %v2065, %v2115
        %v2117 = vlaneseq
        %v2118 = vshrl.u32 %v2117, 7
        %v2119 = vsub.s32 0, %v2118
        %v2120 = vrot.slane %v2073, %v2119
        %v2121 = vlaneseq
        %v2122 = vshrl.u32 %v2121, 7
        %v2123 = vsub.s32 0, %v2122
        %v2124 = vrot.slane %v2075, %v2123
        %v2125 = vlaneseq
        %v2126 = vshrl.u32 %v2125, 7
        %v2127 = vsub.s32 0, %v2126
        %v2128 = vrot.slane %v2058, %v2127
        %v2129 = vlaneseq
        %v2130 = vshrl.u32 %v2129, 7
        %v2131 = vsub.s32 0, %v2130
        %v2132 = vrot.slane %v2072, %v2131
        %v2133 = vlaneseq
        %v2134 = vshrl.u32 %v2133, 7
        %v2135 = vsub.s32 0, %v2134
        %v2136 = vrot.slane %v2074, %v2135
        %v2137 = vlaneseq
        %v2138 = vshrl.u32 %v2137, 7
        %v2139 = vsub.s32 0, %v2138
        %v2140 = vrot.slane %v2076, %v2139
        %v2157 = vmul.f32 %v2080, %v631
        %v2158 = vmul.f32 %v2080, %v632
        %v2159 = vmul.f32 %v2084, %v631
        %v2160 = vmul.f32 %v2084, %v632
        %v2161 = vmul.f32 %v2088, %v631
        %v2162 = vmul.f32 %v2088, %v632
        %v2163 = vmul.f32 %v2092, %v631
        %v2164 = vmul.f32 %v2092, %v632
        %v2165 = vmul.f32 %v2096, %v631
        %v2166 = vmul.f32 %v2096, %v632
        %v2167 = vmul.f32 %v2100, %v631
        %v2168 = vmul.f32 %v2100, %v632
        %v2169 = vmul.f32 %v2104, %v631
        %v2170 = vmul.f32 %v2104, %v632
        %v2171 = vmul.f32 %v2108, %v631
        %v2172 = vmul.f32 %v2108, %v632
        %v2173 = vmul.f32 %v2112, %v631
        %v2174 = vmul.f32 %v2112, %v632
        %v2175 = vmul.f32 %v2116, %v631
        %v2176 = vmul.f32 %v2116, %v632
        %v2177 = vmul.f32 %v2120, %v631
        %v2178 = vmul.f32 %v2120, %v632
        %v2179 = vmul.f32 %v2124, %v631
        %v2180 = vmul.f32 %v2124, %v632
        %v2181 = vmul.f32 %v2128, %v631
        %v2182 = vmul.f32 %v2128, %v632
        %v2183 = vmul.f32 %v2132, %v631
        %v2184 = vmul.f32 %v2132, %v632
        %v2185 = vmul.f32 %v2136, %v631
        %v2186 = vmul.f32 %v2136, %v632
        %v2187 = vmul.f32 %v2140, %v631
        %v2188 = vmul.f32 %v2140, %v632
        %v2189 = vadd.f32 %v1945, %v2157
        %v2190 = vadd.f32 %v1946, %v2158
        %v2191 = vadd.f32 %v1947, %v2159
        %v2192 = vadd.f32 %v1948, %v2160
        %v2193 = vadd.f32 %v1949, %v2161
        %v2194 = vadd.f32 %v1950, %v2162
        %v2195 = vadd.f32 %v1951, %v2163
        %v2196 = vadd.f32 %v1952, %v2164
        %v2197 = vadd.f32 %v1953, %v2165
        %v2198 = vadd.f32 %v1954, %v2166
        %v2199 = vadd.f32 %v1955, %v2167
        %v2200 = vadd.f32 %v1956, %v2168
        %v2201 = vadd.f32 %v1957, %v2169
        %v2202 = vadd.f32 %v1958, %v2170
        %v2203 = vadd.f32 %v1959, %v2171
        %v2204 = vadd.f32 %v1960, %v2172
        %v2205 = vadd.f32 %v1961, %v2173
        %v2206 = vadd.f32 %v1962, %v2174
        %v2207 = vadd.f32 %v1963, %v2175
        %v2208 = vadd.f32 %v1964, %v2176
        %v2209 = vadd.f32 %v1965, %v2177
        %v2210 = vadd.f32 %v1966, %v2178
        %v2211 = vadd.f32 %v1967, %v2179
        %v2212 = vadd.f32 %v1968, %v2180
        %v2213 = vadd.f32 %v1969, %v2181
        %v2214 = vadd.f32 %v1970, %v2182
        %v2215 = vadd.f32 %v1971, %v2183
        %v2216 = vadd.f32 %v1972, %v2184
        %v2217 = vadd.f32 %v1973, %v2185
        %v2218 = vadd.f32 %v1974, %v2186
        %v2219 = vadd.f32 %v1975, %v2187
        %v2220 = vadd.f32 %v1976, %v2188
        %v2223 = vcombine.high %v449, %v449
        %v2225 = vunpack.c.l.s4 1966171168
        %v2226 = vunpack.c.0.s8 %v2225
        %v2227 = vlaneseq
        %v2228 = vshrl.u32 %v2227, 7
        %v2229 = vsub.s32 %v2226, %v2228
        %v2230 = vrot.slane %v449, %v2229
        %v2232 = vunpack.c.l.s4 1966171168
        %v2233 = vunpack.c.0.s8 %v2232
        %v2234 = vlaneseq
        %v2235 = vshrl.u32 %v2234, 7
        %v2236 = vsub.s32 %v2233, %v2235
        %v2237 = vrot.slane %v2223, %v2236
        %v2238 = vcombine.high %v2230, %v2230
        %v2239 = vcombine.high %v2237, %v2237
        %v2241 = vunpack.c.l.s4 1966171168
        %v2242 = vunpack.c.0.s8 %v2241
        %v2243 = vlaneseq
        %v2244 = vshrl.u32 %v2243, 7
        %v2245 = vsub.s32 %v2242, %v2244
        %v2246 = vrot.slane %v2230, %v2245
        %v2248 = vunpack.c.l.s4 1966171168
        %v2249 = vunpack.c.0.s8 %v2248
        %v2250 = vlaneseq
        %v2251 = vshrl.u32 %v2250, 7
        %v2252 = vsub.s32 %v2249, %v2251
        %v2253 = vrot.slane %v2237, %v2252
        %v2255 = vunpack.c.l.s4 1966171168
        %v2256 = vunpack.c.0.s8 %v2255
        %v2257 = vlaneseq
        %v2258 = vshrl.u32 %v2257, 7
        %v2259 = vsub.s32 %v2256, %v2258
        %v2260 = vrot.slane %v2238, %v2259
        %v2262 = vunpack.c.l.s4 1966171168
        %v2263 = vunpack.c.0.s8 %v2262
        %v2264 = vlaneseq
        %v2265 = vshrl.u32 %v2264, 7
        %v2266 = vsub.s32 %v2263, %v2265
        %v2267 = vrot.slane %v2239, %v2266
        %v2268 = vcombine.high %v2246, %v2246
        %v2269 = vcombine.high %v2253, %v2253
        %v2270 = vcombine.high %v2260, %v2260
        %v2271 = vcombine.high %v2267, %v2267
        %v2272 = vcombine.high %v450, %v450
        %v2274 = vunpack.c.l.s4 1966171168
        %v2275 = vunpack.c.0.s8 %v2274
        %v2276 = vlaneseq
        %v2277 = vshrl.u32 %v2276, 7
        %v2278 = vsub.s32 %v2275, %v2277
        %v2279 = vrot.slane %v450, %v2278
        %v2281 = vunpack.c.l.s4 1966171168
        %v2282 = vunpack.c.0.s8 %v2281
        %v2283 = vlaneseq
        %v2284 = vshrl.u32 %v2283, 7
        %v2285 = vsub.s32 %v2282, %v2284
        %v2286 = vrot.slane %v2272, %v2285
        %v2287 = vcombine.high %v2279, %v2279
        %v2288 = vcombine.high %v2286, %v2286
        %v2290 = vunpack.c.l.s4 1966171168
        %v2291 = vunpack.c.0.s8 %v2290
        %v2292 = vlaneseq
        %v2293 = vshrl.u32 %v2292, 7
        %v2294 = vsub.s32 %v2291, %v2293
        %v2295 = vrot.slane %v2279, %v2294
        %v2297 = vunpack.c.l.s4 1966171168
        %v2298 = vunpack.c.0.s8 %v2297
        %v2299 = vlaneseq
        %v2300 = vshrl.u32 %v2299, 7
        %v2301 = vsub.s32 %v2298, %v2300
        %v2302 = vrot.slane %v2286, %v2301
        %v2304 = vunpack.c.l.s4 1966171168
        %v2305 = vunpack.c.0.s8 %v2304
        %v2306 = vlaneseq
        %v2307 = vshrl.u32 %v2306, 7
        %v2308 = vsub.s32 %v2305, %v2307
        %v2309 = vrot.slane %v2287, %v2308
        %v2311 = vunpack.c.l.s4 1966171168
        %v2312 = vunpack.c.0.s8 %v2311
        %v2313 = vlaneseq
        %v2314 = vshrl.u32 %v2313, 7
        %v2315 = vsub.s32 %v2312, %v2314
        %v2316 = vrot.slane %v2288, %v2315
        %v2317 = vcombine.high %v2295, %v2295
        %v2318 = vcombine.high %v2302, %v2302
        %v2319 = vcombine.high %v2309, %v2309
        %v2320 = vcombine.high %v2316, %v2316
        %v2321 = vlaneseq
        %v2322 = vshrl.u32 %v2321, 7
        %v2323 = vsub.s32 0, %v2322
        %v2324 = vrot.slane %v2246, %v2323
        %v2325 = vlaneseq
        %v2326 = vshrl.u32 %v2325, 7
        %v2327 = vsub.s32 0, %v2326
        %v2328 = vrot.slane %v2260, %v2327
        %v2329 = vlaneseq
        %v2330 = vshrl.u32 %v2329, 7
        %v2331 = vsub.s32 0, %v2330
        %v2332 = vrot.slane %v2268, %v2331
        %v2333 = vlaneseq
        %v2334 = vshrl.u32 %v2333, 7
        %v2335 = vsub.s32 0, %v2334
        %v2336 = vrot.slane %v2270, %v2335
        %v2337 = vlaneseq
        %v2338 = vshrl.u32 %v2337, 7
        %v2339 = vsub.s32 0, %v2338
        %v2340 = vrot.slane %v2253, %v2339
        %v2341 = vlaneseq
        %v2342 = vshrl.u32 %v2341, 7
        %v2343 = vsub.s32 0, %v2342
        %v2344 = vrot.slane %v2267, %v2343
        %v2345 = vlaneseq
        %v2346 = vshrl.u32 %v2345, 7
        %v2347 = vsub.s32 0, %v2346
        %v2348 = vrot.slane %v2269, %v2347
        %v2349 = vlaneseq
        %v2350 = vshrl.u32 %v2349, 7
        %v2351 = vsub.s32 0, %v2350
        %v2352 = vrot.slane %v2271, %v2351
        %v2353 = vlaneseq
        %v2354 = vshrl.u32 %v2353, 7
        %v2355 = vsub.s32 0, %v2354
        %v2356 = vrot.slane %v2295, %v2355
        %v2357 = vlaneseq
        %v2358 = vshrl.u32 %v2357, 7
        %v2359 = vsub.s32 0, %v2358
        %v2360 = vrot.slane %v2309, %v2359
        %v2361 = vlaneseq
        %v2362 = vshrl.u32 %v2361, 7
        %v2363 = vsub.s32 0, %v2362
        %v2364 = vrot.slane %v2317, %v2363
        %v2365 = vlaneseq
        %v2366 = vshrl.u32 %v2365, 7
        %v2367 = vsub.s32 0, %v2366
        %v2368 = vrot.slane %v2319, %v2367
        %v2369 = vlaneseq
        %v2370 = vshrl.u32 %v2369, 7
        %v2371 = vsub.s32 0, %v2370
        %v2372 = vrot.slane %v2302, %v2371
        %v2373 = vlaneseq
        %v2374 = vshrl.u32 %v2373, 7
        %v2375 = vsub.s32 0, %v2374
        %v2376 = vrot.slane %v2316, %v2375
        %v2377 = vlaneseq
        %v2378 = vshrl.u32 %v2377, 7
        %v2379 = vsub.s32 0, %v2378
        %v2380 = vrot.slane %v2318, %v2379
        %v2381 = vlaneseq
        %v2382 = vshrl.u32 %v2381, 7
        %v2383 = vsub.s32 0, %v2382
        %v2384 = vrot.slane %v2320, %v2383
        %v2401 = vmul.f32 %v2324, %v657
        %v2402 = vmul.f32 %v2324, %v658
        %v2403 = vmul.f32 %v2328, %v657
        %v2404 = vmul.f32 %v2328, %v658
        %v2405 = vmul.f32 %v2332, %v657
        %v2406 = vmul.f32 %v2332, %v658
        %v2407 = vmul.f32 %v2336, %v657
        %v2408 = vmul.f32 %v2336, %v658
        %v2409 = vmul.f32 %v2340, %v657
        %v2410 = vmul.f32 %v2340, %v658
        %v2411 = vmul.f32 %v2344, %v657
        %v2412 = vmul.f32 %v2344, %v658
        %v2413 = vmul.f32 %v2348, %v657
        %v2414 = vmul.f32 %v2348, %v658
        %v2415 = vmul.f32 %v2352, %v657
        %v2416 = vmul.f32 %v2352, %v658
        %v2417 = vmul.f32 %v2356, %v657
        %v2418 = vmul.f32 %v2356, %v658
        %v2419 = vmul.f32 %v2360, %v657
        %v2420 = vmul.f32 %v2360, %v658
        %v2421 = vmul.f32 %v2364, %v657
        %v2422 = vmul.f32 %v2364, %v658
        %v2423 = vmul.f32 %v2368, %v657
        %v2424 = vmul.f32 %v2368, %v658
        %v2425 = vmul.f32 %v2372, %v657
        %v2426 = vmul.f32 %v2372, %v658
        %v2427 = vmul.f32 %v2376, %v657
        %v2428 = vmul.f32 %v2376, %v658
        %v2429 = vmul.f32 %v2380, %v657
        %v2430 = vmul.f32 %v2380, %v658
        %v2431 = vmul.f32 %v2384, %v657
        %v2432 = vmul.f32 %v2384, %v658
        %v2433 = vadd.f32 %v2189, %v2401
        %v2434 = vadd.f32 %v2190, %v2402
        %v2435 = vadd.f32 %v2191, %v2403
        %v2436 = vadd.f32 %v2192, %v2404
        %v2437 = vadd.f32 %v2193, %v2405
        %v2438 = vadd.f32 %v2194, %v2406
        %v2439 = vadd.f32 %v2195, %v2407
        %v2440 = vadd.f32 %v2196, %v2408
        %v2441 = vadd.f32 %v2197, %v2409
        %v2442 = vadd.f32 %v2198, %v2410
        %v2443 = vadd.f32 %v2199, %v2411
        %v2444 = vadd.f32 %v2200, %v2412
        %v2445 = vadd.f32 %v2201, %v2413
        %v2446 = vadd.f32 %v2202, %v2414
        %v2447 = vadd.f32 %v2203, %v2415
        %v2448 = vadd.f32 %v2204, %v2416
        %v2449 = vadd.f32 %v2205, %v2417
        %v2450 = vadd.f32 %v2206, %v2418
        %v2451 = vadd.f32 %v2207, %v2419
        %v2452 = vadd.f32 %v2208, %v2420
        %v2453 = vadd.f32 %v2209, %v2421
        %v2454 = vadd.f32 %v2210, %v2422
        %v2455 = vadd.f32 %v2211, %v2423
        %v2456 = vadd.f32 %v2212, %v2424
        %v2457 = vadd.f32 %v2213, %v2425
        %v2458 = vadd.f32 %v2214, %v2426
        %v2459 = vadd.f32 %v2215, %v2427
        %v2460 = vadd.f32 %v2216, %v2428
        %v2461 = vadd.f32 %v2217, %v2429
        %v2462 = vadd.f32 %v2218, %v2430
        %v2463 = vadd.f32 %v2219, %v2431
        %v2464 = vadd.f32 %v2220, %v2432
        %v2467 = vcombine.high %v475, %v475
        %v2469 = vunpack.c.l.s4 1966171168
        %v2470 = vunpack.c.0.s8 %v2469
        %v2471 = vlaneseq
        %v2472 = vshrl.u32 %v2471, 7
        %v2473 = vsub.s32 %v2470, %v2472
        %v2474 = vrot.slane %v475, %v2473
        %v2476 = vunpack.c.l.s4 1966171168
        %v2477 = vunpack.c.0.s8 %v2476
        %v2478 = vlaneseq
        %v2479 = vshrl.u32 %v2478, 7
        %v2480 = vsub.s32 %v2477, %v2479
        %v2481 = vrot.slane %v2467, %v2480
        %v2482 = vcombine.high %v2474, %v2474
        %v2483 = vcombine.high %v2481, %v2481
        %v2485 = vunpack.c.l.s4 1966171168
        %v2486 = vunpack.c.0.s8 %v2485
        %v2487 = vlaneseq
        %v2488 = vshrl.u32 %v2487, 7
        %v2489 = vsub.s32 %v2486, %v2488
        %v2490 = vrot.slane %v2474, %v2489
        %v2492 = vunpack.c.l.s4 1966171168
        %v2493 = vunpack.c.0.s8 %v2492
        %v2494 = vlaneseq
        %v2495 = vshrl.u32 %v2494, 7
        %v2496 = vsub.s32 %v2493, %v2495
        %v2497 = vrot.slane %v2481, %v2496
        %v2499 = vunpack.c.l.s4 1966171168
        %v2500 = vunpack.c.0.s8 %v2499
        %v2501 = vlaneseq
        %v2502 = vshrl.u32 %v2501, 7
        %v2503 = vsub.s32 %v2500, %v2502
        %v2504 = vrot.slane %v2482, %v2503
        %v2506 = vunpack.c.l.s4 1966171168
        %v2507 = vunpack.c.0.s8 %v2506
        %v2508 = vlaneseq
        %v2509 = vshrl.u32 %v2508, 7
        %v2510 = vsub.s32 %v2507, %v2509
        %v2511 = vrot.slane %v2483, %v2510
        %v2512 = vcombine.high %v2490, %v2490
        %v2513 = vcombine.high %v2497, %v2497
        %v2514 = vcombine.high %v2504, %v2504
        %v2515 = vcombine.high %v2511, %v2511
        %v2516 = vcombine.high %v476, %v476
        %v2518 = vunpack.c.l.s4 1966171168
        %v2519 = vunpack.c.0.s8 %v2518
        %v2520 = vlaneseq
        %v2521 = vshrl.u32 %v2520, 7
        %v2522 = vsub.s32 %v2519, %v2521
        %v2523 = vrot.slane %v476, %v2522
        %v2525 = vunpack.c.l.s4 1966171168
        %v2526 = vunpack.c.0.s8 %v2525
        %v2527 = vlaneseq
        %v2528 = vshrl.u32 %v2527, 7
        %v2529 = vsub.s32 %v2526, %v2528
        %v2530 = vrot.slane %v2516, %v2529
        %v2531 = vcombine.high %v2523, %v2523
        %v2532 = vcombine.high %v2530, %v2530
        %v2534 = vunpack.c.l.s4 1966171168
        %v2535 = vunpack.c.0.s8 %v2534
        %v2536 = vlaneseq
        %v2537 = vshrl.u32 %v2536, 7
        %v2538 = vsub.s32 %v2535, %v2537
        %v2539 = vrot.slane %v2523, %v2538
        %v2541 = vunpack.c.l.s4 1966171168
        %v2542 = vunpack.c.0.s8 %v2541
        %v2543 = vlaneseq
        %v2544 = vshrl.u32 %v2543, 7
        %v2545 = vsub.s32 %v2542, %v2544
        %v2546 = vrot.slane %v2530, %v2545
        %v2548 = vunpack.c.l.s4 1966171168
        %v2549 = vunpack.c.0.s8 %v2548
        %v2550 = vlaneseq
        %v2551 = vshrl.u32 %v2550, 7
        %v2552 = vsub.s32 %v2549, %v2551
        %v2553 = vrot.slane %v2531, %v2552
        %v2555 = vunpack.c.l.s4 1966171168
        %v2556 = vunpack.c.0.s8 %v2555
        %v2557 = vlaneseq
        %v2558 = vshrl.u32 %v2557, 7
        %v2559 = vsub.s32 %v2556, %v2558
        %v2560 = vrot.slane %v2532, %v2559
        %v2561 = vcombine.high %v2539, %v2539
        %v2562 = vcombine.high %v2546, %v2546
        %v2563 = vcombine.high %v2553, %v2553
        %v2564 = vcombine.high %v2560, %v2560
        %v2565 = vlaneseq
        %v2566 = vshrl.u32 %v2565, 7
        %v2567 = vsub.s32 0, %v2566
        %v2568 = vrot.slane %v2490, %v2567
        %v2569 = vlaneseq
        %v2570 = vshrl.u32 %v2569, 7
        %v2571 = vsub.s32 0, %v2570
        %v2572 = vrot.slane %v2504, %v2571
        %v2573 = vlaneseq
        %v2574 = vshrl.u32 %v2573, 7
        %v2575 = vsub.s32 0, %v2574
        %v2576 = vrot.slane %v2512, %v2575
        %v2577 = vlaneseq
        %v2578 = vshrl.u32 %v2577, 7
        %v2579 = vsub.s32 0, %v2578
        %v2580 = vrot.slane %v2514, %v2579
        %v2581 = vlaneseq
        %v2582 = vshrl.u32 %v2581, 7
        %v2583 = vsub.s32 0, %v2582
        %v2584 = vrot.slane %v2497, %v2583
        %v2585 = vlaneseq
        %v2586 = vshrl.u32 %v2585, 7
        %v2587 = vsub.s32 0, %v2586
        %v2588 = vrot.slane %v2511, %v2587
        %v2589 = vlaneseq
        %v2590 = vshrl.u32 %v2589, 7
        %v2591 = vsub.s32 0, %v2590
        %v2592 = vrot.slane %v2513, %v2591
        %v2593 = vlaneseq
        %v2594 = vshrl.u32 %v2593, 7
        %v2595 = vsub.s32 0, %v2594
        %v2596 = vrot.slane %v2515, %v2595
        %v2597 = vlaneseq
        %v2598 = vshrl.u32 %v2597, 7
        %v2599 = vsub.s32 0, %v2598
        %v2600 = vrot.slane %v2539, %v2599
        %v2601 = vlaneseq
        %v2602 = vshrl.u32 %v2601, 7
        %v2603 = vsub.s32 0, %v2602
        %v2604 = vrot.slane %v2553, %v2603
        %v2605 = vlaneseq
        %v2606 = vshrl.u32 %v2605, 7
        %v2607 = vsub.s32 0, %v2606
        %v2608 = vrot.slane %v2561, %v2607
        %v2609 = vlaneseq
        %v2610 = vshrl.u32 %v2609, 7
        %v2611 = vsub.s32 0, %v2610
        %v2612 = vrot.slane %v2563, %v2611
        %v2613 = vlaneseq
        %v2614 = vshrl.u32 %v2613, 7
        %v2615 = vsub.s32 0, %v2614
        %v2616 = vrot.slane %v2546, %v2615
        %v2617 = vlaneseq
        %v2618 = vshrl.u32 %v2617, 7
        %v2619 = vsub.s32 0, %v2618
        %v2620 = vrot.slane %v2560, %v2619
        %v2621 = vlaneseq
        %v2622 = vshrl.u32 %v2621, 7
        %v2623 = vsub.s32 0, %v2622
        %v2624 = vrot.slane %v2562, %v2623
        %v2625 = vlaneseq
        %v2626 = vshrl.u32 %v2625, 7
        %v2627 = vsub.s32 0, %v2626
        %v2628 = vrot.slane %v2564, %v2627
        %v2645 = vmul.f32 %v2568, %v683
        %v2646 = vmul.f32 %v2568, %v684
        %v2647 = vmul.f32 %v2572, %v683
        %v2648 = vmul.f32 %v2572, %v684
        %v2649 = vmul.f32 %v2576, %v683
        %v2650 = vmul.f32 %v2576, %v684
        %v2651 = vmul.f32 %v2580, %v683
        %v2652 = vmul.f32 %v2580, %v684
        %v2653 = vmul.f32 %v2584, %v683
        %v2654 = vmul.f32 %v2584, %v684
        %v2655 = vmul.f32 %v2588, %v683
        %v2656 = vmul.f32 %v2588, %v684
        %v2657 = vmul.f32 %v2592, %v683
        %v2658 = vmul.f32 %v2592, %v684
        %v2659 = vmul.f32 %v2596, %v683
        %v2660 = vmul.f32 %v2596, %v684
        %v2661 = vmul.f32 %v2600, %v683
        %v2662 = vmul.f32 %v2600, %v684
        %v2663 = vmul.f32 %v2604, %v683
        %v2664 = vmul.f32 %v2604, %v684
        %v2665 = vmul.f32 %v2608, %v683
        %v2666 = vmul.f32 %v2608, %v684
        %v2667 = vmul.f32 %v2612, %v683
        %v2668 = vmul.f32 %v2612, %v684
        %v2669 = vmul.f32 %v2616, %v683
        %v2670 = vmul.f32 %v2616, %v684
        %v2671 = vmul.f32 %v2620, %v683
        %v2672 = vmul.f32 %v2620, %v684
        %v2673 = vmul.f32 %v2624, %v683
        %v2674 = vmul.f32 %v2624, %v684
        %v2675 = vmul.f32 %v2628, %v683
        %v2676 = vmul.f32 %v2628, %v684
        %v2677 = vadd.f32 %v2433, %v2645
        %v2678 = vadd.f32 %v2434, %v2646
        %v2679 = vadd.f32 %v2435, %v2647
        %v2680 = vadd.f32 %v2436, %v2648
        %v2681 = vadd.f32 %v2437, %v2649
        %v2682 = vadd.f32 %v2438, %v2650
        %v2683 = vadd.f32 %v2439, %v2651
        %v2684 = vadd.f32 %v2440, %v2652
        %v2685 = vadd.f32 %v2441, %v2653
        %v2686 = vadd.f32 %v2442, %v2654
        %v2687 = vadd.f32 %v2443, %v2655
        %v2688 = vadd.f32 %v2444, %v2656
        %v2689 = vadd.f32 %v2445, %v2657
        %v2690 = vadd.f32 %v2446, %v2658
        %v2691 = vadd.f32 %v2447, %v2659
        %v2692 = vadd.f32 %v2448, %v2660
        %v2693 = vadd.f32 %v2449, %v2661
        %v2694 = vadd.f32 %v2450, %v2662
        %v2695 = vadd.f32 %v2451, %v2663
        %v2696 = vadd.f32 %v2452, %v2664
        %v2697 = vadd.f32 %v2453, %v2665
        %v2698 = vadd.f32 %v2454, %v2666
        %v2699 = vadd.f32 %v2455, %v2667
        %v2700 = vadd.f32 %v2456, %v2668
        %v2701 = vadd.f32 %v2457, %v2669
        %v2702 = vadd.f32 %v2458, %v2670
        %v2703 = vadd.f32 %v2459, %v2671
        %v2704 = vadd.f32 %v2460, %v2672
        %v2705 = vadd.f32 %v2461, %v2673
        %v2706 = vadd.f32 %v2462, %v2674
        %v2707 = vadd.f32 %v2463, %v2675
        %v2708 = vadd.f32 %v2464, %v2676
        %vm2709 = vcmask 130048
        %v2710 = vsel %vm2709, %v2677, -inf
        %v2711 = vsel %vm2709, %v2678, -inf
        %v2712 = vmax.f32 %v2710, %v2711
        %v2713 = vrot.slane %v2712, 4
        %v2714 = vmax.f32 %v2712, %v2713
        %v2715 = vrot.slane %v2714, 2
        %v2716 = vmax.f32 %v2714, %v2715
        %v2717 = vrot.slane %v2716, 1
        %v2718 = vmax.f32 %v2716, %v2717
        %v2719 = vsel %vm2709, %v2679, -inf
        %v2720 = vsel %vm2709, %v2680, -inf
        %v2721 = vmax.f32 %v2719, %v2720
        %v2722 = vrot.slane %v2721, 4
        %v2723 = vmax.f32 %v2721, %v2722
        %v2724 = vrot.slane %v2723, 2
        %v2725 = vmax.f32 %v2723, %v2724
        %v2726 = vrot.slane %v2725, 1
        %v2727 = vmax.f32 %v2725, %v2726
        %v2728 = vsel %vm2709, %v2681, -inf
        %v2729 = vsel %vm2709, %v2682, -inf
        %v2730 = vmax.f32 %v2728, %v2729
        %v2731 = vrot.slane %v2730, 4
        %v2732 = vmax.f32 %v2730, %v2731
        %v2733 = vrot.slane %v2732, 2
        %v2734 = vmax.f32 %v2732, %v2733
        %v2735 = vrot.slane %v2734, 1
        %v2736 = vmax.f32 %v2734, %v2735
        %v2737 = vsel %vm2709, %v2683, -inf
        %v2738 = vsel %vm2709, %v2684, -inf
        %v2739 = vmax.f32 %v2737, %v2738
        %v2740 = vrot.slane %v2739, 4
        %v2741 = vmax.f32 %v2739, %v2740
        %v2742 = vrot.slane %v2741, 2
        %v2743 = vmax.f32 %v2741, %v2742
        %v2744 = vrot.slane %v2743, 1
        %v2745 = vmax.f32 %v2743, %v2744
        %v2746 = vsel %vm2709, %v2685, -inf
        %v2747 = vsel %vm2709, %v2686, -inf
        %v2748 = vmax.f32 %v2746, %v2747
        %v2749 = vrot.slane %v2748, 4
        %v2750 = vmax.f32 %v2748, %v2749
        %v2751 = vrot.slane %v2750, 2
        %v2752 = vmax.f32 %v2750, %v2751
        %v2753 = vrot.slane %v2752, 1
        %v2754 = vmax.f32 %v2752, %v2753
        %v2755 = vsel %vm2709, %v2687, -inf
        %v2756 = vsel %vm2709, %v2688, -inf
        %v2757 = vmax.f32 %v2755, %v2756
        %v2758 = vrot.slane %v2757, 4
        %v2759 = vmax.f32 %v2757, %v2758
        %v2760 = vrot.slane %v2759, 2
        %v2761 = vmax.f32 %v2759, %v2760
        %v2762 = vrot.slane %v2761, 1
        %v2763 = vmax.f32 %v2761, %v2762
        %v2764 = vsel %vm2709, %v2689, -inf
        %v2765 = vsel %vm2709, %v2690, -inf
        %v2766 = vmax.f32 %v2764, %v2765
        %v2767 = vrot.slane %v2766, 4
        %v2768 = vmax.f32 %v2766, %v2767
        %v2769 = vrot.slane %v2768, 2
        %v2770 = vmax.f32 %v2768, %v2769
        %v2771 = vrot.slane %v2770, 1
        %v2772 = vmax.f32 %v2770, %v2771
        %v2773 = vsel %vm2709, %v2691, -inf
        %v2774 = vsel %vm2709, %v2692, -inf
        %v2775 = vmax.f32 %v2773, %v2774
        %v2776 = vrot.slane %v2775, 4
        %v2777 = vmax.f32 %v2775, %v2776
        %v2778 = vrot.slane %v2777, 2
        %v2779 = vmax.f32 %v2777, %v2778
        %v2780 = vrot.slane %v2779, 1
        %v2781 = vmax.f32 %v2779, %v2780
        %v2782 = vsel %vm2709, %v2693, -inf
        %v2783 = vsel %vm2709, %v2694, -inf
        %v2784 = vmax.f32 %v2782, %v2783
        %v2785 = vrot.slane %v2784, 4
        %v2786 = vmax.f32 %v2784, %v2785
        %v2787 = vrot.slane %v2786, 2
        %v2788 = vmax.f32 %v2786, %v2787
        %v2789 = vrot.slane %v2788, 1
        %v2790 = vmax.f32 %v2788, %v2789
        %v2791 = vsel %vm2709, %v2695, -inf
        %v2792 = vsel %vm2709, %v2696, -inf
        %v2793 = vmax.f32 %v2791, %v2792
        %v2794 = vrot.slane %v2793, 4
        %v2795 = vmax.f32 %v2793, %v2794
        %v2796 = vrot.slane %v2795, 2
        %v2797 = vmax.f32 %v2795, %v2796
        %v2798 = vrot.slane %v2797, 1
        %v2799 = vmax.f32 %v2797, %v2798
        %v2800 = vsel %vm2709, %v2697, -inf
        %v2801 = vsel %vm2709, %v2698, -inf
        %v2802 = vmax.f32 %v2800, %v2801
        %v2803 = vrot.slane %v2802, 4
        %v2804 = vmax.f32 %v2802, %v2803
        %v2805 = vrot.slane %v2804, 2
        %v2806 = vmax.f32 %v2804, %v2805
        %v2807 = vrot.slane %v2806, 1
        %v2808 = vmax.f32 %v2806, %v2807
        %v2809 = vsel %vm2709, %v2699, -inf
        %v2810 = vsel %vm2709, %v2700, -inf
        %v2811 = vmax.f32 %v2809, %v2810
        %v2812 = vrot.slane %v2811, 4
        %v2813 = vmax.f32 %v2811, %v2812
        %v2814 = vrot.slane %v2813, 2
        %v2815 = vmax.f32 %v2813, %v2814
        %v2816 = vrot.slane %v2815, 1
        %v2817 = vmax.f32 %v2815, %v2816
        %v2818 = vsel %vm2709, %v2701, -inf
        %v2819 = vsel %vm2709, %v2702, -inf
        %v2820 = vmax.f32 %v2818, %v2819
        %v2821 = vrot.slane %v2820, 4
        %v2822 = vmax.f32 %v2820, %v2821
        %v2823 = vrot.slane %v2822, 2
        %v2824 = vmax.f32 %v2822, %v2823
        %v2825 = vrot.slane %v2824, 1
        %v2826 = vmax.f32 %v2824, %v2825
        %v2827 = vsel %vm2709, %v2703, -inf
        %v2828 = vsel %vm2709, %v2704, -inf
        %v2829 = vmax.f32 %v2827, %v2828
        %v2830 = vrot.slane %v2829, 4
        %v2831 = vmax.f32 %v2829, %v2830
        %v2832 = vrot.slane %v2831, 2
        %v2833 = vmax.f32 %v2831, %v2832
        %v2834 = vrot.slane %v2833, 1
        %v2835 = vmax.f32 %v2833, %v2834
        %v2836 = vsel %vm2709, %v2705, -inf
        %v2837 = vsel %vm2709, %v2706, -inf
        %v2838 = vmax.f32 %v2836, %v2837
        %v2839 = vrot.slane %v2838, 4
        %v2840 = vmax.f32 %v2838, %v2839
        %v2841 = vrot.slane %v2840, 2
        %v2842 = vmax.f32 %v2840, %v2841
        %v2843 = vrot.slane %v2842, 1
        %v2844 = vmax.f32 %v2842, %v2843
        %v2845 = vsel %vm2709, %v2707, -inf
        %v2846 = vsel %vm2709, %v2708, -inf
        %v2847 = vmax.f32 %v2845, %v2846
        %v2848 = vrot.slane %v2847, 4
        %v2849 = vmax.f32 %v2847, %v2848
        %v2850 = vrot.slane %v2849, 2
        %v2851 = vmax.f32 %v2849, %v2850
        %v2852 = vrot.slane %v2851, 1
        %v2853 = vmax.f32 %v2851, %v2852
        %v2854 = vsub.f32 %v2677, %v2718
        %v2855 = vsub.f32 %v2678, %v2718
        %v2856 = vsub.f32 %v2679, %v2727
        %v2857 = vsub.f32 %v2680, %v2727
        %v2858 = vsub.f32 %v2681, %v2736
        %v2859 = vsub.f32 %v2682, %v2736
        %v2860 = vsub.f32 %v2683, %v2745
        %v2861 = vsub.f32 %v2684, %v2745
        %v2862 = vsub.f32 %v2685, %v2754
        %v2863 = vsub.f32 %v2686, %v2754
        %v2864 = vsub.f32 %v2687, %v2763
        %v2865 = vsub.f32 %v2688, %v2763
        %v2866 = vsub.f32 %v2689, %v2772
        %v2867 = vsub.f32 %v2690, %v2772
        %v2868 = vsub.f32 %v2691, %v2781
        %v2869 = vsub.f32 %v2692, %v2781
        %v2870 = vsub.f32 %v2693, %v2790
        %v2871 = vsub.f32 %v2694, %v2790
        %v2872 = vsub.f32 %v2695, %v2799
        %v2873 = vsub.f32 %v2696, %v2799
        %v2874 = vsub.f32 %v2697, %v2808
        %v2875 = vsub.f32 %v2698, %v2808
        %v2876 = vsub.f32 %v2699, %v2817
        %v2877 = vsub.f32 %v2700, %v2817
        %v2878 = vsub.f32 %v2701, %v2826
        %v2879 = vsub.f32 %v2702, %v2826
        %v2880 = vsub.f32 %v2703, %v2835
        %v2881 = vsub.f32 %v2704, %v2835
        %v2882 = vsub.f32 %v2705, %v2844
        %v2883 = vsub.f32 %v2706, %v2844
        %v2884 = vsub.f32 %v2707, %v2853
        %v2885 = vsub.f32 %v2708, %v2853
        %v2886 = vmul.f32 %v2854, 1.442695
        %v2887 = vpow.pop %v2886
        %v2888 = vmul.f32 %v2855, 1.442695
        %v2889 = vpow.pop %v2888
        %v2890 = vmul.f32 %v2856, 1.442695
        %v2891 = vpow.pop %v2890
        %v2892 = vmul.f32 %v2857, 1.442695
        %v2893 = vpow.pop %v2892
        %v2894 = vmul.f32 %v2858, 1.442695
        %v2895 = vpow.pop %v2894
        %v2896 = vmul.f32 %v2859, 1.442695
        %v2897 = vpow.pop %v2896
        %v2898 = vmul.f32 %v2860, 1.442695
        %v2899 = vpow.pop %v2898
        %v2900 = vmul.f32 %v2861, 1.442695
        %v2901 = vpow.pop %v2900
        %v2902 = vmul.f32 %v2862, 1.442695
        %v2903 = vpow.pop %v2902
        %v2904 = vmul.f32 %v2863, 1.442695
        %v2905 = vpow.pop %v2904
        %v2906 = vmul.f32 %v2864, 1.442695
        %v2907 = vpow.pop %v2906
        %v2908 = vmul.f32 %v2865, 1.442695
        %v2909 = vpow.pop %v2908
        %v2910 = vmul.f32 %v2866, 1.442695
        %v2911 = vpow.pop %v2910
        %v2912 = vmul.f32 %v2867, 1.442695
        %v2913 = vpow.pop %v2912
        %v2914 = vmul.f32 %v2868, 1.442695
        %v2915 = vpow.pop %v2914
        %v2916 = vmul.f32 %v2869, 1.442695
        %v2917 = vpow.pop %v2916
        %v2918 = vmul.f32 %v2870, 1.442695
        %v2919 = vpow.pop %v2918
        %v2920 = vmul.f32 %v2871, 1.442695
        %v2921 = vpow.pop %v2920
        %v2922 = vmul.f32 %v2872, 1.442695
        %v2923 = vpow.pop %v2922
        %v2924 = vmul.f32 %v2873, 1.442695
        %v2925 = vpow.pop %v2924
        %v2926 = vmul.f32 %v2874, 1.442695
        %v2927 = vpow.pop %v2926
        %v2928 = vmul.f32 %v2875, 1.442695
        %v2929 = vpow.pop %v2928
        %v2930 = vmul.f32 %v2876, 1.442695
        %v2931 = vpow.pop %v2930
        %v2932 = vmul.f32 %v2877, 1.442695
        %v2933 = vpow.pop %v2932
        %v2934 = vmul.f32 %v2878, 1.442695
        %v2935 = vpow.pop %v2934
        %v2936 = vmul.f32 %v2879, 1.442695
        %v2937 = vpow.pop %v2936
        %v2938 = vmul.f32 %v2880, 1.442695
        %v2939 = vpow.pop %v2938
        %v2940 = vmul.f32 %v2881, 1.442695
        %v2941 = vpow.pop %v2940
        %v2942 = vmul.f32 %v2882, 1.442695
        %v2943 = vpow.pop %v2942
        %v2944 = vmul.f32 %v2883, 1.442695
        %v2945 = vpow.pop %v2944
        %v2946 = vmul.f32 %v2884, 1.442695
        %v2947 = vpow.pop %v2946
        %v2948 = vmul.f32 %v2885, 1.442695
        %v2949 = vpow.pop %v2948
        %v2950 = vsel %vm2709, %v2887, 0.0
        %v2951 = vsel %vm2709, %v2889, 0.0
        %v2952 = vadd.f32 %v2950, %v2951
        %v2953 = vrot.slane %v2952, 4
        %v2954 = vadd.f32 %v2952, %v2953
        %v2955 = vrot.slane %v2954, 2
        %v2956 = vadd.f32 %v2954, %v2955
        %v2957 = vrot.slane %v2956, 1
        %v2958 = vadd.f32 %v2956, %v2957
        %v2959 = vsel %vm2709, %v2891, 0.0
        %v2960 = vsel %vm2709, %v2893, 0.0
        %v2961 = vadd.f32 %v2959, %v2960
        %v2962 = vrot.slane %v2961, 4
        %v2963 = vadd.f32 %v2961, %v2962
        %v2964 = vrot.slane %v2963, 2
        %v2965 = vadd.f32 %v2963, %v2964
        %v2966 = vrot.slane %v2965, 1
        %v2967 = vadd.f32 %v2965, %v2966
        %v2968 = vsel %vm2709, %v2895, 0.0
        %v2969 = vsel %vm2709, %v2897, 0.0
        %v2970 = vadd.f32 %v2968, %v2969
        %v2971 = vrot.slane %v2970, 4
        %v2972 = vadd.f32 %v2970, %v2971
        %v2973 = vrot.slane %v2972, 2
        %v2974 = vadd.f32 %v2972, %v2973
        %v2975 = vrot.slane %v2974, 1
        %v2976 = vadd.f32 %v2974, %v2975
        %v2977 = vsel %vm2709, %v2899, 0.0
        %v2978 = vsel %vm2709, %v2901, 0.0
        %v2979 = vadd.f32 %v2977, %v2978
        %v2980 = vrot.slane %v2979, 4
        %v2981 = vadd.f32 %v2979, %v2980
        %v2982 = vrot.slane %v2981, 2
        %v2983 = vadd.f32 %v2981, %v2982
        %v2984 = vrot.slane %v2983, 1
        %v2985 = vadd.f32 %v2983, %v2984
        %v2986 = vsel %vm2709, %v2903, 0.0
        %v2987 = vsel %vm2709, %v2905, 0.0
        %v2988 = vadd.f32 %v2986, %v2987
        %v2989 = vrot.slane %v2988, 4
        %v2990 = vadd.f32 %v2988, %v2989
        %v2991 = vrot.slane %v2990, 2
        %v2992 = vadd.f32 %v2990, %v2991
        %v2993 = vrot.slane %v2992, 1
        %v2994 = vadd.f32 %v2992, %v2993
        %v2995 = vsel %vm2709, %v2907, 0.0
        %v2996 = vsel %vm2709, %v2909, 0.0
        %v2997 = vadd.f32 %v2995, %v2996
        %v2998 = vrot.slane %v2997, 4
        %v2999 = vadd.f32 %v2997, %v2998
        %v3000 = vrot.slane %v2999, 2
        %v3001 = vadd.f32 %v2999, %v3000
        %v3002 = vrot.slane %v3001, 1
        %v3003 = vadd.f32 %v3001, %v3002
        %v3004 = vsel %vm2709, %v2911, 0.0
        %v3005 = vsel %vm2709, %v2913, 0.0
        %v3006 = vadd.f32 %v3004, %v3005
        %v3007 = vrot.slane %v3006, 4
        %v3008 = vadd.f32 %v3006, %v3007
        %v3009 = vrot.slane %v3008, 2
        %v3010 = vadd.f32 %v3008, %v3009
        %v3011 = vrot.slane %v3010, 1
        %v3012 = vadd.f32 %v3010, %v3011
        %v3013 = vsel %vm2709, %v2915, 0.0
        %v3014 = vsel %vm2709, %v2917, 0.0
        %v3015 = vadd.f32 %v3013, %v3014
        %v3016 = vrot.slane %v3015, 4
        %v3017 = vadd.f32 %v3015, %v3016
        %v3018 = vrot.slane %v3017, 2
        %v3019 = vadd.f32 %v3017, %v3018
        %v3020 = vrot.slane %v3019, 1
        %v3021 = vadd.f32 %v3019, %v3020
        %v3022 = vsel %vm2709, %v2919, 0.0
        %v3023 = vsel %vm2709, %v2921, 0.0
        %v3024 = vadd.f32 %v3022, %v3023
        %v3025 = vrot.slane %v3024, 4
        %v3026 = vadd.f32 %v3024, %v3025
        %v3027 = vrot.slane %v3026, 2
        %v3028 = vadd.f32 %v3026, %v3027
        %v3029 = vrot.slane %v3028, 1
        %v3030 = vadd.f32 %v3028, %v3029
        %v3031 = vsel %vm2709, %v2923, 0.0
        %v3032 = vsel %vm2709, %v2925, 0.0
        %v3033 = vadd.f32 %v3031, %v3032
        %v3034 = vrot.slane %v3033, 4
        %v3035 = vadd.f32 %v3033, %v3034
        %v3036 = vrot.slane %v3035, 2
        %v3037 = vadd.f32 %v3035, %v3036
        %v3038 = vrot.slane %v3037, 1
        %v3039 = vadd.f32 %v3037, %v3038
        %v3040 = vsel %vm2709, %v2927, 0.0
        %v3041 = vsel %vm2709, %v2929, 0.0
        %v3042 = vadd.f32 %v3040, %v3041
        %v3043 = vrot.slane %v3042, 4
        %v3044 = vadd.f32 %v3042, %v3043
        %v3045 = vrot.slane %v3044, 2
        %v3046 = vadd.f32 %v3044, %v3045
        %v3047 = vrot.slane %v3046, 1
        %v3048 = vadd.f32 %v3046, %v3047
        %v3049 = vsel %vm2709, %v2931, 0.0
        %v3050 = vsel %vm2709, %v2933, 0.0
        %v3051 = vadd.f32 %v3049, %v3050
        %v3052 = vrot.slane %v3051, 4
        %v3053 = vadd.f32 %v3051, %v3052
        %v3054 = vrot.slane %v3053, 2
        %v3055 = vadd.f32 %v3053, %v3054
        %v3056 = vrot.slane %v3055, 1
        %v3057 = vadd.f32 %v3055, %v3056
        %v3058 = vsel %vm2709, %v2935, 0.0
        %v3059 = vsel %vm2709, %v2937, 0.0
        %v3060 = vadd.f32 %v3058, %v3059
        %v3061 = vrot.slane %v3060, 4
        %v3062 = vadd.f32 %v3060, %v3061
        %v3063 = vrot.slane %v3062, 2
        %v3064 = vadd.f32 %v3062, %v3063
        %v3065 = vrot.slane %v3064, 1
        %v3066 = vadd.f32 %v3064, %v3065
        %v3067 = vsel %vm2709, %v2939, 0.0
        %v3068 = vsel %vm2709, %v2941, 0.0
        %v3069 = vadd.f32 %v3067, %v3068
        %v3070 = vrot.slane %v3069, 4
        %v3071 = vadd.f32 %v3069, %v3070
        %v3072 = vrot.slane %v3071, 2
        %v3073 = vadd.f32 %v3071, %v3072
        %v3074 = vrot.slane %v3073, 1
        %v3075 = vadd.f32 %v3073, %v3074
        %v3076 = vsel %vm2709, %v2943, 0.0
        %v3077 = vsel %vm2709, %v2945, 0.0
        %v3078 = vadd.f32 %v3076, %v3077
        %v3079 = vrot.slane %v3078, 4
        %v3080 = vadd.f32 %v3078, %v3079
        %v3081 = vrot.slane %v3080, 2
        %v3082 = vadd.f32 %v3080, %v3081
        %v3083 = vrot.slane %v3082, 1
        %v3084 = vadd.f32 %v3082, %v3083
        %v3085 = vsel %vm2709, %v2947, 0.0
        %v3086 = vsel %vm2709, %v2949, 0.0
        %v3087 = vadd.f32 %v3085, %v3086
        %v3088 = vrot.slane %v3087, 4
        %v3089 = vadd.f32 %v3087, %v3088
        %v3090 = vrot.slane %v3089, 2
        %v3091 = vadd.f32 %v3089, %v3090
        %v3092 = vrot.slane %v3091, 1
        %v3093 = vadd.f32 %v3091, %v3092
        %v3094 = vrcp.pop %v2958
        %v3095 = vmul.f32 %v2887, %v3094
        %v3096 = vmul.f32 %v2889, %v3094
        %v3097 = vrcp.pop %v2967
        %v3098 = vmul.f32 %v2891, %v3097
        %v3099 = vmul.f32 %v2893, %v3097
        %v3100 = vrcp.pop %v2976
        %v3101 = vmul.f32 %v2895, %v3100
        %v3102 = vmul.f32 %v2897, %v3100
        %v3103 = vrcp.pop %v2985
        %v3104 = vmul.f32 %v2899, %v3103
        %v3105 = vmul.f32 %v2901, %v3103
        %v3106 = vrcp.pop %v2994
        %v3107 = vmul.f32 %v2903, %v3106
        %v3108 = vmul.f32 %v2905, %v3106
        %v3109 = vrcp.pop %v3003
        %v3110 = vmul.f32 %v2907, %v3109
        %v3111 = vmul.f32 %v2909, %v3109
        %v3112 = vrcp.pop %v3012
        %v3113 = vmul.f32 %v2911, %v3112
        %v3114 = vmul.f32 %v2913, %v3112
        %v3115 = vrcp.pop %v3021
        %v3116 = vmul.f32 %v2915, %v3115
        %v3117 = vmul.f32 %v2917, %v3115
        %v3118 = vrcp.pop %v3030
        %v3119 = vmul.f32 %v2919, %v3118
        %v3120 = vmul.f32 %v2921, %v3118
        %v3121 = vrcp.pop %v3039
        %v3122 = vmul.f32 %v2923, %v3121
        %v3123 = vmul.f32 %v2925, %v3121
        %v3124 = vrcp.pop %v3048
        %v3125 = vmul.f32 %v2927, %v3124
        %v3126 = vmul.f32 %v2929, %v3124
        %v3127 = vrcp.pop %v3057
        %v3128 = vmul.f32 %v2931, %v3127
        %v3129 = vmul.f32 %v2933, %v3127
        %v3130 = vrcp.pop %v3066
        %v3131 = vmul.f32 %v2935, %v3130
        %v3132 = vmul.f32 %v2937, %v3130
        %v3133 = vrcp.pop %v3075
        %v3134 = vmul.f32 %v2939, %v3133
        %v3135 = vmul.f32 %v2941, %v3133
        %v3136 = vrcp.pop %v3084
        %v3137 = vmul.f32 %v2943, %v3136
        %v3138 = vmul.f32 %v2945, %v3136
        %v3139 = vrcp.pop %v3093
        %v3140 = vmul.f32 %v2947, %v3139
        %v3141 = vmul.f32 %v2949, %v3139
        %s3142 = sld [smem:[#allocation2]]
        %v3143 = vmul.f32 %v3095, %v709
        %v3144 = vmul.f32 %v3096, %v710
        %v3145 = vmul.f32 %v3098, %v709
        %v3146 = vmul.f32 %v3099, %v710
        %v3147 = vmul.f32 %v3101, %v709
        %v3148 = vmul.f32 %v3102, %v710
        %v3149 = vmul.f32 %v3104, %v709
        %v3150 = vmul.f32 %v3105, %v710
        %v3151 = vmul.f32 %v3107, %v709
        %v3152 = vmul.f32 %v3108, %v710
        %v3153 = vmul.f32 %v3110, %v709
        %v3154 = vmul.f32 %v3111, %v710
        %v3155 = vmul.f32 %v3113, %v709
        %v3156 = vmul.f32 %v3114, %v710
        %v3157 = vmul.f32 %v3116, %v709
        %v3158 = vmul.f32 %v3117, %v710
        %v3159 = vmul.f32 %v3119, %v709
        %v3160 = vmul.f32 %v3120, %v710
        %v3161 = vmul.f32 %v3122, %v709
        %v3162 = vmul.f32 %v3123, %v710
        %v3163 = vmul.f32 %v3125, %v709
        %v3164 = vmul.f32 %v3126, %v710
        %v3165 = vmul.f32 %v3128, %v709
        %v3166 = vmul.f32 %v3129, %v710
        %v3167 = vmul.f32 %v3131, %v709
        %v3168 = vmul.f32 %v3132, %v710
        %v3169 = vmul.f32 %v3134, %v709
        %v3170 = vmul.f32 %v3135, %v710
        %v3171 = vmul.f32 %v3137, %v709
        %v3172 = vmul.f32 %v3138, %v710
        %v3173 = vmul.f32 %v3140, %v709
        %v3174 = vmul.f32 %v3141, %v710
        %v3175 = vsel %vm2709, %v3143, 0.0
        %v3176 = vsel %vm2709, %v3144, 0.0
        %v3177 = vadd.f32 %v3175, %v3176
        %v3178 = vrot.slane %v3177, 4
        %v3179 = vadd.f32 %v3177, %v3178
        %v3180 = vrot.slane %v3179, 2
        %v3181 = vadd.f32 %v3179, %v3180
        %v3182 = vrot.slane %v3181, 1
        %v3183 = vadd.f32 %v3181, %v3182
        %v3184 = vsel %vm2709, %v3145, 0.0
        %v3185 = vsel %vm2709, %v3146, 0.0
        %v3186 = vadd.f32 %v3184, %v3185
        %v3187 = vrot.slane %v3186, 4
        %v3188 = vadd.f32 %v3186, %v3187
        %v3189 = vrot.slane %v3188, 2
        %v3190 = vadd.f32 %v3188, %v3189
        %v3191 = vrot.slane %v3190, 1
        %v3192 = vadd.f32 %v3190, %v3191
        %v3193 = vsel %vm2709, %v3147, 0.0
        %v3194 = vsel %vm2709, %v3148, 0.0
        %v3195 = vadd.f32 %v3193, %v3194
        %v3196 = vrot.slane %v3195, 4
        %v3197 = vadd.f32 %v3195, %v3196
        %v3198 = vrot.slane %v3197, 2
        %v3199 = vadd.f32 %v3197, %v3198
        %v3200 = vrot.slane %v3199, 1
        %v3201 = vadd.f32 %v3199, %v3200
        %v3202 = vsel %vm2709, %v3149, 0.0
        %v3203 = vsel %vm2709, %v3150, 0.0
        %v3204 = vadd.f32 %v3202, %v3203
        %v3205 = vrot.slane %v3204, 4
        %v3206 = vadd.f32 %v3204, %v3205
        %v3207 = vrot.slane %v3206, 2
        %v3208 = vadd.f32 %v3206, %v3207
        %v3209 = vrot.slane %v3208, 1
        %v3210 = vadd.f32 %v3208, %v3209
        %v3211 = vsel %vm2709, %v3151, 0.0
        %v3212 = vsel %vm2709, %v3152, 0.0
        %v3213 = vadd.f32 %v3211, %v3212
        %v3214 = vrot.slane %v3213, 4
        %v3215 = vadd.f32 %v3213, %v3214
        %v3216 = vrot.slane %v3215, 2
        %v3217 = vadd.f32 %v3215, %v3216
        %v3218 = vrot.slane %v3217, 1
        %v3219 = vadd.f32 %v3217, %v3218
        %v3220 = vsel %vm2709, %v3153, 0.0
        %v3221 = vsel %vm2709, %v3154, 0.0
        %v3222 = vadd.f32 %v3220, %v3221
        %v3223 = vrot.slane %v3222, 4
        %v3224 = vadd.f32 %v3222, %v3223
        %v3225 = vrot.slane %v3224, 2
        %v3226 = vadd.f32 %v3224, %v3225
        %v3227 = vrot.slane %v3226, 1
        %v3228 = vadd.f32 %v3226, %v3227
        %v3229 = vsel %vm2709, %v3155, 0.0
        %v3230 = vsel %vm2709, %v3156, 0.0
        %v3231 = vadd.f32 %v3229, %v3230
        %v3232 = vrot.slane %v3231, 4
        %v3233 = vadd.f32 %v3231, %v3232
        %v3234 = vrot.slane %v3233, 2
        %v3235 = vadd.f32 %v3233, %v3234
        %v3236 = vrot.slane %v3235, 1
        %v3237 = vadd.f32 %v3235, %v3236
        %v3238 = vsel %vm2709, %v3157, 0.0
        %v3239 = vsel %vm2709, %v3158, 0.0
        %v3240 = vadd.f32 %v3238, %v3239
        %v3241 = vrot.slane %v3240, 4
        %v3242 = vadd.f32 %v3240, %v3241
        %v3243 = vrot.slane %v3242, 2
        %v3244 = vadd.f32 %v3242, %v3243
        %v3245 = vrot.slane %v3244, 1
        %v3246 = vadd.f32 %v3244, %v3245
        %v3247 = vsel %vm2709, %v3159, 0.0
        %v3248 = vsel %vm2709, %v3160, 0.0
        %v3249 = vadd.f32 %v3247, %v3248
        %v3250 = vrot.slane %v3249, 4
        %v3251 = vadd.f32 %v3249, %v3250
        %v3252 = vrot.slane %v3251, 2
        %v3253 = vadd.f32 %v3251, %v3252
        %v3254 = vrot.slane %v3253, 1
        %v3255 = vadd.f32 %v3253, %v3254
        %v3256 = vsel %vm2709, %v3161, 0.0
        %v3257 = vsel %vm2709, %v3162, 0.0
        %v3258 = vadd.f32 %v3256, %v3257
        %v3259 = vrot.slane %v3258, 4
        %v3260 = vadd.f32 %v3258, %v3259
        %v3261 = vrot.slane %v3260, 2
        %v3262 = vadd.f32 %v3260, %v3261
        %v3263 = vrot.slane %v3262, 1
        %v3264 = vadd.f32 %v3262, %v3263
        %v3265 = vsel %vm2709, %v3163, 0.0
        %v3266 = vsel %vm2709, %v3164, 0.0
        %v3267 = vadd.f32 %v3265, %v3266
        %v3268 = vrot.slane %v3267, 4
        %v3269 = vadd.f32 %v3267, %v3268
        %v3270 = vrot.slane %v3269, 2
        %v3271 = vadd.f32 %v3269, %v3270
        %v3272 = vrot.slane %v3271, 1
        %v3273 = vadd.f32 %v3271, %v3272
        %v3274 = vsel %vm2709, %v3165, 0.0
        %v3275 = vsel %vm2709, %v3166, 0.0
        %v3276 = vadd.f32 %v3274, %v3275
        %v3277 = vrot.slane %v3276, 4
        %v3278 = vadd.f32 %v3276, %v3277
        %v3279 = vrot.slane %v3278, 2
        %v3280 = vadd.f32 %v3278, %v3279
        %v3281 = vrot.slane %v3280, 1
        %v3282 = vadd.f32 %v3280, %v3281
        %v3283 = vsel %vm2709, %v3167, 0.0
        %v3284 = vsel %vm2709, %v3168, 0.0
        %v3285 = vadd.f32 %v3283, %v3284
        %v3286 = vrot.slane %v3285, 4
        %v3287 = vadd.f32 %v3285, %v3286
        %v3288 = vrot.slane %v3287, 2
        %v3289 = vadd.f32 %v3287, %v3288
        %v3290 = vrot.slane %v3289, 1
        %v3291 = vadd.f32 %v3289, %v3290
        %v3292 = vsel %vm2709, %v3169, 0.0
        %v3293 = vsel %vm2709, %v3170, 0.0
        %v3294 = vadd.f32 %v3292, %v3293
        %v3295 = vrot.slane %v3294, 4
        %v3296 = vadd.f32 %v3294, %v3295
        %v3297 = vrot.slane %v3296, 2
        %v3298 = vadd.f32 %v3296, %v3297
        %v3299 = vrot.slane %v3298, 1
        %v3300 = vadd.f32 %v3298, %v3299
        %v3301 = vsel %vm2709, %v3171, 0.0
        %v3302 = vsel %vm2709, %v3172, 0.0
        %v3303 = vadd.f32 %v3301, %v3302
        %v3304 = vrot.slane %v3303, 4
        %v3305 = vadd.f32 %v3303, %v3304
        %v3306 = vrot.slane %v3305, 2
        %v3307 = vadd.f32 %v3305, %v3306
        %v3308 = vrot.slane %v3307, 1
        %v3309 = vadd.f32 %v3307, %v3308
        %v3310 = vsel %vm2709, %v3173, 0.0
        %v3311 = vsel %vm2709, %v3174, 0.0
        %v3312 = vadd.f32 %v3310, %v3311
        %v3313 = vrot.slane %v3312, 4
        %v3314 = vadd.f32 %v3312, %v3313
        %v3315 = vrot.slane %v3314, 2
        %v3316 = vadd.f32 %v3314, %v3315
        %v3317 = vrot.slane %v3316, 1
        %v3318 = vadd.f32 %v3316, %v3317
        %v3319 = vstv %s3142
        %v3320 = vmul.f32 %v3319, %v3183
        %v3321 = vmul.f32 %v3319, %v3192
        %v3322 = vmul.f32 %v3319, %v3201
        %v3323 = vmul.f32 %v3319, %v3210
        %v3324 = vmul.f32 %v3319, %v3219
        %v3325 = vmul.f32 %v3319, %v3228
        %v3326 = vmul.f32 %v3319, %v3237
        %v3327 = vmul.f32 %v3319, %v3246
        %v3328 = vmul.f32 %v3319, %v3255
        %v3329 = vmul.f32 %v3319, %v3264
        %v3330 = vmul.f32 %v3319, %v3273
        %v3331 = vmul.f32 %v3319, %v3282
        %v3332 = vmul.f32 %v3319, %v3291
        %v3333 = vmul.f32 %v3319, %v3300
        %v3334 = vmul.f32 %v3319, %v3309
        %v3335 = vmul.f32 %v3319, %v3318
        %v3338 = vrot.slane %v261, 1
        %v3339 = vrot.slane %v261, 2
        %v3340 = vrot.slane %v261, 3
        %v3341 = vrot.slane %v261, 4
        %v3342 = vrot.slane %v261, 5
        %v3343 = vrot.slane %v261, 6
        %v3344 = vrot.slane %v261, 7
        %v3345 = vrot.slane %v262, 1
        %v3346 = vrot.slane %v262, 2
        %v3347 = vrot.slane %v262, 3
        %v3348 = vrot.slane %v262, 4
        %v3349 = vrot.slane %v262, 5
        %v3350 = vrot.slane %v262, 6
        %v3351 = vrot.slane %v262, 7
        %v3368 = vadd.f32 %v3320, %v261
        %v3369 = vadd.f32 %v3321, %v3338
        %v3370 = vadd.f32 %v3322, %v3339
        %v3371 = vadd.f32 %v3323, %v3340
        %v3372 = vadd.f32 %v3324, %v3341
        %v3373 = vadd.f32 %v3325, %v3342
        %v3374 = vadd.f32 %v3326, %v3343
        %v3375 = vadd.f32 %v3327, %v3344
        %v3376 = vadd.f32 %v3328, %v262
        %v3377 = vadd.f32 %v3329, %v3345
        %v3378 = vadd.f32 %v3330, %v3346
        %v3379 = vadd.f32 %v3331, %v3347
        %v3380 = vadd.f32 %v3332, %v3348
        %v3381 = vadd.f32 %v3333, %v3349
        %v3382 = vadd.f32 %v3334, %v3350
        %v3383 = vadd.f32 %v3335, %v3351
        %v3400 = vrot.slane %v3369, 7
        %vm3401 = vcmask 1041409
        %v3402 = vsel %vm3401, %v3400, %v3368
        %v3403 = vrot.slane %v3370, 6
        %vm3404 = vcmask 1042434
        %v3405 = vsel %vm3404, %v3403, %v3402
        %v3406 = vrot.slane %v3371, 5
        %vm3407 = vcmask 1043459
        %v3408 = vsel %vm3407, %v3406, %v3405
        %v3409 = vrot.slane %v3372, 4
        %vm3410 = vcmask 1044484
        %v3411 = vsel %vm3410, %v3409, %v3408
        %v3412 = vrot.slane %v3373, 3
        %vm3413 = vcmask 1045509
        %v3414 = vsel %vm3413, %v3412, %v3411
        %v3415 = vrot.slane %v3374, 2
        %vm3416 = vcmask 1046534
        %v3417 = vsel %vm3416, %v3415, %v3414
        %v3418 = vrot.slane %v3375, 1
        %vm3419 = vcmask 1047559
        %v3420 = vsel %vm3419, %v3418, %v3417
        %v3421 = vrot.slane %v3377, 7
        %v3422 = vsel %vm3401, %v3421, %v3376
        %v3423 = vrot.slane %v3378, 6
        %v3424 = vsel %vm3404, %v3423, %v3422
        %v3425 = vrot.slane %v3379, 5
        %v3426 = vsel %vm3407, %v3425, %v3424
        %v3427 = vrot.slane %v3380, 4
        %v3428 = vsel %vm3410, %v3427, %v3426
        %v3429 = vrot.slane %v3381, 3
        %v3430 = vsel %vm3413, %v3429, %v3428
        %v3431 = vrot.slane %v3382, 2
        %v3432 = vsel %vm3416, %v3431, %v3430
        %v3433 = vrot.slane %v3383, 1
        %v3434 = vsel %vm3419, %v3433, %v3432
        %3437 = vst.msk [vmem:[%s260] sm:$0xff] %vm2709, %v3420
        %3438 = vst.msk [vmem:[%s260 + $0x8] sm:$0xff] %vm2709, %v3434
        %v3439 = vmul.f32 %v3095, %v735
        %v3440 = vmul.f32 %v3096, %v736
        %v3441 = vmul.f32 %v3098, %v735
        %v3442 = vmul.f32 %v3099, %v736
        %v3443 = vmul.f32 %v3101, %v735
        %v3444 = vmul.f32 %v3102, %v736
        %v3445 = vmul.f32 %v3104, %v735
        %v3446 = vmul.f32 %v3105, %v736
        %v3447 = vmul.f32 %v3107, %v735
        %v3448 = vmul.f32 %v3108, %v736
        %v3449 = vmul.f32 %v3110, %v735
        %v3450 = vmul.f32 %v3111, %v736
        %v3451 = vmul.f32 %v3113, %v735
        %v3452 = vmul.f32 %v3114, %v736
        %v3453 = vmul.f32 %v3116, %v735
        %v3454 = vmul.f32 %v3117, %v736
        %v3455 = vmul.f32 %v3119, %v735
        %v3456 = vmul.f32 %v3120, %v736
        %v3457 = vmul.f32 %v3122, %v735
        %v3458 = vmul.f32 %v3123, %v736
        %v3459 = vmul.f32 %v3125, %v735
        %v3460 = vmul.f32 %v3126, %v736
        %v3461 = vmul.f32 %v3128, %v735
        %v3462 = vmul.f32 %v3129, %v736
        %v3463 = vmul.f32 %v3131, %v735
        %v3464 = vmul.f32 %v3132, %v736
        %v3465 = vmul.f32 %v3134, %v735
        %v3466 = vmul.f32 %v3135, %v736
        %v3467 = vmul.f32 %v3137, %v735
        %v3468 = vmul.f32 %v3138, %v736
        %v3469 = vmul.f32 %v3140, %v735
        %v3470 = vmul.f32 %v3141, %v736
        %v3471 = vsel %vm2709, %v3439, 0.0
        %v3472 = vsel %vm2709, %v3440, 0.0
        %v3473 = vadd.f32 %v3471, %v3472
        %v3474 = vrot.slane %v3473, 4
        %v3475 = vadd.f32 %v3473, %v3474
        %v3476 = vrot.slane %v3475, 2
        %v3477 = vadd.f32 %v3475, %v3476
        %v3478 = vrot.slane %v3477, 1
        %v3479 = vadd.f32 %v3477, %v3478
        %v3480 = vsel %vm2709, %v3441, 0.0
        %v3481 = vsel %vm2709, %v3442, 0.0
        %v3482 = vadd.f32 %v3480, %v3481
        %v3483 = vrot.slane %v3482, 4
        %v3484 = vadd.f32 %v3482, %v3483
        %v3485 = vrot.slane %v3484, 2
        %v3486 = vadd.f32 %v3484, %v3485
        %v3487 = vrot.slane %v3486, 1
        %v3488 = vadd.f32 %v3486, %v3487
        %v3489 = vsel %vm2709, %v3443, 0.0
        %v3490 = vsel %vm2709, %v3444, 0.0
        %v3491 = vadd.f32 %v3489, %v3490
        %v3492 = vrot.slane %v3491, 4
        %v3493 = vadd.f32 %v3491, %v3492
        %v3494 = vrot.slane %v3493, 2
        %v3495 = vadd.f32 %v3493, %v3494
        %v3496 = vrot.slane %v3495, 1
        %v3497 = vadd.f32 %v3495, %v3496
        %v3498 = vsel %vm2709, %v3445, 0.0
        %v3499 = vsel %vm2709, %v3446, 0.0
        %v3500 = vadd.f32 %v3498, %v3499
        %v3501 = vrot.slane %v3500, 4
        %v3502 = vadd.f32 %v3500, %v3501
        %v3503 = vrot.slane %v3502, 2
        %v3504 = vadd.f32 %v3502, %v3503
        %v3505 = vrot.slane %v3504, 1
        %v3506 = vadd.f32 %v3504, %v3505
        %v3507 = vsel %vm2709, %v3447, 0.0
        %v3508 = vsel %vm2709, %v3448, 0.0
        %v3509 = vadd.f32 %v3507, %v3508
        %v3510 = vrot.slane %v3509, 4
        %v3511 = vadd.f32 %v3509, %v3510
        %v3512 = vrot.slane %v3511, 2
        %v3513 = vadd.f32 %v3511, %v3512
        %v3514 = vrot.slane %v3513, 1
        %v3515 = vadd.f32 %v3513, %v3514
        %v3516 = vsel %vm2709, %v3449, 0.0
        %v3517 = vsel %vm2709, %v3450, 0.0
        %v3518 = vadd.f32 %v3516, %v3517
        %v3519 = vrot.slane %v3518, 4
        %v3520 = vadd.f32 %v3518, %v3519
        %v3521 = vrot.slane %v3520, 2
        %v3522 = vadd.f32 %v3520, %v3521
        %v3523 = vrot.slane %v3522, 1
        %v3524 = vadd.f32 %v3522, %v3523
        %v3525 = vsel %vm2709, %v3451, 0.0
        %v3526 = vsel %vm2709, %v3452, 0.0
        %v3527 = vadd.f32 %v3525, %v3526
        %v3528 = vrot.slane %v3527, 4
        %v3529 = vadd.f32 %v3527, %v3528
        %v3530 = vrot.slane %v3529, 2
        %v3531 = vadd.f32 %v3529, %v3530
        %v3532 = vrot.slane %v3531, 1
        %v3533 = vadd.f32 %v3531, %v3532
        %v3534 = vsel %vm2709, %v3453, 0.0
        %v3535 = vsel %vm2709, %v3454, 0.0
        %v3536 = vadd.f32 %v3534, %v3535
        %v3537 = vrot.slane %v3536, 4
        %v3538 = vadd.f32 %v3536, %v3537
        %v3539 = vrot.slane %v3538, 2
        %v3540 = vadd.f32 %v3538, %v3539
        %v3541 = vrot.slane %v3540, 1
        %v3542 = vadd.f32 %v3540, %v3541
        %v3543 = vsel %vm2709, %v3455, 0.0
        %v3544 = vsel %vm2709, %v3456, 0.0
        %v3545 = vadd.f32 %v3543, %v3544
        %v3546 = vrot.slane %v3545, 4
        %v3547 = vadd.f32 %v3545, %v3546
        %v3548 = vrot.slane %v3547, 2
        %v3549 = vadd.f32 %v3547, %v3548
        %v3550 = vrot.slane %v3549, 1
        %v3551 = vadd.f32 %v3549, %v3550
        %v3552 = vsel %vm2709, %v3457, 0.0
        %v3553 = vsel %vm2709, %v3458, 0.0
        %v3554 = vadd.f32 %v3552, %v3553
        %v3555 = vrot.slane %v3554, 4
        %v3556 = vadd.f32 %v3554, %v3555
        %v3557 = vrot.slane %v3556, 2
        %v3558 = vadd.f32 %v3556, %v3557
        %v3559 = vrot.slane %v3558, 1
        %v3560 = vadd.f32 %v3558, %v3559
        %v3561 = vsel %vm2709, %v3459, 0.0
        %v3562 = vsel %vm2709, %v3460, 0.0
        %v3563 = vadd.f32 %v3561, %v3562
        %v3564 = vrot.slane %v3563, 4
        %v3565 = vadd.f32 %v3563, %v3564
        %v3566 = vrot.slane %v3565, 2
        %v3567 = vadd.f32 %v3565, %v3566
        %v3568 = vrot.slane %v3567, 1
        %v3569 = vadd.f32 %v3567, %v3568
        %v3570 = vsel %vm2709, %v3461, 0.0
        %v3571 = vsel %vm2709, %v3462, 0.0
        %v3572 = vadd.f32 %v3570, %v3571
        %v3573 = vrot.slane %v3572, 4
        %v3574 = vadd.f32 %v3572, %v3573
        %v3575 = vrot.slane %v3574, 2
        %v3576 = vadd.f32 %v3574, %v3575
        %v3577 = vrot.slane %v3576, 1
        %v3578 = vadd.f32 %v3576, %v3577
        %v3579 = vsel %vm2709, %v3463, 0.0
        %v3580 = vsel %vm2709, %v3464, 0.0
        %v3581 = vadd.f32 %v3579, %v3580
        %v3582 = vrot.slane %v3581, 4
        %v3583 = vadd.f32 %v3581, %v3582
        %v3584 = vrot.slane %v3583, 2
        %v3585 = vadd.f32 %v3583, %v3584
        %v3586 = vrot.slane %v3585, 1
        %v3587 = vadd.f32 %v3585, %v3586
        %v3588 = vsel %vm2709, %v3465, 0.0
        %v3589 = vsel %vm2709, %v3466, 0.0
        %v3590 = vadd.f32 %v3588, %v3589
        %v3591 = vrot.slane %v3590, 4
        %v3592 = vadd.f32 %v3590, %v3591
        %v3593 = vrot.slane %v3592, 2
        %v3594 = vadd.f32 %v3592, %v3593
        %v3595 = vrot.slane %v3594, 1
        %v3596 = vadd.f32 %v3594, %v3595
        %v3597 = vsel %vm2709, %v3467, 0.0
        %v3598 = vsel %vm2709, %v3468, 0.0
        %v3599 = vadd.f32 %v3597, %v3598
        %v3600 = vrot.slane %v3599, 4
        %v3601 = vadd.f32 %v3599, %v3600
        %v3602 = vrot.slane %v3601, 2
        %v3603 = vadd.f32 %v3601, %v3602
        %v3604 = vrot.slane %v3603, 1
        %v3605 = vadd.f32 %v3603, %v3604
        %v3606 = vsel %vm2709, %v3469, 0.0
        %v3607 = vsel %vm2709, %v3470, 0.0
        %v3608 = vadd.f32 %v3606, %v3607
        %v3609 = vrot.slane %v3608, 4
        %v3610 = vadd.f32 %v3608, %v3609
        %v3611 = vrot.slane %v3610, 2
        %v3612 = vadd.f32 %v3610, %v3611
        %v3613 = vrot.slane %v3612, 1
        %v3614 = vadd.f32 %v3612, %v3613
        %v3615 = vmul.f32 %v3319, %v3479
        %v3616 = vmul.f32 %v3319, %v3488
        %v3617 = vmul.f32 %v3319, %v3497
        %v3618 = vmul.f32 %v3319, %v3506
        %v3619 = vmul.f32 %v3319, %v3515
        %v3620 = vmul.f32 %v3319, %v3524
        %v3621 = vmul.f32 %v3319, %v3533
        %v3622 = vmul.f32 %v3319, %v3542
        %v3623 = vmul.f32 %v3319, %v3551
        %v3624 = vmul.f32 %v3319, %v3560
        %v3625 = vmul.f32 %v3319, %v3569
        %v3626 = vmul.f32 %v3319, %v3578
        %v3627 = vmul.f32 %v3319, %v3587
        %v3628 = vmul.f32 %v3319, %v3596
        %v3629 = vmul.f32 %v3319, %v3605
        %v3630 = vmul.f32 %v3319, %v3614
        %v3633 = vrot.slane %v263, 1
        %v3634 = vrot.slane %v263, 2
        %v3635 = vrot.slane %v263, 3
        %v3636 = vrot.slane %v263, 4
        %v3637 = vrot.slane %v263, 5
        %v3638 = vrot.slane %v263, 6
        %v3639 = vrot.slane %v263, 7
        %v3640 = vrot.slane %v264, 1
        %v3641 = vrot.slane %v264, 2
        %v3642 = vrot.slane %v264, 3
        %v3643 = vrot.slane %v264, 4
        %v3644 = vrot.slane %v264, 5
        %v3645 = vrot.slane %v264, 6
        %v3646 = vrot.slane %v264, 7
        %v3663 = vadd.f32 %v3615, %v263
        %v3664 = vadd.f32 %v3616, %v3633
        %v3665 = vadd.f32 %v3617, %v3634
        %v3666 = vadd.f32 %v3618, %v3635
        %v3667 = vadd.f32 %v3619, %v3636
        %v3668 = vadd.f32 %v3620, %v3637
        %v3669 = vadd.f32 %v3621, %v3638
        %v3670 = vadd.f32 %v3622, %v3639
        %v3671 = vadd.f32 %v3623, %v264
        %v3672 = vadd.f32 %v3624, %v3640
        %v3673 = vadd.f32 %v3625, %v3641
        %v3674 = vadd.f32 %v3626, %v3642
        %v3675 = vadd.f32 %v3627, %v3643
        %v3676 = vadd.f32 %v3628, %v3644
        %v3677 = vadd.f32 %v3629, %v3645
        %v3678 = vadd.f32 %v3630, %v3646
        %v3695 = vrot.slane %v3664, 7
        %v3696 = vsel %vm3401, %v3695, %v3663
        %v3697 = vrot.slane %v3665, 6
        %v3698 = vsel %vm3404, %v3697, %v3696
        %v3699 = vrot.slane %v3666, 5
        %v3700 = vsel %vm3407, %v3699, %v3698
        %v3701 = vrot.slane %v3667, 4
        %v3702 = vsel %vm3410, %v3701, %v3700
        %v3703 = vrot.slane %v3668, 3
        %v3704 = vsel %vm3413, %v3703, %v3702
        %v3705 = vrot.slane %v3669, 2
        %v3706 = vsel %vm3416, %v3705, %v3704
        %v3707 = vrot.slane %v3670, 1
        %v3708 = vsel %vm3419, %v3707, %v3706
        %v3709 = vrot.slane %v3672, 7
        %v3710 = vsel %vm3401, %v3709, %v3671
        %v3711 = vrot.slane %v3673, 6
        %v3712 = vsel %vm3404, %v3711, %v3710
        %v3713 = vrot.slane %v3674, 5
        %v3714 = vsel %vm3407, %v3713, %v3712
        %v3715 = vrot.slane %v3675, 4
        %v3716 = vsel %vm3410, %v3715, %v3714
        %v3717 = vrot.slane %v3676, 3
        %v3718 = vsel %vm3413, %v3717, %v3716
        %v3719 = vrot.slane %v3677, 2
        %v3720 = vsel %vm3416, %v3719, %v3718
        %v3721 = vrot.slane %v3678, 1
        %v3722 = vsel %vm3419, %v3721, %v3720
        %s3725 = scalar_lea.vmem %s260, 16 [#allocation10]
        %3726 = vst.msk [vmem:[%s3725] sm:$0xff] %vm2709, %v3708
        %3727 = vst.msk [vmem:[%s3725 + $0x8] sm:$0xff] %vm2709, %v3722
        %v3728 = vmul.f32 %v3095, %v761
        %v3729 = vmul.f32 %v3096, %v762
        %v3730 = vmul.f32 %v3098, %v761
        %v3731 = vmul.f32 %v3099, %v762
        %v3732 = vmul.f32 %v3101, %v761
        %v3733 = vmul.f32 %v3102, %v762
        %v3734 = vmul.f32 %v3104, %v761
        %v3735 = vmul.f32 %v3105, %v762
        %v3736 = vmul.f32 %v3107, %v761
        %v3737 = vmul.f32 %v3108, %v762
        %v3738 = vmul.f32 %v3110, %v761
        %v3739 = vmul.f32 %v3111, %v762
        %v3740 = vmul.f32 %v3113, %v761
        %v3741 = vmul.f32 %v3114, %v762
        %v3742 = vmul.f32 %v3116, %v761
        %v3743 = vmul.f32 %v3117, %v762
        %v3744 = vmul.f32 %v3119, %v761
        %v3745 = vmul.f32 %v3120, %v762
        %v3746 = vmul.f32 %v3122, %v761
        %v3747 = vmul.f32 %v3123, %v762
        %v3748 = vmul.f32 %v3125, %v761
        %v3749 = vmul.f32 %v3126, %v762
        %v3750 = vmul.f32 %v3128, %v761
        %v3751 = vmul.f32 %v3129, %v762
        %v3752 = vmul.f32 %v3131, %v761
        %v3753 = vmul.f32 %v3132, %v762
        %v3754 = vmul.f32 %v3134, %v761
        %v3755 = vmul.f32 %v3135, %v762
        %v3756 = vmul.f32 %v3137, %v761
        %v3757 = vmul.f32 %v3138, %v762
        %v3758 = vmul.f32 %v3140, %v761
        %v3759 = vmul.f32 %v3141, %v762
        %v3760 = vsel %vm2709, %v3728, 0.0
        %v3761 = vsel %vm2709, %v3729, 0.0
        %v3762 = vadd.f32 %v3760, %v3761
        %v3763 = vrot.slane %v3762, 4
        %v3764 = vadd.f32 %v3762, %v3763
        %v3765 = vrot.slane %v3764, 2
        %v3766 = vadd.f32 %v3764, %v3765
        %v3767 = vrot.slane %v3766, 1
        %v3768 = vadd.f32 %v3766, %v3767
        %v3769 = vsel %vm2709, %v3730, 0.0
        %v3770 = vsel %vm2709, %v3731, 0.0
        %v3771 = vadd.f32 %v3769, %v3770
        %v3772 = vrot.slane %v3771, 4
        %v3773 = vadd.f32 %v3771, %v3772
        %v3774 = vrot.slane %v3773, 2
        %v3775 = vadd.f32 %v3773, %v3774
        %v3776 = vrot.slane %v3775, 1
        %v3777 = vadd.f32 %v3775, %v3776
        %v3778 = vsel %vm2709, %v3732, 0.0
        %v3779 = vsel %vm2709, %v3733, 0.0
        %v3780 = vadd.f32 %v3778, %v3779
        %v3781 = vrot.slane %v3780, 4
        %v3782 = vadd.f32 %v3780, %v3781
        %v3783 = vrot.slane %v3782, 2
        %v3784 = vadd.f32 %v3782, %v3783
        %v3785 = vrot.slane %v3784, 1
        %v3786 = vadd.f32 %v3784, %v3785
        %v3787 = vsel %vm2709, %v3734, 0.0
        %v3788 = vsel %vm2709, %v3735, 0.0
        %v3789 = vadd.f32 %v3787, %v3788
        %v3790 = vrot.slane %v3789, 4
        %v3791 = vadd.f32 %v3789, %v3790
        %v3792 = vrot.slane %v3791, 2
        %v3793 = vadd.f32 %v3791, %v3792
        %v3794 = vrot.slane %v3793, 1
        %v3795 = vadd.f32 %v3793, %v3794
        %v3796 = vsel %vm2709, %v3736, 0.0
        %v3797 = vsel %vm2709, %v3737, 0.0
        %v3798 = vadd.f32 %v3796, %v3797
        %v3799 = vrot.slane %v3798, 4
        %v3800 = vadd.f32 %v3798, %v3799
        %v3801 = vrot.slane %v3800, 2
        %v3802 = vadd.f32 %v3800, %v3801
        %v3803 = vrot.slane %v3802, 1
        %v3804 = vadd.f32 %v3802, %v3803
        %v3805 = vsel %vm2709, %v3738, 0.0
        %v3806 = vsel %vm2709, %v3739, 0.0
        %v3807 = vadd.f32 %v3805, %v3806
        %v3808 = vrot.slane %v3807, 4
        %v3809 = vadd.f32 %v3807, %v3808
        %v3810 = vrot.slane %v3809, 2
        %v3811 = vadd.f32 %v3809, %v3810
        %v3812 = vrot.slane %v3811, 1
        %v3813 = vadd.f32 %v3811, %v3812
        %v3814 = vsel %vm2709, %v3740, 0.0
        %v3815 = vsel %vm2709, %v3741, 0.0
        %v3816 = vadd.f32 %v3814, %v3815
        %v3817 = vrot.slane %v3816, 4
        %v3818 = vadd.f32 %v3816, %v3817
        %v3819 = vrot.slane %v3818, 2
        %v3820 = vadd.f32 %v3818, %v3819
        %v3821 = vrot.slane %v3820, 1
        %v3822 = vadd.f32 %v3820, %v3821
        %v3823 = vsel %vm2709, %v3742, 0.0
        %v3824 = vsel %vm2709, %v3743, 0.0
        %v3825 = vadd.f32 %v3823, %v3824
        %v3826 = vrot.slane %v3825, 4
        %v3827 = vadd.f32 %v3825, %v3826
        %v3828 = vrot.slane %v3827, 2
        %v3829 = vadd.f32 %v3827, %v3828
        %v3830 = vrot.slane %v3829, 1
        %v3831 = vadd.f32 %v3829, %v3830
        %v3832 = vsel %vm2709, %v3744, 0.0
        %v3833 = vsel %vm2709, %v3745, 0.0
        %v3834 = vadd.f32 %v3832, %v3833
        %v3835 = vrot.slane %v3834, 4
        %v3836 = vadd.f32 %v3834, %v3835
        %v3837 = vrot.slane %v3836, 2
        %v3838 = vadd.f32 %v3836, %v3837
        %v3839 = vrot.slane %v3838, 1
        %v3840 = vadd.f32 %v3838, %v3839
        %v3841 = vsel %vm2709, %v3746, 0.0
        %v3842 = vsel %vm2709, %v3747, 0.0
        %v3843 = vadd.f32 %v3841, %v3842
        %v3844 = vrot.slane %v3843, 4
        %v3845 = vadd.f32 %v3843, %v3844
        %v3846 = vrot.slane %v3845, 2
        %v3847 = vadd.f32 %v3845, %v3846
        %v3848 = vrot.slane %v3847, 1
        %v3849 = vadd.f32 %v3847, %v3848
        %v3850 = vsel %vm2709, %v3748, 0.0
        %v3851 = vsel %vm2709, %v3749, 0.0
        %v3852 = vadd.f32 %v3850, %v3851
        %v3853 = vrot.slane %v3852, 4
        %v3854 = vadd.f32 %v3852, %v3853
        %v3855 = vrot.slane %v3854, 2
        %v3856 = vadd.f32 %v3854, %v3855
        %v3857 = vrot.slane %v3856, 1
        %v3858 = vadd.f32 %v3856, %v3857
        %v3859 = vsel %vm2709, %v3750, 0.0
        %v3860 = vsel %vm2709, %v3751, 0.0
        %v3861 = vadd.f32 %v3859, %v3860
        %v3862 = vrot.slane %v3861, 4
        %v3863 = vadd.f32 %v3861, %v3862
        %v3864 = vrot.slane %v3863, 2
        %v3865 = vadd.f32 %v3863, %v3864
        %v3866 = vrot.slane %v3865, 1
        %v3867 = vadd.f32 %v3865, %v3866
        %v3868 = vsel %vm2709, %v3752, 0.0
        %v3869 = vsel %vm2709, %v3753, 0.0
        %v3870 = vadd.f32 %v3868, %v3869
        %v3871 = vrot.slane %v3870, 4
        %v3872 = vadd.f32 %v3870, %v3871
        %v3873 = vrot.slane %v3872, 2
        %v3874 = vadd.f32 %v3872, %v3873
        %v3875 = vrot.slane %v3874, 1
        %v3876 = vadd.f32 %v3874, %v3875
        %v3877 = vsel %vm2709, %v3754, 0.0
        %v3878 = vsel %vm2709, %v3755, 0.0
        %v3879 = vadd.f32 %v3877, %v3878
        %v3880 = vrot.slane %v3879, 4
        %v3881 = vadd.f32 %v3879, %v3880
        %v3882 = vrot.slane %v3881, 2
        %v3883 = vadd.f32 %v3881, %v3882
        %v3884 = vrot.slane %v3883, 1
        %v3885 = vadd.f32 %v3883, %v3884
        %v3886 = vsel %vm2709, %v3756, 0.0
        %v3887 = vsel %vm2709, %v3757, 0.0
        %v3888 = vadd.f32 %v3886, %v3887
        %v3889 = vrot.slane %v3888, 4
        %v3890 = vadd.f32 %v3888, %v3889
        %v3891 = vrot.slane %v3890, 2
        %v3892 = vadd.f32 %v3890, %v3891
        %v3893 = vrot.slane %v3892, 1
        %v3894 = vadd.f32 %v3892, %v3893
        %v3895 = vsel %vm2709, %v3758, 0.0
        %v3896 = vsel %vm2709, %v3759, 0.0
        %v3897 = vadd.f32 %v3895, %v3896
        %v3898 = vrot.slane %v3897, 4
        %v3899 = vadd.f32 %v3897, %v3898
        %v3900 = vrot.slane %v3899, 2
        %v3901 = vadd.f32 %v3899, %v3900
        %v3902 = vrot.slane %v3901, 1
        %v3903 = vadd.f32 %v3901, %v3902
        %v3904 = vmul.f32 %v3319, %v3768
        %v3905 = vmul.f32 %v3319, %v3777
        %v3906 = vmul.f32 %v3319, %v3786
        %v3907 = vmul.f32 %v3319, %v3795
        %v3908 = vmul.f32 %v3319, %v3804
        %v3909 = vmul.f32 %v3319, %v3813
        %v3910 = vmul.f32 %v3319, %v3822
        %v3911 = vmul.f32 %v3319, %v3831
        %v3912 = vmul.f32 %v3319, %v3840
        %v3913 = vmul.f32 %v3319, %v3849
        %v3914 = vmul.f32 %v3319, %v3858
        %v3915 = vmul.f32 %v3319, %v3867
        %v3916 = vmul.f32 %v3319, %v3876
        %v3917 = vmul.f32 %v3319, %v3885
        %v3918 = vmul.f32 %v3319, %v3894
        %v3919 = vmul.f32 %v3319, %v3903
        %v3922 = vrot.slane %v265, 1
        %v3923 = vrot.slane %v265, 2
        %v3924 = vrot.slane %v265, 3
        %v3925 = vrot.slane %v265, 4
        %v3926 = vrot.slane %v265, 5
        %v3927 = vrot.slane %v265, 6
        %v3928 = vrot.slane %v265, 7
        %v3929 = vrot.slane %v266, 1
        %v3930 = vrot.slane %v266, 2
        %v3931 = vrot.slane %v266, 3
        %v3932 = vrot.slane %v266, 4
        %v3933 = vrot.slane %v266, 5
        %v3934 = vrot.slane %v266, 6
        %v3935 = vrot.slane %v266, 7
        %v3952 = vadd.f32 %v3904, %v265
        %v3953 = vadd.f32 %v3905, %v3922
        %v3954 = vadd.f32 %v3906, %v3923
        %v3955 = vadd.f32 %v3907, %v3924
        %v3956 = vadd.f32 %v3908, %v3925
        %v3957 = vadd.f32 %v3909, %v3926
        %v3958 = vadd.f32 %v3910, %v3927
        %v3959 = vadd.f32 %v3911, %v3928
        %v3960 = vadd.f32 %v3912, %v266
        %v3961 = vadd.f32 %v3913, %v3929
        %v3962 = vadd.f32 %v3914, %v3930
        %v3963 = vadd.f32 %v3915, %v3931
        %v3964 = vadd.f32 %v3916, %v3932
        %v3965 = vadd.f32 %v3917, %v3933
        %v3966 = vadd.f32 %v3918, %v3934
        %v3967 = vadd.f32 %v3919, %v3935
        %v3984 = vrot.slane %v3953, 7
        %v3985 = vsel %vm3401, %v3984, %v3952
        %v3986 = vrot.slane %v3954, 6
        %v3987 = vsel %vm3404, %v3986, %v3985
        %v3988 = vrot.slane %v3955, 5
        %v3989 = vsel %vm3407, %v3988, %v3987
        %v3990 = vrot.slane %v3956, 4
        %v3991 = vsel %vm3410, %v3990, %v3989
        %v3992 = vrot.slane %v3957, 3
        %v3993 = vsel %vm3413, %v3992, %v3991
        %v3994 = vrot.slane %v3958, 2
        %v3995 = vsel %vm3416, %v3994, %v3993
        %v3996 = vrot.slane %v3959, 1
        %v3997 = vsel %vm3419, %v3996, %v3995
        %v3998 = vrot.slane %v3961, 7
        %v3999 = vsel %vm3401, %v3998, %v3960
        %v4000 = vrot.slane %v3962, 6
        %v4001 = vsel %vm3404, %v4000, %v3999
        %v4002 = vrot.slane %v3963, 5
        %v4003 = vsel %vm3407, %v4002, %v4001
        %v4004 = vrot.slane %v3964, 4
        %v4005 = vsel %vm3410, %v4004, %v4003
        %v4006 = vrot.slane %v3965, 3
        %v4007 = vsel %vm3413, %v4006, %v4005
        %v4008 = vrot.slane %v3966, 2
        %v4009 = vsel %vm3416, %v4008, %v4007
        %v4010 = vrot.slane %v3967, 1
        %v4011 = vsel %vm3419, %v4010, %v4009
        %s4014 = scalar_lea.vmem %s260, 32 [#allocation10]
        %4015 = vst.msk [vmem:[%s4014] sm:$0xff] %vm2709, %v3997
        %4016 = vst.msk [vmem:[%s4014 + $0x8] sm:$0xff] %vm2709, %v4011
        %v4017 = vmul.f32 %v3095, %v787
        %v4018 = vmul.f32 %v3096, %v788
        %v4019 = vmul.f32 %v3098, %v787
        %v4020 = vmul.f32 %v3099, %v788
        %v4021 = vmul.f32 %v3101, %v787
        %v4022 = vmul.f32 %v3102, %v788
        %v4023 = vmul.f32 %v3104, %v787
        %v4024 = vmul.f32 %v3105, %v788
        %v4025 = vmul.f32 %v3107, %v787
        %v4026 = vmul.f32 %v3108, %v788
        %v4027 = vmul.f32 %v3110, %v787
        %v4028 = vmul.f32 %v3111, %v788
        %v4029 = vmul.f32 %v3113, %v787
        %v4030 = vmul.f32 %v3114, %v788
        %v4031 = vmul.f32 %v3116, %v787
        %v4032 = vmul.f32 %v3117, %v788
        %v4033 = vmul.f32 %v3119, %v787
        %v4034 = vmul.f32 %v3120, %v788
        %v4035 = vmul.f32 %v3122, %v787
        %v4036 = vmul.f32 %v3123, %v788
        %v4037 = vmul.f32 %v3125, %v787
        %v4038 = vmul.f32 %v3126, %v788
        %v4039 = vmul.f32 %v3128, %v787
        %v4040 = vmul.f32 %v3129, %v788
        %v4041 = vmul.f32 %v3131, %v787
        %v4042 = vmul.f32 %v3132, %v788
        %v4043 = vmul.f32 %v3134, %v787
        %v4044 = vmul.f32 %v3135, %v788
        %v4045 = vmul.f32 %v3137, %v787
        %v4046 = vmul.f32 %v3138, %v788
        %v4047 = vmul.f32 %v3140, %v787
        %v4048 = vmul.f32 %v3141, %v788
        %v4049 = vsel %vm2709, %v4017, 0.0
        %v4050 = vsel %vm2709, %v4018, 0.0
        %v4051 = vadd.f32 %v4049, %v4050
        %v4052 = vrot.slane %v4051, 4
        %v4053 = vadd.f32 %v4051, %v4052
        %v4054 = vrot.slane %v4053, 2
        %v4055 = vadd.f32 %v4053, %v4054
        %v4056 = vrot.slane %v4055, 1
        %v4057 = vadd.f32 %v4055, %v4056
        %v4058 = vsel %vm2709, %v4019, 0.0
        %v4059 = vsel %vm2709, %v4020, 0.0
        %v4060 = vadd.f32 %v4058, %v4059
        %v4061 = vrot.slane %v4060, 4
        %v4062 = vadd.f32 %v4060, %v4061
        %v4063 = vrot.slane %v4062, 2
        %v4064 = vadd.f32 %v4062, %v4063
        %v4065 = vrot.slane %v4064, 1
        %v4066 = vadd.f32 %v4064, %v4065
        %v4067 = vsel %vm2709, %v4021, 0.0
        %v4068 = vsel %vm2709, %v4022, 0.0
        %v4069 = vadd.f32 %v4067, %v4068
        %v4070 = vrot.slane %v4069, 4
        %v4071 = vadd.f32 %v4069, %v4070
        %v4072 = vrot.slane %v4071, 2
        %v4073 = vadd.f32 %v4071, %v4072
        %v4074 = vrot.slane %v4073, 1
        %v4075 = vadd.f32 %v4073, %v4074
        %v4076 = vsel %vm2709, %v4023, 0.0
        %v4077 = vsel %vm2709, %v4024, 0.0
        %v4078 = vadd.f32 %v4076, %v4077
        %v4079 = vrot.slane %v4078, 4
        %v4080 = vadd.f32 %v4078, %v4079
        %v4081 = vrot.slane %v4080, 2
        %v4082 = vadd.f32 %v4080, %v4081
        %v4083 = vrot.slane %v4082, 1
        %v4084 = vadd.f32 %v4082, %v4083
        %v4085 = vsel %vm2709, %v4025, 0.0
        %v4086 = vsel %vm2709, %v4026, 0.0
        %v4087 = vadd.f32 %v4085, %v4086
        %v4088 = vrot.slane %v4087, 4
        %v4089 = vadd.f32 %v4087, %v4088
        %v4090 = vrot.slane %v4089, 2
        %v4091 = vadd.f32 %v4089, %v4090
        %v4092 = vrot.slane %v4091, 1
        %v4093 = vadd.f32 %v4091, %v4092
        %v4094 = vsel %vm2709, %v4027, 0.0
        %v4095 = vsel %vm2709, %v4028, 0.0
        %v4096 = vadd.f32 %v4094, %v4095
        %v4097 = vrot.slane %v4096, 4
        %v4098 = vadd.f32 %v4096, %v4097
        %v4099 = vrot.slane %v4098, 2
        %v4100 = vadd.f32 %v4098, %v4099
        %v4101 = vrot.slane %v4100, 1
        %v4102 = vadd.f32 %v4100, %v4101
        %v4103 = vsel %vm2709, %v4029, 0.0
        %v4104 = vsel %vm2709, %v4030, 0.0
        %v4105 = vadd.f32 %v4103, %v4104
        %v4106 = vrot.slane %v4105, 4
        %v4107 = vadd.f32 %v4105, %v4106
        %v4108 = vrot.slane %v4107, 2
        %v4109 = vadd.f32 %v4107, %v4108
        %v4110 = vrot.slane %v4109, 1
        %v4111 = vadd.f32 %v4109, %v4110
        %v4112 = vsel %vm2709, %v4031, 0.0
        %v4113 = vsel %vm2709, %v4032, 0.0
        %v4114 = vadd.f32 %v4112, %v4113
        %v4115 = vrot.slane %v4114, 4
        %v4116 = vadd.f32 %v4114, %v4115
        %v4117 = vrot.slane %v4116, 2
        %v4118 = vadd.f32 %v4116, %v4117
        %v4119 = vrot.slane %v4118, 1
        %v4120 = vadd.f32 %v4118, %v4119
        %v4121 = vsel %vm2709, %v4033, 0.0
        %v4122 = vsel %vm2709, %v4034, 0.0
        %v4123 = vadd.f32 %v4121, %v4122
        %v4124 = vrot.slane %v4123, 4
        %v4125 = vadd.f32 %v4123, %v4124
        %v4126 = vrot.slane %v4125, 2
        %v4127 = vadd.f32 %v4125, %v4126
        %v4128 = vrot.slane %v4127, 1
        %v4129 = vadd.f32 %v4127, %v4128
        %v4130 = vsel %vm2709, %v4035, 0.0
        %v4131 = vsel %vm2709, %v4036, 0.0
        %v4132 = vadd.f32 %v4130, %v4131
        %v4133 = vrot.slane %v4132, 4
        %v4134 = vadd.f32 %v4132, %v4133
        %v4135 = vrot.slane %v4134, 2
        %v4136 = vadd.f32 %v4134, %v4135
        %v4137 = vrot.slane %v4136, 1
        %v4138 = vadd.f32 %v4136, %v4137
        %v4139 = vsel %vm2709, %v4037, 0.0
        %v4140 = vsel %vm2709, %v4038, 0.0
        %v4141 = vadd.f32 %v4139, %v4140
        %v4142 = vrot.slane %v4141, 4
        %v4143 = vadd.f32 %v4141, %v4142
        %v4144 = vrot.slane %v4143, 2
        %v4145 = vadd.f32 %v4143, %v4144
        %v4146 = vrot.slane %v4145, 1
        %v4147 = vadd.f32 %v4145, %v4146
        %v4148 = vsel %vm2709, %v4039, 0.0
        %v4149 = vsel %vm2709, %v4040, 0.0
        %v4150 = vadd.f32 %v4148, %v4149
        %v4151 = vrot.slane %v4150, 4
        %v4152 = vadd.f32 %v4150, %v4151
        %v4153 = vrot.slane %v4152, 2
        %v4154 = vadd.f32 %v4152, %v4153
        %v4155 = vrot.slane %v4154, 1
        %v4156 = vadd.f32 %v4154, %v4155
        %v4157 = vsel %vm2709, %v4041, 0.0
        %v4158 = vsel %vm2709, %v4042, 0.0
        %v4159 = vadd.f32 %v4157, %v4158
        %v4160 = vrot.slane %v4159, 4
        %v4161 = vadd.f32 %v4159, %v4160
        %v4162 = vrot.slane %v4161, 2
        %v4163 = vadd.f32 %v4161, %v4162
        %v4164 = vrot.slane %v4163, 1
        %v4165 = vadd.f32 %v4163, %v4164
        %v4166 = vsel %vm2709, %v4043, 0.0
        %v4167 = vsel %vm2709, %v4044, 0.0
        %v4168 = vadd.f32 %v4166, %v4167
        %v4169 = vrot.slane %v4168, 4
        %v4170 = vadd.f32 %v4168, %v4169
        %v4171 = vrot.slane %v4170, 2
        %v4172 = vadd.f32 %v4170, %v4171
        %v4173 = vrot.slane %v4172, 1
        %v4174 = vadd.f32 %v4172, %v4173
        %v4175 = vsel %vm2709, %v4045, 0.0
        %v4176 = vsel %vm2709, %v4046, 0.0
        %v4177 = vadd.f32 %v4175, %v4176
        %v4178 = vrot.slane %v4177, 4
        %v4179 = vadd.f32 %v4177, %v4178
        %v4180 = vrot.slane %v4179, 2
        %v4181 = vadd.f32 %v4179, %v4180
        %v4182 = vrot.slane %v4181, 1
        %v4183 = vadd.f32 %v4181, %v4182
        %v4184 = vsel %vm2709, %v4047, 0.0
        %v4185 = vsel %vm2709, %v4048, 0.0
        %v4186 = vadd.f32 %v4184, %v4185
        %v4187 = vrot.slane %v4186, 4
        %v4188 = vadd.f32 %v4186, %v4187
        %v4189 = vrot.slane %v4188, 2
        %v4190 = vadd.f32 %v4188, %v4189
        %v4191 = vrot.slane %v4190, 1
        %v4192 = vadd.f32 %v4190, %v4191
        %v4193 = vmul.f32 %v3319, %v4057
        %v4194 = vmul.f32 %v3319, %v4066
        %v4195 = vmul.f32 %v3319, %v4075
        %v4196 = vmul.f32 %v3319, %v4084
        %v4197 = vmul.f32 %v3319, %v4093
        %v4198 = vmul.f32 %v3319, %v4102
        %v4199 = vmul.f32 %v3319, %v4111
        %v4200 = vmul.f32 %v3319, %v4120
        %v4201 = vmul.f32 %v3319, %v4129
        %v4202 = vmul.f32 %v3319, %v4138
        %v4203 = vmul.f32 %v3319, %v4147
        %v4204 = vmul.f32 %v3319, %v4156
        %v4205 = vmul.f32 %v3319, %v4165
        %v4206 = vmul.f32 %v3319, %v4174
        %v4207 = vmul.f32 %v3319, %v4183
        %v4208 = vmul.f32 %v3319, %v4192
        %v4211 = vrot.slane %v267, 1
        %v4212 = vrot.slane %v267, 2
        %v4213 = vrot.slane %v267, 3
        %v4214 = vrot.slane %v267, 4
        %v4215 = vrot.slane %v267, 5
        %v4216 = vrot.slane %v267, 6
        %v4217 = vrot.slane %v267, 7
        %v4218 = vrot.slane %v268, 1
        %v4219 = vrot.slane %v268, 2
        %v4220 = vrot.slane %v268, 3
        %v4221 = vrot.slane %v268, 4
        %v4222 = vrot.slane %v268, 5
        %v4223 = vrot.slane %v268, 6
        %v4224 = vrot.slane %v268, 7
        %v4241 = vadd.f32 %v4193, %v267
        %v4242 = vadd.f32 %v4194, %v4211
        %v4243 = vadd.f32 %v4195, %v4212
        %v4244 = vadd.f32 %v4196, %v4213
        %v4245 = vadd.f32 %v4197, %v4214
        %v4246 = vadd.f32 %v4198, %v4215
        %v4247 = vadd.f32 %v4199, %v4216
        %v4248 = vadd.f32 %v4200, %v4217
        %v4249 = vadd.f32 %v4201, %v268
        %v4250 = vadd.f32 %v4202, %v4218
        %v4251 = vadd.f32 %v4203, %v4219
        %v4252 = vadd.f32 %v4204, %v4220
        %v4253 = vadd.f32 %v4205, %v4221
        %v4254 = vadd.f32 %v4206, %v4222
        %v4255 = vadd.f32 %v4207, %v4223
        %v4256 = vadd.f32 %v4208, %v4224
        %v4273 = vrot.slane %v4242, 7
        %v4274 = vsel %vm3401, %v4273, %v4241
        %v4275 = vrot.slane %v4243, 6
        %v4276 = vsel %vm3404, %v4275, %v4274
        %v4277 = vrot.slane %v4244, 5
        %v4278 = vsel %vm3407, %v4277, %v4276
        %v4279 = vrot.slane %v4245, 4
        %v4280 = vsel %vm3410, %v4279, %v4278
        %v4281 = vrot.slane %v4246, 3
        %v4282 = vsel %vm3413, %v4281, %v4280
        %v4283 = vrot.slane %v4247, 2
        %v4284 = vsel %vm3416, %v4283, %v4282
        %v4285 = vrot.slane %v4248, 1
        %v4286 = vsel %vm3419, %v4285, %v4284
        %v4287 = vrot.slane %v4250, 7
        %v4288 = vsel %vm3401, %v4287, %v4249
        %v4289 = vrot.slane %v4251, 6
        %v4290 = vsel %vm3404, %v4289, %v4288
        %v4291 = vrot.slane %v4252, 5
        %v4292 = vsel %vm3407, %v4291, %v4290
        %v4293 = vrot.slane %v4253, 4
        %v4294 = vsel %vm3410, %v4293, %v4292
        %v4295 = vrot.slane %v4254, 3
        %v4296 = vsel %vm3413, %v4295, %v4294
        %v4297 = vrot.slane %v4255, 2
        %v4298 = vsel %vm3416, %v4297, %v4296
        %v4299 = vrot.slane %v4256, 1
        %v4300 = vsel %vm3419, %v4299, %v4298
        %s4303 = scalar_lea.vmem %s260, 48 [#allocation10]
        %4304 = vst.msk [vmem:[%s4303] sm:$0xff] %vm2709, %v4286
        %4305 = vst.msk [vmem:[%s4303 + $0x8] sm:$0xff] %vm2709, %v4300
        %s4306 = sand.u32 %s137, 1
        %s4307 = scalar_lea.sflag [#allocation5], %s4306
        %s4308 = sand.u32 %s137, 1
        %s4309 = smul.addr %s4308, 64
        %s4310 = scalar_lea.vmem [#allocation10], %s4309
        // Predicated region
        $region49: #{tpu_custom_call.1} parent=35 // pred_check
          %p4311 = pneg %p147
        $region50: #{tpu_custom_call.1} parent=35 // pred_check_branch
          %4313 = sbr.rel (%p4311) target = $region52
        $region51: #{tpu_custom_call.1} parent=35 // pred_region
          %s4315 = ssub.s32 1024, 1024
          %4316 = vsyncadd %s4307, %s4315
          %s4317 = smul.addr %s28, 8
          %s4318 = sadd.s32 %s29, %s4317
          %s4319 = smul.addr %s4318, 128
          %s4320 = scalar_lea.hbm %s4, %s4319
          %s4321 = sshll.u32 %s4310, 4
          %s4322 = int_to_ptr.vmem [resolvable:$true] %s4321
          %4327 = dma.vmem_to_hbm [thread:$0]  %s4322, 1024, %s4320, %s4307, 128, 128, 8
        $region52: #{tpu_custom_call.1} parent=35 // pred_fallthru
          _
      $region36: #{tpu_custom_call.1} parent=5 // pred_fallthru
        _
      %p4328 = scmp.le.s32.totalorder 2, %s19
      // Predicated region
      $region53: #{tpu_custom_call.1} parent=5 // pred_check
        %p4329 = pneg %p4328
      $region54: #{tpu_custom_call.1} parent=5 // pred_check_branch
        %4331 = sbr.rel (%p4329) target = $region56
      $region55: #{tpu_custom_call.1} parent=5 // pred_region
        %s4332 = ssub.s32 %s19, 2
        // Predicated region
        $region57: #{tpu_custom_call.1} parent=55 // pred_check
          %p4333 = pneg %p153
        $region58: #{tpu_custom_call.1} parent=55 // pred_check_branch
          %4335 = sbr.rel (%p4333) target = $region60
        $region59: #{tpu_custom_call.1} parent=55 // pred_region
          %s4336 = sand.u32 %s138, 1
          %s4337 = scalar_lea.sflag [#allocation5], %s4336
          %s4338 = sand.u32 %s138, 1
          %s4339 = smul.addr %s4338, 64
          %s4340 = scalar_lea.vmem [#allocation10], %s4339
          %4341 = dma.done %s4337, 1024
        $region60: #{tpu_custom_call.1} parent=55 // pred_fallthru
          _
      $region56: #{tpu_custom_call.1} parent=5 // pred_fallthru
        _
    $region6: #{tpu_custom_call.1} parent=1 // loop_footer
      %s23 = sadd.s32 1, %s19
    $region7: #{tpu_custom_call.1} parent=1 // loop_footer_branch
      %18 = sbr.rel target = $region3
    $region8: #{tpu_custom_call.1} parent=1 // loop_exit
      _
    %4342 = vsyncpa [#allocation4], 1
    %s4343 = scalar_lea.sflag [#allocation4], 1
    %4344 = vsyncpa %s4343, 1
    %4345 = vsyncpa [#allocation5], 1
    %s4346 = scalar_lea.sflag [#allocation5], 1
    %4347 = vsyncpa %s4346, 1
    %4348 = vsyncpa [#allocation6], 1
    %s4349 = scalar_lea.sflag [#allocation6], 1
    %4350 = vsyncpa %s4349, 1
    %4351 = vsyncpa [#allocation9], 1

</llo_original>
